<compile_context>
chip_gen: v7x
topology: tpu7x:2x2x1
jax: 0.10.0
libtpu: 0.0.40
codegen_flags: <defaults>
</compile_context>

<pallas_src>
import numpy as np
import jax
import jax.numpy as jnp
from jax.experimental import pallas as pl
from jax.experimental.pallas import tpu as pltpu

# ---------------- small config consistent with the module ------------------
IMAGE_SIZE = 16
PATCH_SIZE = 8
CHANNELS = 3
DIM = 32
DEPTH = 2
HEADS = 4
DIM_HEAD = 8
MLP_DIM = 64
ACTION_DIM = 6
CONTEXT_LENGTH = 8

NUM_PATCHES = (IMAGE_SIZE // PATCH_SIZE) ** 2          # 4
PATCH_DIM = CHANNELS * PATCH_SIZE * PATCH_SIZE         # 192
INNER = HEADS * DIM_HEAD                               # 32 (== DIM)
EPS = 1e-5
NEG_INF = -1e30

VEC_W = PATCH_DIM        # lane width of the packed vector slab (192)
MAT_COLS = 128           # lane width of the packed matrix slab


def _round8(n):
    return -(-n // 8) * 8


# ---------------- packed-weight layout (static, shared by wrapper & kernel) --
_VEC_NAMES = (
    ["pe_ln1_w", "pe_ln1_b", "pe_b", "pe_ln2_w", "pe_ln2_b",
     "ae_b1", "ae_ln1_w", "ae_ln1_b", "ae_b2", "ae_ln2_w", "ae_ln2_b",
     "final_ln_w", "final_ln_b"]
    + [f"L{l}_{n}" for l in range(DEPTH)
       for n in ("ln_a_w", "ln_a_b", "b_o", "ln_f_w", "ln_f_b", "b_ff1", "b_ff2")]
)
VOFF = {n: i for i, n in enumerate(_VEC_NAMES)}
VEC_ROWS = _round8(len(_VEC_NAMES))

_MAT_SHAPES = (
    [("pe_w", PATCH_DIM, DIM), ("ae_w1", ACTION_DIM, DIM), ("ae_w2", DIM, DIM)]
    + [entry for l in range(DEPTH) for entry in
       ((f"L{l}_w_qkv", DIM, 3 * INNER), (f"L{l}_w_o", INNER, DIM),
        (f"L{l}_w_ff1", DIM, MLP_DIM), (f"L{l}_w_ff2", MLP_DIM, DIM))]
)
MOFF = {}
_row = 0
for _name, _r, _c in _MAT_SHAPES:
    MOFF[_name] = _row
    _row += _round8(_r)
MAT_ROWS = _row          # 552 for DEPTH=2


# ---------------- parameters (deterministic, synthetic) --------------------
def make_params(key):
    keys = jax.random.split(key, 64)
    ki = iter(keys)
    nrm = lambda shape, s=0.02: s * jax.random.normal(next(ki), shape, jnp.float32)
    ones = lambda n: jnp.ones((1, n), jnp.float32)
    zeros = lambda n: jnp.zeros((1, n), jnp.float32)

    p = {
        # patch embed (dino=False): LN(patch_dim) -> Linear -> LN(dim)
        "pe_ln1_w": ones(PATCH_DIM), "pe_ln1_b": zeros(PATCH_DIM),
        "pe_w": nrm((PATCH_DIM, DIM)), "pe_b": nrm((1, DIM)),
        "pe_ln2_w": ones(DIM), "pe_ln2_b": zeros(DIM),
        # action encoder: Linear -> LN -> GELU -> Linear -> LN
        "ae_w1": nrm((ACTION_DIM, DIM)), "ae_b1": nrm((1, DIM)),
        "ae_ln1_w": ones(DIM), "ae_ln1_b": zeros(DIM),
        "ae_w2": nrm((DIM, DIM)), "ae_b2": nrm((1, DIM)),
        "ae_ln2_w": ones(DIM), "ae_ln2_b": zeros(DIM),
        # positional embedding (torch.randn)
        "pos_embedding": jax.random.normal(
            next(ki), (1, CONTEXT_LENGTH, NUM_PATCHES, DIM), jnp.float32),
        # final transformer LayerNorm
        "final_ln_w": ones(DIM), "final_ln_b": zeros(DIM),
        "layers": [],
    }
    for _ in range(DEPTH):
        p["layers"].append({
            "ln_a_w": ones(DIM), "ln_a_b": zeros(DIM),
            "w_qkv": nrm((DIM, 3 * INNER)),                  # to_qkv, bias=False
            "w_o": nrm((INNER, DIM)), "b_o": nrm((1, DIM)),  # to_out
            "ln_f_w": ones(DIM), "ln_f_b": zeros(DIM),
            "w_ff1": nrm((DIM, MLP_DIM)), "b_ff1": nrm((1, MLP_DIM)),
            "w_ff2": nrm((MLP_DIM, DIM)), "b_ff2": nrm((1, DIM)),
        })
    return p


def _get_param(params, name):
    if name.startswith("L"):
        l, key = name[1:].split("_", 1)
        return params["layers"][int(l)][key]
    return params[name]


def pack_weights(params):
    """Pack all weights into two VMEM slabs (done once, outside the fwd jit)."""
    vecs = jnp.zeros((VEC_ROWS, VEC_W), jnp.float32)
    for name, row in VOFF.items():
        v = _get_param(params, name).reshape(1, -1)
        vecs = vecs.at[row, : v.shape[1]].set(v[0])

    mats = jnp.zeros((MAT_ROWS, MAT_COLS), jnp.float32)
    for name, rows, cols in _MAT_SHAPES:
        m = _get_param(params, name)
        mats = mats.at[MOFF[name]: MOFF[name] + rows, :cols].set(m)

    return {"vecs": vecs, "mats": mats, "pos_embedding": params["pos_embedding"]}


# ---------------- full ViT forward (one fused pallas_call) ------------------
def vit_forward(packed, states, actions):
    B, H, C, IH, IW = states.shape
    ph = pw = PATCH_SIZE
    nh, nw = IH // ph, IW // pw
    N = nh * nw
    S = H * N                                   # tokens per batch element
    A = actions.shape[-1]

    # ---- batch blocking: Bb batch elements per grid step ----
    Bb = max(1, 128 // S)                       # target ~128 flattened rows
    if B >= 2:
        Bb = min(Bb, (B + 1) // 2)              # keep >=2 grid steps (v7x 2 TCs)
    Bb = min(Bb, B)
    num_blocks = -(-B // Bb)
    B_pad = num_blocks * Bb
    R = Bb * S                                  # rows processed per grid step

    # ---- patchify: 'b c (h p1) (w p2) -> b (h w) (p1 p2 c)' (layout glue) ----
    s = states.reshape(B, H, C, nh, ph, nw, pw)
    s = jnp.transpose(s, (0, 1, 3, 5, 4, 6, 2))            # (B,H,nh,nw,p1,p2,c)
    patches = s.reshape(B, S, PATCH_DIM).astype(jnp.float32)
    acts = actions.astype(jnp.float32)
    if B_pad != B:
        patches = jnp.pad(patches, ((0, B_pad - B), (0, 0), (0, 0)))
        acts = jnp.pad(acts, ((0, B_pad - B), (0, 0), (0, 0)))
    patches = patches.reshape(num_blocks, R, PATCH_DIM)
    acts = acts.reshape(num_blocks, Bb * H, A)

    # ---- grid-invariant constants, built on the host (trace-time numpy) ----
    pos = packed["pos_embedding"][0, :H].reshape(S, DIM)
    pos_full = jnp.tile(pos, (Bb, 1))                        # (R, DIM)

    r_idx = np.arange(R)
    tb = r_idx // S                    # which batch element inside the block
    tt = (r_idx % S) // N              # timestep of the token
    masked = (tb[:, None] != tb[None, :]) | (tt[None, :] > tt[:, None])
    mask_add = jnp.asarray(np.where(masked, NEG_INF, 0.0), dtype=jnp.float32)  # (R,R)

    j_idx = np.arange(Bb * H)
    rep_np = ((tb[:, None] == (j_idx[None, :] // H)) &
              (tt[:, None] == (j_idx[None, :] % H))).astype(np.float32)
    rep = jnp.asarray(rep_np)                                # (R, Bb*H)

    scale = DIM_HEAD ** -0.5

    # ---------------- fused kernel: one batch block per grid step ------------
    def kernel(p_ref, a_ref, pos_ref, mask_ref, rep_ref, vec_ref, mat_ref, o_ref):
        def vec(name, width=DIM):
            row = VOFF[name]
            return vec_ref[row:row + 1, 0:width]             # (1, width)

        def mat(name, rows, cols):
            r0 = MOFF[name]
            return mat_ref[r0:r0 + rows, 0:cols]             # (rows, cols)

        def ln(x, wname, bname, width=DIM):
            # PyTorch nn.LayerNorm: biased variance, eps inside sqrt, affine.
            mu = jnp.mean(x, axis=-1, keepdims=True)
            xc = x - mu
            var = jnp.mean(xc * xc, axis=-1, keepdims=True)
            return xc * jax.lax.rsqrt(var + EPS) * vec(wname, width) + vec(bname, width)

        def gelu(x):
            # nn.GELU() default = exact erf formulation.
            return 0.5 * x * (1.0 + jax.lax.erf(x * 0.7071067811865476))

        # ---- patch embed (dino=False): LN -> Linear -> LN ----
        x = ln(p_ref[0], "pe_ln1_w", "pe_ln1_b", PATCH_DIM)              # (R, 192)
        x = jnp.dot(x, mat("pe_w", PATCH_DIM, DIM),
                    preferred_element_type=jnp.float32) + vec("pe_b")
        x = ln(x, "pe_ln2_w", "pe_ln2_b")                                # (R, DIM)

        # ---- action encoder: Linear -> LN -> GELU -> Linear -> LN ----
        ae = jnp.dot(a_ref[0], mat("ae_w1", ACTION_DIM, DIM),
                     preferred_element_type=jnp.float32) + vec("ae_b1")
        ae = gelu(ln(ae, "ae_ln1_w", "ae_ln1_b"))
        ae = jnp.dot(ae, mat("ae_w2", DIM, DIM),
                     preferred_element_type=jnp.float32) + vec("ae_b2")
        ae = ln(ae, "ae_ln2_w", "ae_ln2_b")                              # (Bb*H, DIM)

        # broadcast each (batch, timestep) action embed over its N patches via
        # the precomputed 0/1 selection matmul (no in-kernel gathers/reshapes).
        x = x + jnp.dot(rep_ref[...], ae,
                        preferred_element_type=jnp.float32) + pos_ref[...]

        mask_add_v = mask_ref[...]            # block-causal in time, block-diag in batch

        # ---- transformer layers (static unroll) ----
        for l in range(DEPTH):
            # -- attention (pre-LN, residual) --
            xn = ln(x, f"L{l}_ln_a_w", f"L{l}_ln_a_b")
            qkv = jnp.dot(xn, mat(f"L{l}_w_qkv", DIM, 3 * INNER),
                          preferred_element_type=jnp.float32)            # (R, 96)
            wo = mat(f"L{l}_w_o", INNER, DIM)
            att = jnp.zeros((R, DIM), jnp.float32)
            for h in range(HEADS):
                q = qkv[:, h * DIM_HEAD:(h + 1) * DIM_HEAD]
                k = qkv[:, INNER + h * DIM_HEAD:INNER + (h + 1) * DIM_HEAD]
                v = qkv[:, 2 * INNER + h * DIM_HEAD:2 * INNER + (h + 1) * DIM_HEAD]
                # q @ k^T without materializing the transpose.
                dots = jax.lax.dot_general(
                    q, k, (((1,), (1,)), ((), ())),
                    preferred_element_type=jnp.float32) * scale + mask_add_v
                m = jnp.max(dots, axis=-1, keepdims=True)
                e = jnp.exp(dots - m)
                inv = pl.reciprocal(jnp.sum(e, axis=-1, keepdims=True), approx=True)
                p = e * inv
                head = jnp.dot(p, v, preferred_element_type=jnp.float32)  # (R, Dh)
                # fold head-concat into the matching rows of W_o.
                att = att + jnp.dot(head, wo[h * DIM_HEAD:(h + 1) * DIM_HEAD, :],
                                    preferred_element_type=jnp.float32)
            x = x + att + vec(f"L{l}_b_o")

            # -- feed-forward (pre-LN, residual) --
            xn = ln(x, f"L{l}_ln_f_w", f"L{l}_ln_f_b")
            hdn = gelu(jnp.dot(xn, mat(f"L{l}_w_ff1", DIM, MLP_DIM),
                               preferred_element_type=jnp.float32)
                       + vec(f"L{l}_b_ff1", MLP_DIM))
            x = x + jnp.dot(hdn, mat(f"L{l}_w_ff2", MLP_DIM, DIM),
                            preferred_element_type=jnp.float32) + vec(f"L{l}_b_ff2")

        # ---- final LayerNorm ----
        o_ref[0] = ln(x, "final_ln_w", "final_ln_b")

    def const_spec(arr):
        nd = arr.ndim
        return pl.BlockSpec(arr.shape, lambda i, nd=nd: (0,) * nd)

    in_specs = [
        pl.BlockSpec((1, R, PATCH_DIM), lambda i: (i, 0, 0)),   # patches (per block)
        pl.BlockSpec((1, Bb * H, A), lambda i: (i, 0, 0)),      # actions (per block)
        const_spec(pos_full),
        const_spec(mask_add),
        const_spec(rep),
        const_spec(packed["vecs"]),
        const_spec(packed["mats"]),
    ]

    out = pl.pallas_call(
        kernel,
        out_shape=jax.ShapeDtypeStruct((num_blocks, R, DIM), jnp.float32),
        grid=(num_blocks,),
        in_specs=in_specs,
        out_specs=pl.BlockSpec((1, R, DIM), lambda i: (i, 0, 0)),
        compiler_params=pltpu.CompilerParams(dimension_semantics=("parallel",)),
    )(patches, acts, pos_full, mask_add, rep, packed["vecs"], packed["mats"])

    out = out.reshape(B_pad, S, DIM)[:B].reshape(B, H, N, DIM)
    return out


# ---------------- demo -------------------------------------------------------
if __name__ == "__main__":
    key = jax.random.PRNGKey(0)
    kp, ks, ka = jax.random.split(key, 3)

    B, H = 2, 4
    states = jax.random.normal(ks, (B, H, CHANNELS, IMAGE_SIZE, IMAGE_SIZE),
                               jnp.float32)
    actions = jax.random.normal(ka, (B, H, ACTION_DIM), jnp.float32)

    params = make_params(kp)
    packed = pack_weights(params)          # one-time weight packing (2 slabs)

    fwd = jax.jit(vit_forward)
    out = fwd(packed, states, actions)
    out = jax.block_until_ready(out)

    assert out.shape == (B, H, NUM_PATCHES, DIM)
    assert bool(jnp.all(jnp.isfinite(out)))
    print("KERNEL_OK")
</pallas_src>

<mosaic_0001>
module attributes {stable_mosaic.version = 11 : i64} {
  func.func @kernel(%arg0: i32, %arg1: memref<1x16x192xf32, #tpu.memory_space<vmem>>, %arg2: memref<1x4x6xf32, #tpu.memory_space<vmem>>, %arg3: memref<16x32xf32, #tpu.memory_space<vmem>>, %arg4: memref<16x16xf32, #tpu.memory_space<vmem>>, %arg5: memref<16x4xf32, #tpu.memory_space<vmem>>, %arg6: memref<32x192xf32, #tpu.memory_space<vmem>>, %arg7: memref<552x128xf32, #tpu.memory_space<vmem>>, %arg8: memref<1x16x32xf32, #tpu.memory_space<vmem>>) attributes {dimension_semantics = [#tpu.dimension_semantics<parallel>], iteration_bounds = array<i64: 2>, scalar_prefetch = 0 : i64, scratch_operands = 0 : i64, tpu.core_type = #tpu.core_type<tc>, window_params = [{transform_indices = @transform_0, window_bounds = array<i64: 1, 16, 192>}, {transform_indices = @transform_1, window_bounds = array<i64: 1, 4, 6>}, {pipeline_mode = #tpu.pipeline_mode<synchronous>, transform_indices = @transform_2, window_bounds = array<i64: 16, 32>}, {pipeline_mode = #tpu.pipeline_mode<synchronous>, transform_indices = @transform_3, window_bounds = array<i64: 16, 16>}, {pipeline_mode = #tpu.pipeline_mode<synchronous>, transform_indices = @transform_4, window_bounds = array<i64: 16, 4>}, {pipeline_mode = #tpu.pipeline_mode<synchronous>, transform_indices = @transform_5, window_bounds = array<i64: 32, 192>}, {pipeline_mode = #tpu.pipeline_mode<synchronous>, transform_indices = @transform_6, window_bounds = array<i64: 552, 128>}, {transform_indices = @transform_7, window_bounds = array<i64: 1, 16, 32>}]} {
    %c0 = arith.constant 0 : index
    %c0_0 = arith.constant 0 : index
    %c0_1 = arith.constant 0 : index
    %0 = vector.load %arg1[%c0, %c0_0, %c0_1] : memref<1x16x192xf32, #tpu.memory_space<vmem>>, vector<1x16x192xf32>
    %1 = vector.shape_cast %0 : vector<1x16x192xf32> to vector<16x192xf32>
    %cst = arith.constant dense<0.000000e+00> : vector<16xf32>
    %2 = vector.multi_reduction <add>, %1, %cst [1] : vector<16x192xf32> to vector<16xf32>
    %3 = vector.shape_cast %2 : vector<16xf32> to vector<16x1xf32>
    %cst_2 = arith.constant 1.920000e+02 : f32
    %4 = vector.broadcast %cst_2 : f32 to vector<16x1xf32>
    %5 = arith.divf %3, %4 : vector<16x1xf32>
    %6 = vector.broadcast %5 : vector<16x1xf32> to vector<16x192xf32>
    %7 = arith.subf %1, %6 : vector<16x192xf32>
    %8 = arith.mulf %7, %7 : vector<16x192xf32>
    %cst_3 = arith.constant dense<0.000000e+00> : vector<16xf32>
    %9 = vector.multi_reduction <add>, %8, %cst_3 [1] : vector<16x192xf32> to vector<16xf32>
    %10 = vector.shape_cast %9 : vector<16xf32> to vector<16x1xf32>
    %cst_4 = arith.constant 1.920000e+02 : f32
    %11 = vector.broadcast %cst_4 : f32 to vector<16x1xf32>
    %12 = arith.divf %10, %11 : vector<16x1xf32>
    %cst_5 = arith.constant 9.99999974E-6 : f32
    %13 = vector.broadcast %cst_5 : f32 to vector<16x1xf32>
    %14 = arith.addf %12, %13 : vector<16x1xf32>
    %15 = math.rsqrt %14 : vector<16x1xf32>
    %16 = vector.broadcast %15 : vector<16x1xf32> to vector<16x192xf32>
    %17 = arith.mulf %7, %16 : vector<16x192xf32>
    %c0_6 = arith.constant 0 : index
    %c0_7 = arith.constant 0 : index
    %18 = vector.load %arg6[%c0_6, %c0_7] : memref<32x192xf32, #tpu.memory_space<vmem>>, vector<1x192xf32>
    %19 = vector.broadcast %18 : vector<1x192xf32> to vector<16x192xf32>
    %20 = arith.mulf %17, %19 : vector<16x192xf32>
    %c1 = arith.constant 1 : index
    %c0_8 = arith.constant 0 : index
    %21 = vector.load %arg6[%c1, %c0_8] : memref<32x192xf32, #tpu.memory_space<vmem>>, vector<1x192xf32>
    %22 = vector.broadcast %21 : vector<1x192xf32> to vector<16x192xf32>
    %23 = arith.addf %20, %22 : vector<16x192xf32>
    %c0_9 = arith.constant 0 : index
    %c0_10 = arith.constant 0 : index
    %24 = vector.load %arg7[%c0_9, %c0_10] : memref<552x128xf32, #tpu.memory_space<vmem>>, vector<192x32xf32>
    %cst_11 = arith.constant dense<0.000000e+00> : vector<16x32xf32>
    %25 = tpu.matmul %23, %24, %cst_11 {dimension_numbers = #tpu.dot_dimension_numbers<[1], [0], [0], [1], [0, 0, 1, 1], [], []>} : vector<16x192xf32>, vector<192x32xf32>, vector<16x32xf32> -> vector<16x32xf32>
    %c2 = arith.constant 2 : index
    %c0_12 = arith.constant 0 : index
    %26 = vector.load %arg6[%c2, %c0_12] : memref<32x192xf32, #tpu.memory_space<vmem>>, vector<1x32xf32>
    %27 = vector.broadcast %26 : vector<1x32xf32> to vector<16x32xf32>
    %28 = arith.addf %25, %27 : vector<16x32xf32>
    %cst_13 = arith.constant dense<0.000000e+00> : vector<16xf32>
    %29 = vector.multi_reduction <add>, %28, %cst_13 [1] : vector<16x32xf32> to vector<16xf32>
    %30 = vector.shape_cast %29 : vector<16xf32> to vector<16x1xf32>
    %cst_14 = arith.constant 3.200000e+01 : f32
    %31 = vector.broadcast %cst_14 : f32 to vector<16x1xf32>
    %32 = arith.divf %30, %31 : vector<16x1xf32>
    %33 = vector.broadcast %32 : vector<16x1xf32> to vector<16x32xf32>
    %34 = arith.subf %28, %33 : vector<16x32xf32>
    %35 = arith.mulf %34, %34 : vector<16x32xf32>
    %cst_15 = arith.constant dense<0.000000e+00> : vector<16xf32>
    %36 = vector.multi_reduction <add>, %35, %cst_15 [1] : vector<16x32xf32> to vector<16xf32>
    %37 = vector.shape_cast %36 : vector<16xf32> to vector<16x1xf32>
    %cst_16 = arith.constant 3.200000e+01 : f32
    %38 = vector.broadcast %cst_16 : f32 to vector<16x1xf32>
    %39 = arith.divf %37, %38 : vector<16x1xf32>
    %cst_17 = arith.constant 9.99999974E-6 : f32
    %40 = vector.broadcast %cst_17 : f32 to vector<16x1xf32>
    %41 = arith.addf %39, %40 : vector<16x1xf32>
    %42 = math.rsqrt %41 : vector<16x1xf32>
    %43 = vector.broadcast %42 : vector<16x1xf32> to vector<16x32xf32>
    %44 = arith.mulf %34, %43 : vector<16x32xf32>
    %c3 = arith.constant 3 : index
    %c0_18 = arith.constant 0 : index
    %45 = vector.load %arg6[%c3, %c0_18] : memref<32x192xf32, #tpu.memory_space<vmem>>, vector<1x32xf32>
    %46 = vector.broadcast %45 : vector<1x32xf32> to vector<16x32xf32>
    %47 = arith.mulf %44, %46 : vector<16x32xf32>
    %c4 = arith.constant 4 : index
    %c0_19 = arith.constant 0 : index
    %48 = vector.load %arg6[%c4, %c0_19] : memref<32x192xf32, #tpu.memory_space<vmem>>, vector<1x32xf32>
    %49 = vector.broadcast %48 : vector<1x32xf32> to vector<16x32xf32>
    %50 = arith.addf %47, %49 : vector<16x32xf32>
    %c0_20 = arith.constant 0 : index
    %c0_21 = arith.constant 0 : index
    %c0_22 = arith.constant 0 : index
    %51 = vector.load %arg2[%c0_20, %c0_21, %c0_22] : memref<1x4x6xf32, #tpu.memory_space<vmem>>, vector<1x4x6xf32>
    %52 = vector.shape_cast %51 : vector<1x4x6xf32> to vector<4x6xf32>
    %c192 = arith.constant 192 : index
    %c0_23 = arith.constant 0 : index
    %53 = vector.load %arg7[%c192, %c0_23] : memref<552x128xf32, #tpu.memory_space<vmem>>, vector<6x32xf32>
    %cst_24 = arith.constant dense<0.000000e+00> : vector<4x32xf32>
    %54 = tpu.matmul %52, %53, %cst_24 {dimension_numbers = #tpu.dot_dimension_numbers<[1], [0], [0], [1], [0, 0, 1, 1], [], []>} : vector<4x6xf32>, vector<6x32xf32>, vector<4x32xf32> -> vector<4x32xf32>
    %c5 = arith.constant 5 : index
    %c0_25 = arith.constant 0 : index
    %55 = vector.load %arg6[%c5, %c0_25] : memref<32x192xf32, #tpu.memory_space<vmem>>, vector<1x32xf32>
    %56 = vector.broadcast %55 : vector<1x32xf32> to vector<4x32xf32>
    %57 = arith.addf %54, %56 : vector<4x32xf32>
    %cst_26 = arith.constant dense<0.000000e+00> : vector<4xf32>
    %58 = vector.multi_reduction <add>, %57, %cst_26 [1] : vector<4x32xf32> to vector<4xf32>
    %59 = vector.shape_cast %58 : vector<4xf32> to vector<4x1xf32>
    %cst_27 = arith.constant 3.200000e+01 : f32
    %60 = vector.broadcast %cst_27 : f32 to vector<4x1xf32>
    %61 = arith.divf %59, %60 : vector<4x1xf32>
    %62 = vector.broadcast %61 : vector<4x1xf32> to vector<4x32xf32>
    %63 = arith.subf %57, %62 : vector<4x32xf32>
    %64 = arith.mulf %63, %63 : vector<4x32xf32>
    %cst_28 = arith.constant dense<0.000000e+00> : vector<4xf32>
    %65 = vector.multi_reduction <add>, %64, %cst_28 [1] : vector<4x32xf32> to vector<4xf32>
    %66 = vector.shape_cast %65 : vector<4xf32> to vector<4x1xf32>
    %cst_29 = arith.constant 3.200000e+01 : f32
    %67 = vector.broadcast %cst_29 : f32 to vector<4x1xf32>
    %68 = arith.divf %66, %67 : vector<4x1xf32>
    %cst_30 = arith.constant 9.99999974E-6 : f32
    %69 = vector.broadcast %cst_30 : f32 to vector<4x1xf32>
    %70 = arith.addf %68, %69 : vector<4x1xf32>
    %71 = math.rsqrt %70 : vector<4x1xf32>
    %72 = vector.broadcast %71 : vector<4x1xf32> to vector<4x32xf32>
    %73 = arith.mulf %63, %72 : vector<4x32xf32>
    %c6 = arith.constant 6 : index
    %c0_31 = arith.constant 0 : index
    %74 = vector.load %arg6[%c6, %c0_31] : memref<32x192xf32, #tpu.memory_space<vmem>>, vector<1x32xf32>
    %75 = vector.broadcast %74 : vector<1x32xf32> to vector<4x32xf32>
    %76 = arith.mulf %73, %75 : vector<4x32xf32>
    %c7 = arith.constant 7 : index
    %c0_32 = arith.constant 0 : index
    %77 = vector.load %arg6[%c7, %c0_32] : memref<32x192xf32, #tpu.memory_space<vmem>>, vector<1x32xf32>
    %78 = vector.broadcast %77 : vector<1x32xf32> to vector<4x32xf32>
    %79 = arith.addf %76, %78 : vector<4x32xf32>
    %cst_33 = arith.constant 5.000000e-01 : f32
    %80 = vector.broadcast %cst_33 : f32 to vector<4x32xf32>
    %81 = arith.mulf %80, %79 : vector<4x32xf32>
    %cst_34 = arith.constant 0.707106769 : f32
    %82 = vector.broadcast %cst_34 : f32 to vector<4x32xf32>
    %83 = arith.mulf %79, %82 : vector<4x32xf32>
    %84 = math.erf %83 : vector<4x32xf32>
    %cst_35 = arith.constant 1.000000e+00 : f32
    %85 = vector.broadcast %cst_35 : f32 to vector<4x32xf32>
    %86 = arith.addf %85, %84 : vector<4x32xf32>
    %87 = arith.mulf %81, %86 : vector<4x32xf32>
    %c200 = arith.constant 200 : index
    %c0_36 = arith.constant 0 : index
    %88 = vector.load %arg7[%c200, %c0_36] : memref<552x128xf32, #tpu.memory_space<vmem>>, vector<32x32xf32>
    %cst_37 = arith.constant dense<0.000000e+00> : vector<4x32xf32>
    %89 = tpu.matmul %87, %88, %cst_37 {dimension_numbers = #tpu.dot_dimension_numbers<[1], [0], [0], [1], [0, 0, 1, 1], [], []>} : vector<4x32xf32>, vector<32x32xf32>, vector<4x32xf32> -> vector<4x32xf32>
    %c8 = arith.constant 8 : index
    %c0_38 = arith.constant 0 : index
    %90 = vector.load %arg6[%c8, %c0_38] : memref<32x192xf32, #tpu.memory_space<vmem>>, vector<1x32xf32>
    %91 = vector.broadcast %90 : vector<1x32xf32> to vector<4x32xf32>
    %92 = arith.addf %89, %91 : vector<4x32xf32>
    %cst_39 = arith.constant dense<0.000000e+00> : vector<4xf32>
    %93 = vector.multi_reduction <add>, %92, %cst_39 [1] : vector<4x32xf32> to vector<4xf32>
    %94 = vector.shape_cast %93 : vector<4xf32> to vector<4x1xf32>
    %cst_40 = arith.constant 3.200000e+01 : f32
    %95 = vector.broadcast %cst_40 : f32 to vector<4x1xf32>
    %96 = arith.divf %94, %95 : vector<4x1xf32>
    %97 = vector.broadcast %96 : vector<4x1xf32> to vector<4x32xf32>
    %98 = arith.subf %92, %97 : vector<4x32xf32>
    %99 = arith.mulf %98, %98 : vector<4x32xf32>
    %cst_41 = arith.constant dense<0.000000e+00> : vector<4xf32>
    %100 = vector.multi_reduction <add>, %99, %cst_41 [1] : vector<4x32xf32> to vector<4xf32>
    %101 = vector.shape_cast %100 : vector<4xf32> to vector<4x1xf32>
    %cst_42 = arith.constant 3.200000e+01 : f32
    %102 = vector.broadcast %cst_42 : f32 to vector<4x1xf32>
    %103 = arith.divf %101, %102 : vector<4x1xf32>
    %cst_43 = arith.constant 9.99999974E-6 : f32
    %104 = vector.broadcast %cst_43 : f32 to vector<4x1xf32>
    %105 = arith.addf %103, %104 : vector<4x1xf32>
    %106 = math.rsqrt %105 : vector<4x1xf32>
    %107 = vector.broadcast %106 : vector<4x1xf32> to vector<4x32xf32>
    %108 = arith.mulf %98, %107 : vector<4x32xf32>
    %c9 = arith.constant 9 : index
    %c0_44 = arith.constant 0 : index
    %109 = vector.load %arg6[%c9, %c0_44] : memref<32x192xf32, #tpu.memory_space<vmem>>, vector<1x32xf32>
    %110 = vector.broadcast %109 : vector<1x32xf32> to vector<4x32xf32>
    %111 = arith.mulf %108, %110 : vector<4x32xf32>
    %c10 = arith.constant 10 : index
    %c0_45 = arith.constant 0 : index
    %112 = vector.load %arg6[%c10, %c0_45] : memref<32x192xf32, #tpu.memory_space<vmem>>, vector<1x32xf32>
    %113 = vector.broadcast %112 : vector<1x32xf32> to vector<4x32xf32>
    %114 = arith.addf %111, %113 : vector<4x32xf32>
    %c0_46 = arith.constant 0 : index
    %c0_47 = arith.constant 0 : index
    %115 = vector.load %arg5[%c0_46, %c0_47] : memref<16x4xf32, #tpu.memory_space<vmem>>, vector<16x4xf32>
    %cst_48 = arith.constant dense<0.000000e+00> : vector<16x32xf32>
    %116 = tpu.matmul %115, %114, %cst_48 {dimension_numbers = #tpu.dot_dimension_numbers<[1], [0], [0], [1], [0, 0, 1, 1], [], []>} : vector<16x4xf32>, vector<4x32xf32>, vector<16x32xf32> -> vector<16x32xf32>
    %117 = arith.addf %50, %116 : vector<16x32xf32>
    %c0_49 = arith.constant 0 : index
    %c0_50 = arith.constant 0 : index
    %118 = vector.load %arg3[%c0_49, %c0_50] : memref<16x32xf32, #tpu.memory_space<vmem>>, vector<16x32xf32>
    %119 = arith.addf %117, %118 : vector<16x32xf32>
    %c0_51 = arith.constant 0 : index
    %c0_52 = arith.constant 0 : index
    %120 = vector.load %arg4[%c0_51, %c0_52] : memref<16x16xf32, #tpu.memory_space<vmem>>, vector<16x16xf32>
    %cst_53 = arith.constant dense<0.000000e+00> : vector<16xf32>
    %121 = vector.multi_reduction <add>, %119, %cst_53 [1] : vector<16x32xf32> to vector<16xf32>
    %122 = vector.shape_cast %121 : vector<16xf32> to vector<16x1xf32>
    %cst_54 = arith.constant 3.200000e+01 : f32
    %123 = vector.broadcast %cst_54 : f32 to vector<16x1xf32>
    %124 = arith.divf %122, %123 : vector<16x1xf32>
    %125 = vector.broadcast %124 : vector<16x1xf32> to vector<16x32xf32>
    %126 = arith.subf %119, %125 : vector<16x32xf32>
    %127 = arith.mulf %126, %126 : vector<16x32xf32>
    %cst_55 = arith.constant dense<0.000000e+00> : vector<16xf32>
    %128 = vector.multi_reduction <add>, %127, %cst_55 [1] : vector<16x32xf32> to vector<16xf32>
    %129 = vector.shape_cast %128 : vector<16xf32> to vector<16x1xf32>
    %cst_56 = arith.constant 3.200000e+01 : f32
    %130 = vector.broadcast %cst_56 : f32 to vector<16x1xf32>
    %131 = arith.divf %129, %130 : vector<16x1xf32>
    %cst_57 = arith.constant 9.99999974E-6 : f32
    %132 = vector.broadcast %cst_57 : f32 to vector<16x1xf32>
    %133 = arith.addf %131, %132 : vector<16x1xf32>
    %134 = math.rsqrt %133 : vector<16x1xf32>
    %135 = vector.broadcast %134 : vector<16x1xf32> to vector<16x32xf32>
    %136 = arith.mulf %126, %135 : vector<16x32xf32>
    %c13 = arith.constant 13 : index
    %c0_58 = arith.constant 0 : index
    %137 = vector.load %arg6[%c13, %c0_58] : memref<32x192xf32, #tpu.memory_space<vmem>>, vector<1x32xf32>
    %138 = vector.broadcast %137 : vector<1x32xf32> to vector<16x32xf32>
    %139 = arith.mulf %136, %138 : vector<16x32xf32>
    %c14 = arith.constant 14 : index
    %c0_59 = arith.constant 0 : index
    %140 = vector.load %arg6[%c14, %c0_59] : memref<32x192xf32, #tpu.memory_space<vmem>>, vector<1x32xf32>
    %141 = vector.broadcast %140 : vector<1x32xf32> to vector<16x32xf32>
    %142 = arith.addf %139, %141 : vector<16x32xf32>
    %c232 = arith.constant 232 : index
    %c0_60 = arith.constant 0 : index
    %143 = vector.load %arg7[%c232, %c0_60] : memref<552x128xf32, #tpu.memory_space<vmem>>, vector<32x96xf32>
    %cst_61 = arith.constant dense<0.000000e+00> : vector<16x96xf32>
    %144 = tpu.matmul %142, %143, %cst_61 {dimension_numbers = #tpu.dot_dimension_numbers<[1], [0], [0], [1], [0, 0, 1, 1], [], []>} : vector<16x32xf32>, vector<32x96xf32>, vector<16x96xf32> -> vector<16x96xf32>
    %c264 = arith.constant 264 : index
    %c0_62 = arith.constant 0 : index
    %145 = vector.load %arg7[%c264, %c0_62] : memref<552x128xf32, #tpu.memory_space<vmem>>, vector<32x32xf32>
    %cst_63 = arith.constant 0.000000e+00 : f32
    %146 = vector.broadcast %cst_63 : f32 to vector<16x32xf32>
    %147 = vector.extract_strided_slice %144 {offsets = [0, 0], sizes = [16, 8], strides = [1, 1]} : vector<16x96xf32> to vector<16x8xf32>
    %148 = vector.extract_strided_slice %144 {offsets = [0, 32], sizes = [16, 8], strides = [1, 1]} : vector<16x96xf32> to vector<16x8xf32>
    %149 = vector.extract_strided_slice %144 {offsets = [0, 64], sizes = [16, 8], strides = [1, 1]} : vector<16x96xf32> to vector<16x8xf32>
    %cst_64 = arith.constant dense<0.000000e+00> : vector<16x16xf32>
    %150 = tpu.matmul %147, %148, %cst_64 {dimension_numbers = #tpu.dot_dimension_numbers<[1], [1], [0], [0], [0, 0, 1, 0], [], []>} : vector<16x8xf32>, vector<16x8xf32>, vector<16x16xf32> -> vector<16x16xf32>
    %cst_65 = arith.constant 0.353553385 : f32
    %151 = vector.broadcast %cst_65 : f32 to vector<16x16xf32>
    %152 = arith.mulf %150, %151 : vector<16x16xf32>
    %153 = arith.addf %152, %120 : vector<16x16xf32>
    %cst_66 = arith.constant dense<0xFF800000> : vector<16xf32>
    %154 = vector.multi_reduction <maximumf>, %153, %cst_66 [1] : vector<16x16xf32> to vector<16xf32>
    %155 = vector.shape_cast %154 : vector<16xf32> to vector<16x1xf32>
    %156 = vector.broadcast %155 : vector<16x1xf32> to vector<16x16xf32>
    %157 = arith.subf %153, %156 : vector<16x16xf32>
    %158 = math.exp %157 : vector<16x16xf32>
    %cst_67 = arith.constant dense<0.000000e+00> : vector<16xf32>
    %159 = vector.multi_reduction <add>, %158, %cst_67 [1] : vector<16x16xf32> to vector<16xf32>
    %160 = vector.shape_cast %159 : vector<16xf32> to vector<16x1xf32>
    %161 = tpu.reciprocal %160 {approx = true} : vector<16x1xf32> -> vector<16x1xf32>
    %162 = vector.broadcast %161 : vector<16x1xf32> to vector<16x16xf32>
    %163 = arith.mulf %158, %162 : vector<16x16xf32>
    %cst_68 = arith.constant dense<0.000000e+00> : vector<16x8xf32>
    %164 = tpu.matmul %163, %149, %cst_68 {dimension_numbers = #tpu.dot_dimension_numbers<[1], [0], [0], [1], [0, 0, 1, 1], [], []>} : vector<16x16xf32>, vector<16x8xf32>, vector<16x8xf32> -> vector<16x8xf32>
    %165 = vector.extract_strided_slice %145 {offsets = [0, 0], sizes = [8, 32], strides = [1, 1]} : vector<32x32xf32> to vector<8x32xf32>
    %cst_69 = arith.constant dense<0.000000e+00> : vector<16x32xf32>
    %166 = tpu.matmul %164, %165, %cst_69 {dimension_numbers = #tpu.dot_dimension_numbers<[1], [0], [0], [1], [0, 0, 1, 1], [], []>} : vector<16x8xf32>, vector<8x32xf32>, vector<16x32xf32> -> vector<16x32xf32>
    %167 = arith.addf %146, %166 : vector<16x32xf32>
    %168 = vector.extract_strided_slice %144 {offsets = [0, 8], sizes = [16, 8], strides = [1, 1]} : vector<16x96xf32> to vector<16x8xf32>
    %169 = vector.extract_strided_slice %144 {offsets = [0, 40], sizes = [16, 8], strides = [1, 1]} : vector<16x96xf32> to vector<16x8xf32>
    %170 = vector.extract_strided_slice %144 {offsets = [0, 72], sizes = [16, 8], strides = [1, 1]} : vector<16x96xf32> to vector<16x8xf32>
    %cst_70 = arith.constant dense<0.000000e+00> : vector<16x16xf32>
    %171 = tpu.matmul %168, %169, %cst_70 {dimension_numbers = #tpu.dot_dimension_numbers<[1], [1], [0], [0], [0, 0, 1, 0], [], []>} : vector<16x8xf32>, vector<16x8xf32>, vector<16x16xf32> -> vector<16x16xf32>
    %cst_71 = arith.constant 0.353553385 : f32
    %172 = vector.broadcast %cst_71 : f32 to vector<16x16xf32>
    %173 = arith.mulf %171, %172 : vector<16x16xf32>
    %174 = arith.addf %173, %120 : vector<16x16xf32>
    %cst_72 = arith.constant dense<0xFF800000> : vector<16xf32>
    %175 = vector.multi_reduction <maximumf>, %174, %cst_72 [1] : vector<16x16xf32> to vector<16xf32>
    %176 = vector.shape_cast %175 : vector<16xf32> to vector<16x1xf32>
    %177 = vector.broadcast %176 : vector<16x1xf32> to vector<16x16xf32>
    %178 = arith.subf %174, %177 : vector<16x16xf32>
    %179 = math.exp %178 : vector<16x16xf32>
    %cst_73 = arith.constant dense<0.000000e+00> : vector<16xf32>
    %180 = vector.multi_reduction <add>, %179, %cst_73 [1] : vector<16x16xf32> to vector<16xf32>
    %181 = vector.shape_cast %180 : vector<16xf32> to vector<16x1xf32>
    %182 = tpu.reciprocal %181 {approx = true} : vector<16x1xf32> -> vector<16x1xf32>
    %183 = vector.broadcast %182 : vector<16x1xf32> to vector<16x16xf32>
    %184 = arith.mulf %179, %183 : vector<16x16xf32>
    %cst_74 = arith.constant dense<0.000000e+00> : vector<16x8xf32>
    %185 = tpu.matmul %184, %170, %cst_74 {dimension_numbers = #tpu.dot_dimension_numbers<[1], [0], [0], [1], [0, 0, 1, 1], [], []>} : vector<16x16xf32>, vector<16x8xf32>, vector<16x8xf32> -> vector<16x8xf32>
    %186 = vector.extract_strided_slice %145 {offsets = [8, 0], sizes = [8, 32], strides = [1, 1]} : vector<32x32xf32> to vector<8x32xf32>
    %cst_75 = arith.constant dense<0.000000e+00> : vector<16x32xf32>
    %187 = tpu.matmul %185, %186, %cst_75 {dimension_numbers = #tpu.dot_dimension_numbers<[1], [0], [0], [1], [0, 0, 1, 1], [], []>} : vector<16x8xf32>, vector<8x32xf32>, vector<16x32xf32> -> vector<16x32xf32>
    %188 = arith.addf %167, %187 : vector<16x32xf32>
    %189 = vector.extract_strided_slice %144 {offsets = [0, 16], sizes = [16, 8], strides = [1, 1]} : vector<16x96xf32> to vector<16x8xf32>
    %190 = vector.extract_strided_slice %144 {offsets = [0, 48], sizes = [16, 8], strides = [1, 1]} : vector<16x96xf32> to vector<16x8xf32>
    %191 = vector.extract_strided_slice %144 {offsets = [0, 80], sizes = [16, 8], strides = [1, 1]} : vector<16x96xf32> to vector<16x8xf32>
    %cst_76 = arith.constant dense<0.000000e+00> : vector<16x16xf32>
    %192 = tpu.matmul %189, %190, %cst_76 {dimension_numbers = #tpu.dot_dimension_numbers<[1], [1], [0], [0], [0, 0, 1, 0], [], []>} : vector<16x8xf32>, vector<16x8xf32>, vector<16x16xf32> -> vector<16x16xf32>
    %cst_77 = arith.constant 0.353553385 : f32
    %193 = vector.broadcast %cst_77 : f32 to vector<16x16xf32>
    %194 = arith.mulf %192, %193 : vector<16x16xf32>
    %195 = arith.addf %194, %120 : vector<16x16xf32>
    %cst_78 = arith.constant dense<0xFF800000> : vector<16xf32>
    %196 = vector.multi_reduction <maximumf>, %195, %cst_78 [1] : vector<16x16xf32> to vector<16xf32>
    %197 = vector.shape_cast %196 : vector<16xf32> to vector<16x1xf32>
    %198 = vector.broadcast %197 : vector<16x1xf32> to vector<16x16xf32>
    %199 = arith.subf %195, %198 : vector<16x16xf32>
    %200 = math.exp %199 : vector<16x16xf32>
    %cst_79 = arith.constant dense<0.000000e+00> : vector<16xf32>
    %201 = vector.multi_reduction <add>, %200, %cst_79 [1] : vector<16x16xf32> to vector<16xf32>
    %202 = vector.shape_cast %201 : vector<16xf32> to vector<16x1xf32>
    %203 = tpu.reciprocal %202 {approx = true} : vector<16x1xf32> -> vector<16x1xf32>
    %204 = vector.broadcast %203 : vector<16x1xf32> to vector<16x16xf32>
    %205 = arith.mulf %200, %204 : vector<16x16xf32>
    %cst_80 = arith.constant dense<0.000000e+00> : vector<16x8xf32>
    %206 = tpu.matmul %205, %191, %cst_80 {dimension_numbers = #tpu.dot_dimension_numbers<[1], [0], [0], [1], [0, 0, 1, 1], [], []>} : vector<16x16xf32>, vector<16x8xf32>, vector<16x8xf32> -> vector<16x8xf32>
    %207 = vector.extract_strided_slice %145 {offsets = [16, 0], sizes = [8, 32], strides = [1, 1]} : vector<32x32xf32> to vector<8x32xf32>
    %cst_81 = arith.constant dense<0.000000e+00> : vector<16x32xf32>
    %208 = tpu.matmul %206, %207, %cst_81 {dimension_numbers = #tpu.dot_dimension_numbers<[1], [0], [0], [1], [0, 0, 1, 1], [], []>} : vector<16x8xf32>, vector<8x32xf32>, vector<16x32xf32> -> vector<16x32xf32>
    %209 = arith.addf %188, %208 : vector<16x32xf32>
    %210 = vector.extract_strided_slice %144 {offsets = [0, 24], sizes = [16, 8], strides = [1, 1]} : vector<16x96xf32> to vector<16x8xf32>
    %211 = vector.extract_strided_slice %144 {offsets = [0, 56], sizes = [16, 8], strides = [1, 1]} : vector<16x96xf32> to vector<16x8xf32>
    %212 = vector.extract_strided_slice %144 {offsets = [0, 88], sizes = [16, 8], strides = [1, 1]} : vector<16x96xf32> to vector<16x8xf32>
    %cst_82 = arith.constant dense<0.000000e+00> : vector<16x16xf32>
    %213 = tpu.matmul %210, %211, %cst_82 {dimension_numbers = #tpu.dot_dimension_numbers<[1], [1], [0], [0], [0, 0, 1, 0], [], []>} : vector<16x8xf32>, vector<16x8xf32>, vector<16x16xf32> -> vector<16x16xf32>
    %cst_83 = arith.constant 0.353553385 : f32
    %214 = vector.broadcast %cst_83 : f32 to vector<16x16xf32>
    %215 = arith.mulf %213, %214 : vector<16x16xf32>
    %216 = arith.addf %215, %120 : vector<16x16xf32>
    %cst_84 = arith.constant dense<0xFF800000> : vector<16xf32>
    %217 = vector.multi_reduction <maximumf>, %216, %cst_84 [1] : vector<16x16xf32> to vector<16xf32>
    %218 = vector.shape_cast %217 : vector<16xf32> to vector<16x1xf32>
    %219 = vector.broadcast %218 : vector<16x1xf32> to vector<16x16xf32>
    %220 = arith.subf %216, %219 : vector<16x16xf32>
    %221 = math.exp %220 : vector<16x16xf32>
    %cst_85 = arith.constant dense<0.000000e+00> : vector<16xf32>
    %222 = vector.multi_reduction <add>, %221, %cst_85 [1] : vector<16x16xf32> to vector<16xf32>
    %223 = vector.shape_cast %222 : vector<16xf32> to vector<16x1xf32>
    %224 = tpu.reciprocal %223 {approx = true} : vector<16x1xf32> -> vector<16x1xf32>
    %225 = vector.broadcast %224 : vector<16x1xf32> to vector<16x16xf32>
    %226 = arith.mulf %221, %225 : vector<16x16xf32>
    %cst_86 = arith.constant dense<0.000000e+00> : vector<16x8xf32>
    %227 = tpu.matmul %226, %212, %cst_86 {dimension_numbers = #tpu.dot_dimension_numbers<[1], [0], [0], [1], [0, 0, 1, 1], [], []>} : vector<16x16xf32>, vector<16x8xf32>, vector<16x8xf32> -> vector<16x8xf32>
    %228 = vector.extract_strided_slice %145 {offsets = [24, 0], sizes = [8, 32], strides = [1, 1]} : vector<32x32xf32> to vector<8x32xf32>
    %cst_87 = arith.constant dense<0.000000e+00> : vector<16x32xf32>
    %229 = tpu.matmul %227, %228, %cst_87 {dimension_numbers = #tpu.dot_dimension_numbers<[1], [0], [0], [1], [0, 0, 1, 1], [], []>} : vector<16x8xf32>, vector<8x32xf32>, vector<16x32xf32> -> vector<16x32xf32>
    %230 = arith.addf %209, %229 : vector<16x32xf32>
    %231 = arith.addf %119, %230 : vector<16x32xf32>
    %c15 = arith.constant 15 : index
    %c0_88 = arith.constant 0 : index
    %232 = vector.load %arg6[%c15, %c0_88] : memref<32x192xf32, #tpu.memory_space<vmem>>, vector<1x32xf32>
    %233 = vector.broadcast %232 : vector<1x32xf32> to vector<16x32xf32>
    %234 = arith.addf %231, %233 : vector<16x32xf32>
    %cst_89 = arith.constant dense<0.000000e+00> : vector<16xf32>
    %235 = vector.multi_reduction <add>, %234, %cst_89 [1] : vector<16x32xf32> to vector<16xf32>
    %236 = vector.shape_cast %235 : vector<16xf32> to vector<16x1xf32>
    %cst_90 = arith.constant 3.200000e+01 : f32
    %237 = vector.broadcast %cst_90 : f32 to vector<16x1xf32>
    %238 = arith.divf %236, %237 : vector<16x1xf32>
    %239 = vector.broadcast %238 : vector<16x1xf32> to vector<16x32xf32>
    %240 = arith.subf %234, %239 : vector<16x32xf32>
    %241 = arith.mulf %240, %240 : vector<16x32xf32>
    %cst_91 = arith.constant dense<0.000000e+00> : vector<16xf32>
    %242 = vector.multi_reduction <add>, %241, %cst_91 [1] : vector<16x32xf32> to vector<16xf32>
    %243 = vector.shape_cast %242 : vector<16xf32> to vector<16x1xf32>
    %cst_92 = arith.constant 3.200000e+01 : f32
    %244 = vector.broadcast %cst_92 : f32 to vector<16x1xf32>
    %245 = arith.divf %243, %244 : vector<16x1xf32>
    %cst_93 = arith.constant 9.99999974E-6 : f32
    %246 = vector.broadcast %cst_93 : f32 to vector<16x1xf32>
    %247 = arith.addf %245, %246 : vector<16x1xf32>
    %248 = math.rsqrt %247 : vector<16x1xf32>
    %249 = vector.broadcast %248 : vector<16x1xf32> to vector<16x32xf32>
    %250 = arith.mulf %240, %249 : vector<16x32xf32>
    %c16 = arith.constant 16 : index
    %c0_94 = arith.constant 0 : index
    %251 = vector.load %arg6[%c16, %c0_94] : memref<32x192xf32, #tpu.memory_space<vmem>>, vector<1x32xf32>
    %252 = vector.broadcast %251 : vector<1x32xf32> to vector<16x32xf32>
    %253 = arith.mulf %250, %252 : vector<16x32xf32>
    %c17 = arith.constant 17 : index
    %c0_95 = arith.constant 0 : index
    %254 = vector.load %arg6[%c17, %c0_95] : memref<32x192xf32, #tpu.memory_space<vmem>>, vector<1x32xf32>
    %255 = vector.broadcast %254 : vector<1x32xf32> to vector<16x32xf32>
    %256 = arith.addf %253, %255 : vector<16x32xf32>
    %c296 = arith.constant 296 : index
    %c0_96 = arith.constant 0 : index
    %257 = vector.load %arg7[%c296, %c0_96] : memref<552x128xf32, #tpu.memory_space<vmem>>, vector<32x64xf32>
    %cst_97 = arith.constant dense<0.000000e+00> : vector<16x64xf32>
    %258 = tpu.matmul %256, %257, %cst_97 {dimension_numbers = #tpu.dot_dimension_numbers<[1], [0], [0], [1], [0, 0, 1, 1], [], []>} : vector<16x32xf32>, vector<32x64xf32>, vector<16x64xf32> -> vector<16x64xf32>
    %c18 = arith.constant 18 : index
    %c0_98 = arith.constant 0 : index
    %259 = vector.load %arg6[%c18, %c0_98] : memref<32x192xf32, #tpu.memory_space<vmem>>, vector<1x64xf32>
    %260 = vector.broadcast %259 : vector<1x64xf32> to vector<16x64xf32>
    %261 = arith.addf %258, %260 : vector<16x64xf32>
    %cst_99 = arith.constant 5.000000e-01 : f32
    %262 = vector.broadcast %cst_99 : f32 to vector<16x64xf32>
    %263 = arith.mulf %262, %261 : vector<16x64xf32>
    %cst_100 = arith.constant 0.707106769 : f32
    %264 = vector.broadcast %cst_100 : f32 to vector<16x64xf32>
    %265 = arith.mulf %261, %264 : vector<16x64xf32>
    %266 = math.erf %265 : vector<16x64xf32>
    %cst_101 = arith.constant 1.000000e+00 : f32
    %267 = vector.broadcast %cst_101 : f32 to vector<16x64xf32>
    %268 = arith.addf %267, %266 : vector<16x64xf32>
    %269 = arith.mulf %263, %268 : vector<16x64xf32>
    %c328 = arith.constant 328 : index
    %c0_102 = arith.constant 0 : index
    %270 = vector.load %arg7[%c328, %c0_102] : memref<552x128xf32, #tpu.memory_space<vmem>>, vector<64x32xf32>
    %cst_103 = arith.constant dense<0.000000e+00> : vector<16x32xf32>
    %271 = tpu.matmul %269, %270, %cst_103 {dimension_numbers = #tpu.dot_dimension_numbers<[1], [0], [0], [1], [0, 0, 1, 1], [], []>} : vector<16x64xf32>, vector<64x32xf32>, vector<16x32xf32> -> vector<16x32xf32>
    %272 = arith.addf %234, %271 : vector<16x32xf32>
    %c19 = arith.constant 19 : index
    %c0_104 = arith.constant 0 : index
    %273 = vector.load %arg6[%c19, %c0_104] : memref<32x192xf32, #tpu.memory_space<vmem>>, vector<1x32xf32>
    %274 = vector.broadcast %273 : vector<1x32xf32> to vector<16x32xf32>
    %275 = arith.addf %272, %274 : vector<16x32xf32>
    %cst_105 = arith.constant dense<0.000000e+00> : vector<16xf32>
    %276 = vector.multi_reduction <add>, %275, %cst_105 [1] : vector<16x32xf32> to vector<16xf32>
    %277 = vector.shape_cast %276 : vector<16xf32> to vector<16x1xf32>
    %cst_106 = arith.constant 3.200000e+01 : f32
    %278 = vector.broadcast %cst_106 : f32 to vector<16x1xf32>
    %279 = arith.divf %277, %278 : vector<16x1xf32>
    %280 = vector.broadcast %279 : vector<16x1xf32> to vector<16x32xf32>
    %281 = arith.subf %275, %280 : vector<16x32xf32>
    %282 = arith.mulf %281, %281 : vector<16x32xf32>
    %cst_107 = arith.constant dense<0.000000e+00> : vector<16xf32>
    %283 = vector.multi_reduction <add>, %282, %cst_107 [1] : vector<16x32xf32> to vector<16xf32>
    %284 = vector.shape_cast %283 : vector<16xf32> to vector<16x1xf32>
    %cst_108 = arith.constant 3.200000e+01 : f32
    %285 = vector.broadcast %cst_108 : f32 to vector<16x1xf32>
    %286 = arith.divf %284, %285 : vector<16x1xf32>
    %cst_109 = arith.constant 9.99999974E-6 : f32
    %287 = vector.broadcast %cst_109 : f32 to vector<16x1xf32>
    %288 = arith.addf %286, %287 : vector<16x1xf32>
    %289 = math.rsqrt %288 : vector<16x1xf32>
    %290 = vector.broadcast %289 : vector<16x1xf32> to vector<16x32xf32>
    %291 = arith.mulf %281, %290 : vector<16x32xf32>
    %c20 = arith.constant 20 : index
    %c0_110 = arith.constant 0 : index
    %292 = vector.load %arg6[%c20, %c0_110] : memref<32x192xf32, #tpu.memory_space<vmem>>, vector<1x32xf32>
    %293 = vector.broadcast %292 : vector<1x32xf32> to vector<16x32xf32>
    %294 = arith.mulf %291, %293 : vector<16x32xf32>
    %c21 = arith.constant 21 : index
    %c0_111 = arith.constant 0 : index
    %295 = vector.load %arg6[%c21, %c0_111] : memref<32x192xf32, #tpu.memory_space<vmem>>, vector<1x32xf32>
    %296 = vector.broadcast %295 : vector<1x32xf32> to vector<16x32xf32>
    %297 = arith.addf %294, %296 : vector<16x32xf32>
    %c392 = arith.constant 392 : index
    %c0_112 = arith.constant 0 : index
    %298 = vector.load %arg7[%c392, %c0_112] : memref<552x128xf32, #tpu.memory_space<vmem>>, vector<32x96xf32>
    %cst_113 = arith.constant dense<0.000000e+00> : vector<16x96xf32>
    %299 = tpu.matmul %297, %298, %cst_113 {dimension_numbers = #tpu.dot_dimension_numbers<[1], [0], [0], [1], [0, 0, 1, 1], [], []>} : vector<16x32xf32>, vector<32x96xf32>, vector<16x96xf32> -> vector<16x96xf32>
    %c424 = arith.constant 424 : index
    %c0_114 = arith.constant 0 : index
    %300 = vector.load %arg7[%c424, %c0_114] : memref<552x128xf32, #tpu.memory_space<vmem>>, vector<32x32xf32>
    %cst_115 = arith.constant 0.000000e+00 : f32
    %301 = vector.broadcast %cst_115 : f32 to vector<16x32xf32>
    %302 = vector.extract_strided_slice %299 {offsets = [0, 0], sizes = [16, 8], strides = [1, 1]} : vector<16x96xf32> to vector<16x8xf32>
    %303 = vector.extract_strided_slice %299 {offsets = [0, 32], sizes = [16, 8], strides = [1, 1]} : vector<16x96xf32> to vector<16x8xf32>
    %304 = vector.extract_strided_slice %299 {offsets = [0, 64], sizes = [16, 8], strides = [1, 1]} : vector<16x96xf32> to vector<16x8xf32>
    %cst_116 = arith.constant dense<0.000000e+00> : vector<16x16xf32>
    %305 = tpu.matmul %302, %303, %cst_116 {dimension_numbers = #tpu.dot_dimension_numbers<[1], [1], [0], [0], [0, 0, 1, 0], [], []>} : vector<16x8xf32>, vector<16x8xf32>, vector<16x16xf32> -> vector<16x16xf32>
    %cst_117 = arith.constant 0.353553385 : f32
    %306 = vector.broadcast %cst_117 : f32 to vector<16x16xf32>
    %307 = arith.mulf %305, %306 : vector<16x16xf32>
    %308 = arith.addf %307, %120 : vector<16x16xf32>
    %cst_118 = arith.constant dense<0xFF800000> : vector<16xf32>
    %309 = vector.multi_reduction <maximumf>, %308, %cst_118 [1] : vector<16x16xf32> to vector<16xf32>
    %310 = vector.shape_cast %309 : vector<16xf32> to vector<16x1xf32>
    %311 = vector.broadcast %310 : vector<16x1xf32> to vector<16x16xf32>
    %312 = arith.subf %308, %311 : vector<16x16xf32>
    %313 = math.exp %312 : vector<16x16xf32>
    %cst_119 = arith.constant dense<0.000000e+00> : vector<16xf32>
    %314 = vector.multi_reduction <add>, %313, %cst_119 [1] : vector<16x16xf32> to vector<16xf32>
    %315 = vector.shape_cast %314 : vector<16xf32> to vector<16x1xf32>
    %316 = tpu.reciprocal %315 {approx = true} : vector<16x1xf32> -> vector<16x1xf32>
    %317 = vector.broadcast %316 : vector<16x1xf32> to vector<16x16xf32>
    %318 = arith.mulf %313, %317 : vector<16x16xf32>
    %cst_120 = arith.constant dense<0.000000e+00> : vector<16x8xf32>
    %319 = tpu.matmul %318, %304, %cst_120 {dimension_numbers = #tpu.dot_dimension_numbers<[1], [0], [0], [1], [0, 0, 1, 1], [], []>} : vector<16x16xf32>, vector<16x8xf32>, vector<16x8xf32> -> vector<16x8xf32>
    %320 = vector.extract_strided_slice %300 {offsets = [0, 0], sizes = [8, 32], strides = [1, 1]} : vector<32x32xf32> to vector<8x32xf32>
    %cst_121 = arith.constant dense<0.000000e+00> : vector<16x32xf32>
    %321 = tpu.matmul %319, %320, %cst_121 {dimension_numbers = #tpu.dot_dimension_numbers<[1], [0], [0], [1], [0, 0, 1, 1], [], []>} : vector<16x8xf32>, vector<8x32xf32>, vector<16x32xf32> -> vector<16x32xf32>
    %322 = arith.addf %301, %321 : vector<16x32xf32>
    %323 = vector.extract_strided_slice %299 {offsets = [0, 8], sizes = [16, 8], strides = [1, 1]} : vector<16x96xf32> to vector<16x8xf32>
    %324 = vector.extract_strided_slice %299 {offsets = [0, 40], sizes = [16, 8], strides = [1, 1]} : vector<16x96xf32> to vector<16x8xf32>
    %325 = vector.extract_strided_slice %299 {offsets = [0, 72], sizes = [16, 8], strides = [1, 1]} : vector<16x96xf32> to vector<16x8xf32>
    %cst_122 = arith.constant dense<0.000000e+00> : vector<16x16xf32>
    %326 = tpu.matmul %323, %324, %cst_122 {dimension_numbers = #tpu.dot_dimension_numbers<[1], [1], [0], [0], [0, 0, 1, 0], [], []>} : vector<16x8xf32>, vector<16x8xf32>, vector<16x16xf32> -> vector<16x16xf32>
    %cst_123 = arith.constant 0.353553385 : f32
    %327 = vector.broadcast %cst_123 : f32 to vector<16x16xf32>
    %328 = arith.mulf %326, %327 : vector<16x16xf32>
    %329 = arith.addf %328, %120 : vector<16x16xf32>
    %cst_124 = arith.constant dense<0xFF800000> : vector<16xf32>
    %330 = vector.multi_reduction <maximumf>, %329, %cst_124 [1] : vector<16x16xf32> to vector<16xf32>
    %331 = vector.shape_cast %330 : vector<16xf32> to vector<16x1xf32>
    %332 = vector.broadcast %331 : vector<16x1xf32> to vector<16x16xf32>
    %333 = arith.subf %329, %332 : vector<16x16xf32>
    %334 = math.exp %333 : vector<16x16xf32>
    %cst_125 = arith.constant dense<0.000000e+00> : vector<16xf32>
    %335 = vector.multi_reduction <add>, %334, %cst_125 [1] : vector<16x16xf32> to vector<16xf32>
    %336 = vector.shape_cast %335 : vector<16xf32> to vector<16x1xf32>
    %337 = tpu.reciprocal %336 {approx = true} : vector<16x1xf32> -> vector<16x1xf32>
    %338 = vector.broadcast %337 : vector<16x1xf32> to vector<16x16xf32>
    %339 = arith.mulf %334, %338 : vector<16x16xf32>
    %cst_126 = arith.constant dense<0.000000e+00> : vector<16x8xf32>
    %340 = tpu.matmul %339, %325, %cst_126 {dimension_numbers = #tpu.dot_dimension_numbers<[1], [0], [0], [1], [0, 0, 1, 1], [], []>} : vector<16x16xf32>, vector<16x8xf32>, vector<16x8xf32> -> vector<16x8xf32>
    %341 = vector.extract_strided_slice %300 {offsets = [8, 0], sizes = [8, 32], strides = [1, 1]} : vector<32x32xf32> to vector<8x32xf32>
    %cst_127 = arith.constant dense<0.000000e+00> : vector<16x32xf32>
    %342 = tpu.matmul %340, %341, %cst_127 {dimension_numbers = #tpu.dot_dimension_numbers<[1], [0], [0], [1], [0, 0, 1, 1], [], []>} : vector<16x8xf32>, vector<8x32xf32>, vector<16x32xf32> -> vector<16x32xf32>
    %343 = arith.addf %322, %342 : vector<16x32xf32>
    %344 = vector.extract_strided_slice %299 {offsets = [0, 16], sizes = [16, 8], strides = [1, 1]} : vector<16x96xf32> to vector<16x8xf32>
    %345 = vector.extract_strided_slice %299 {offsets = [0, 48], sizes = [16, 8], strides = [1, 1]} : vector<16x96xf32> to vector<16x8xf32>
    %346 = vector.extract_strided_slice %299 {offsets = [0, 80], sizes = [16, 8], strides = [1, 1]} : vector<16x96xf32> to vector<16x8xf32>
    %cst_128 = arith.constant dense<0.000000e+00> : vector<16x16xf32>
    %347 = tpu.matmul %344, %345, %cst_128 {dimension_numbers = #tpu.dot_dimension_numbers<[1], [1], [0], [0], [0, 0, 1, 0], [], []>} : vector<16x8xf32>, vector<16x8xf32>, vector<16x16xf32> -> vector<16x16xf32>
    %cst_129 = arith.constant 0.353553385 : f32
    %348 = vector.broadcast %cst_129 : f32 to vector<16x16xf32>
    %349 = arith.mulf %347, %348 : vector<16x16xf32>
    %350 = arith.addf %349, %120 : vector<16x16xf32>
    %cst_130 = arith.constant dense<0xFF800000> : vector<16xf32>
    %351 = vector.multi_reduction <maximumf>, %350, %cst_130 [1] : vector<16x16xf32> to vector<16xf32>
    %352 = vector.shape_cast %351 : vector<16xf32> to vector<16x1xf32>
    %353 = vector.broadcast %352 : vector<16x1xf32> to vector<16x16xf32>
    %354 = arith.subf %350, %353 : vector<16x16xf32>
    %355 = math.exp %354 : vector<16x16xf32>
    %cst_131 = arith.constant dense<0.000000e+00> : vector<16xf32>
    %356 = vector.multi_reduction <add>, %355, %cst_131 [1] : vector<16x16xf32> to vector<16xf32>
    %357 = vector.shape_cast %356 : vector<16xf32> to vector<16x1xf32>
    %358 = tpu.reciprocal %357 {approx = true} : vector<16x1xf32> -> vector<16x1xf32>
    %359 = vector.broadcast %358 : vector<16x1xf32> to vector<16x16xf32>
    %360 = arith.mulf %355, %359 : vector<16x16xf32>
    %cst_132 = arith.constant dense<0.000000e+00> : vector<16x8xf32>
    %361 = tpu.matmul %360, %346, %cst_132 {dimension_numbers = #tpu.dot_dimension_numbers<[1], [0], [0], [1], [0, 0, 1, 1], [], []>} : vector<16x16xf32>, vector<16x8xf32>, vector<16x8xf32> -> vector<16x8xf32>
    %362 = vector.extract_strided_slice %300 {offsets = [16, 0], sizes = [8, 32], strides = [1, 1]} : vector<32x32xf32> to vector<8x32xf32>
    %cst_133 = arith.constant dense<0.000000e+00> : vector<16x32xf32>
    %363 = tpu.matmul %361, %362, %cst_133 {dimension_numbers = #tpu.dot_dimension_numbers<[1], [0], [0], [1], [0, 0, 1, 1], [], []>} : vector<16x8xf32>, vector<8x32xf32>, vector<16x32xf32> -> vector<16x32xf32>
    %364 = arith.addf %343, %363 : vector<16x32xf32>
    %365 = vector.extract_strided_slice %299 {offsets = [0, 24], sizes = [16, 8], strides = [1, 1]} : vector<16x96xf32> to vector<16x8xf32>
    %366 = vector.extract_strided_slice %299 {offsets = [0, 56], sizes = [16, 8], strides = [1, 1]} : vector<16x96xf32> to vector<16x8xf32>
    %367 = vector.extract_strided_slice %299 {offsets = [0, 88], sizes = [16, 8], strides = [1, 1]} : vector<16x96xf32> to vector<16x8xf32>
    %cst_134 = arith.constant dense<0.000000e+00> : vector<16x16xf32>
    %368 = tpu.matmul %365, %366, %cst_134 {dimension_numbers = #tpu.dot_dimension_numbers<[1], [1], [0], [0], [0, 0, 1, 0], [], []>} : vector<16x8xf32>, vector<16x8xf32>, vector<16x16xf32> -> vector<16x16xf32>
    %cst_135 = arith.constant 0.353553385 : f32
    %369 = vector.broadcast %cst_135 : f32 to vector<16x16xf32>
    %370 = arith.mulf %368, %369 : vector<16x16xf32>
    %371 = arith.addf %370, %120 : vector<16x16xf32>
    %cst_136 = arith.constant dense<0xFF800000> : vector<16xf32>
    %372 = vector.multi_reduction <maximumf>, %371, %cst_136 [1] : vector<16x16xf32> to vector<16xf32>
    %373 = vector.shape_cast %372 : vector<16xf32> to vector<16x1xf32>
    %374 = vector.broadcast %373 : vector<16x1xf32> to vector<16x16xf32>
    %375 = arith.subf %371, %374 : vector<16x16xf32>
    %376 = math.exp %375 : vector<16x16xf32>
    %cst_137 = arith.constant dense<0.000000e+00> : vector<16xf32>
    %377 = vector.multi_reduction <add>, %376, %cst_137 [1] : vector<16x16xf32> to vector<16xf32>
    %378 = vector.shape_cast %377 : vector<16xf32> to vector<16x1xf32>
    %379 = tpu.reciprocal %378 {approx = true} : vector<16x1xf32> -> vector<16x1xf32>
    %380 = vector.broadcast %379 : vector<16x1xf32> to vector<16x16xf32>
    %381 = arith.mulf %376, %380 : vector<16x16xf32>
    %cst_138 = arith.constant dense<0.000000e+00> : vector<16x8xf32>
    %382 = tpu.matmul %381, %367, %cst_138 {dimension_numbers = #tpu.dot_dimension_numbers<[1], [0], [0], [1], [0, 0, 1, 1], [], []>} : vector<16x16xf32>, vector<16x8xf32>, vector<16x8xf32> -> vector<16x8xf32>
    %383 = vector.extract_strided_slice %300 {offsets = [24, 0], sizes = [8, 32], strides = [1, 1]} : vector<32x32xf32> to vector<8x32xf32>
    %cst_139 = arith.constant dense<0.000000e+00> : vector<16x32xf32>
    %384 = tpu.matmul %382, %383, %cst_139 {dimension_numbers = #tpu.dot_dimension_numbers<[1], [0], [0], [1], [0, 0, 1, 1], [], []>} : vector<16x8xf32>, vector<8x32xf32>, vector<16x32xf32> -> vector<16x32xf32>
    %385 = arith.addf %364, %384 : vector<16x32xf32>
    %386 = arith.addf %275, %385 : vector<16x32xf32>
    %c22 = arith.constant 22 : index
    %c0_140 = arith.constant 0 : index
    %387 = vector.load %arg6[%c22, %c0_140] : memref<32x192xf32, #tpu.memory_space<vmem>>, vector<1x32xf32>
    %388 = vector.broadcast %387 : vector<1x32xf32> to vector<16x32xf32>
    %389 = arith.addf %386, %388 : vector<16x32xf32>
    %cst_141 = arith.constant dense<0.000000e+00> : vector<16xf32>
    %390 = vector.multi_reduction <add>, %389, %cst_141 [1] : vector<16x32xf32> to vector<16xf32>
    %391 = vector.shape_cast %390 : vector<16xf32> to vector<16x1xf32>
    %cst_142 = arith.constant 3.200000e+01 : f32
    %392 = vector.broadcast %cst_142 : f32 to vector<16x1xf32>
    %393 = arith.divf %391, %392 : vector<16x1xf32>
    %394 = vector.broadcast %393 : vector<16x1xf32> to vector<16x32xf32>
    %395 = arith.subf %389, %394 : vector<16x32xf32>
    %396 = arith.mulf %395, %395 : vector<16x32xf32>
    %cst_143 = arith.constant dense<0.000000e+00> : vector<16xf32>
    %397 = vector.multi_reduction <add>, %396, %cst_143 [1] : vector<16x32xf32> to vector<16xf32>
    %398 = vector.shape_cast %397 : vector<16xf32> to vector<16x1xf32>
    %cst_144 = arith.constant 3.200000e+01 : f32
    %399 = vector.broadcast %cst_144 : f32 to vector<16x1xf32>
    %400 = arith.divf %398, %399 : vector<16x1xf32>
    %cst_145 = arith.constant 9.99999974E-6 : f32
    %401 = vector.broadcast %cst_145 : f32 to vector<16x1xf32>
    %402 = arith.addf %400, %401 : vector<16x1xf32>
    %403 = math.rsqrt %402 : vector<16x1xf32>
    %404 = vector.broadcast %403 : vector<16x1xf32> to vector<16x32xf32>
    %405 = arith.mulf %395, %404 : vector<16x32xf32>
    %c23 = arith.constant 23 : index
    %c0_146 = arith.constant 0 : index
    %406 = vector.load %arg6[%c23, %c0_146] : memref<32x192xf32, #tpu.memory_space<vmem>>, vector<1x32xf32>
    %407 = vector.broadcast %406 : vector<1x32xf32> to vector<16x32xf32>
    %408 = arith.mulf %405, %407 : vector<16x32xf32>
    %c24 = arith.constant 24 : index
    %c0_147 = arith.constant 0 : index
    %409 = vector.load %arg6[%c24, %c0_147] : memref<32x192xf32, #tpu.memory_space<vmem>>, vector<1x32xf32>
    %410 = vector.broadcast %409 : vector<1x32xf32> to vector<16x32xf32>
    %411 = arith.addf %408, %410 : vector<16x32xf32>
    %c456 = arith.constant 456 : index
    %c0_148 = arith.constant 0 : index
    %412 = vector.load %arg7[%c456, %c0_148] : memref<552x128xf32, #tpu.memory_space<vmem>>, vector<32x64xf32>
    %cst_149 = arith.constant dense<0.000000e+00> : vector<16x64xf32>
    %413 = tpu.matmul %411, %412, %cst_149 {dimension_numbers = #tpu.dot_dimension_numbers<[1], [0], [0], [1], [0, 0, 1, 1], [], []>} : vector<16x32xf32>, vector<32x64xf32>, vector<16x64xf32> -> vector<16x64xf32>
    %c25 = arith.constant 25 : index
    %c0_150 = arith.constant 0 : index
    %414 = vector.load %arg6[%c25, %c0_150] : memref<32x192xf32, #tpu.memory_space<vmem>>, vector<1x64xf32>
    %415 = vector.broadcast %414 : vector<1x64xf32> to vector<16x64xf32>
    %416 = arith.addf %413, %415 : vector<16x64xf32>
    %cst_151 = arith.constant 5.000000e-01 : f32
    %417 = vector.broadcast %cst_151 : f32 to vector<16x64xf32>
    %418 = arith.mulf %417, %416 : vector<16x64xf32>
    %cst_152 = arith.constant 0.707106769 : f32
    %419 = vector.broadcast %cst_152 : f32 to vector<16x64xf32>
    %420 = arith.mulf %416, %419 : vector<16x64xf32>
    %421 = math.erf %420 : vector<16x64xf32>
    %cst_153 = arith.constant 1.000000e+00 : f32
    %422 = vector.broadcast %cst_153 : f32 to vector<16x64xf32>
    %423 = arith.addf %422, %421 : vector<16x64xf32>
    %424 = arith.mulf %418, %423 : vector<16x64xf32>
    %c488 = arith.constant 488 : index
    %c0_154 = arith.constant 0 : index
    %425 = vector.load %arg7[%c488, %c0_154] : memref<552x128xf32, #tpu.memory_space<vmem>>, vector<64x32xf32>
    %cst_155 = arith.constant dense<0.000000e+00> : vector<16x32xf32>
    %426 = tpu.matmul %424, %425, %cst_155 {dimension_numbers = #tpu.dot_dimension_numbers<[1], [0], [0], [1], [0, 0, 1, 1], [], []>} : vector<16x64xf32>, vector<64x32xf32>, vector<16x32xf32> -> vector<16x32xf32>
    %427 = arith.addf %389, %426 : vector<16x32xf32>
    %c26 = arith.constant 26 : index
    %c0_156 = arith.constant 0 : index
    %428 = vector.load %arg6[%c26, %c0_156] : memref<32x192xf32, #tpu.memory_space<vmem>>, vector<1x32xf32>
    %429 = vector.broadcast %428 : vector<1x32xf32> to vector<16x32xf32>
    %430 = arith.addf %427, %429 : vector<16x32xf32>
    %cst_157 = arith.constant dense<0.000000e+00> : vector<16xf32>
    %431 = vector.multi_reduction <add>, %430, %cst_157 [1] : vector<16x32xf32> to vector<16xf32>
    %432 = vector.shape_cast %431 : vector<16xf32> to vector<16x1xf32>
    %cst_158 = arith.constant 3.200000e+01 : f32
    %433 = vector.broadcast %cst_158 : f32 to vector<16x1xf32>
    %434 = arith.divf %432, %433 : vector<16x1xf32>
    %435 = vector.broadcast %434 : vector<16x1xf32> to vector<16x32xf32>
    %436 = arith.subf %430, %435 : vector<16x32xf32>
    %437 = arith.mulf %436, %436 : vector<16x32xf32>
    %cst_159 = arith.constant dense<0.000000e+00> : vector<16xf32>
    %438 = vector.multi_reduction <add>, %437, %cst_159 [1] : vector<16x32xf32> to vector<16xf32>
    %439 = vector.shape_cast %438 : vector<16xf32> to vector<16x1xf32>
    %cst_160 = arith.constant 3.200000e+01 : f32
    %440 = vector.broadcast %cst_160 : f32 to vector<16x1xf32>
    %441 = arith.divf %439, %440 : vector<16x1xf32>
    %cst_161 = arith.constant 9.99999974E-6 : f32
    %442 = vector.broadcast %cst_161 : f32 to vector<16x1xf32>
    %443 = arith.addf %441, %442 : vector<16x1xf32>
    %444 = math.rsqrt %443 : vector<16x1xf32>
    %445 = vector.broadcast %444 : vector<16x1xf32> to vector<16x32xf32>
    %446 = arith.mulf %436, %445 : vector<16x32xf32>
    %c11 = arith.constant 11 : index
    %c0_162 = arith.constant 0 : index
    %447 = vector.load %arg6[%c11, %c0_162] : memref<32x192xf32, #tpu.memory_space<vmem>>, vector<1x32xf32>
    %448 = vector.broadcast %447 : vector<1x32xf32> to vector<16x32xf32>
    %449 = arith.mulf %446, %448 : vector<16x32xf32>
    %c12 = arith.constant 12 : index
    %c0_163 = arith.constant 0 : index
    %450 = vector.load %arg6[%c12, %c0_163] : memref<32x192xf32, #tpu.memory_space<vmem>>, vector<1x32xf32>
    %451 = vector.broadcast %450 : vector<1x32xf32> to vector<16x32xf32>
    %452 = arith.addf %449, %451 : vector<16x32xf32>
    %c0_164 = arith.constant 0 : index
    %c0_165 = arith.constant 0 : index
    %c0_166 = arith.constant 0 : index
    %453 = vector.load %arg8[%c0_164, %c0_165, %c0_166] : memref<1x16x32xf32, #tpu.memory_space<vmem>>, vector<1x16x32xf32>
    %454 = vector.shape_cast %453 : vector<1x16x32xf32> to vector<16x32xf32>
    %455 = vector.shape_cast %452 : vector<16x32xf32> to vector<1x16x32xf32>
    tpu.vector_store %arg8[%c0_164, %c0_165, %c0_166], %455 {strides = array<i32>} : memref<1x16x32xf32, #tpu.memory_space<vmem>>, vector<1x16x32xf32>,
    return
  }
  func.func @transform_0(%arg0: i32) -> (i32, i32, i32) {
    %c0_i32 = arith.constant 0 : i32
    %c0_i32_0 = arith.constant 0 : i32
    %c0_i32_1 = arith.constant 0 : i32
    return %arg0, %c0_i32, %c0_i32_0 : i32, i32, i32
  }
  func.func @transform_1(%arg0: i32) -> (i32, i32, i32) {
    %c0_i32 = arith.constant 0 : i32
    %c0_i32_0 = arith.constant 0 : i32
    %c0_i32_1 = arith.constant 0 : i32
    return %arg0, %c0_i32, %c0_i32_0 : i32, i32, i32
  }
  func.func @transform_2(%arg0: i32) -> (i32, i32) {
    %c0_i32 = arith.constant 0 : i32
    %c0_i32_0 = arith.constant 0 : i32
    %c0_i32_1 = arith.constant 0 : i32
    return %c0_i32, %c0_i32_0 : i32, i32
  }
  func.func @transform_3(%arg0: i32) -> (i32, i32) {
    %c0_i32 = arith.constant 0 : i32
    %c0_i32_0 = arith.constant 0 : i32
    %c0_i32_1 = arith.constant 0 : i32
    return %c0_i32, %c0_i32_0 : i32, i32
  }
  func.func @transform_4(%arg0: i32) -> (i32, i32) {
    %c0_i32 = arith.constant 0 : i32
    %c0_i32_0 = arith.constant 0 : i32
    %c0_i32_1 = arith.constant 0 : i32
    return %c0_i32, %c0_i32_0 : i32, i32
  }
  func.func @transform_5(%arg0: i32) -> (i32, i32) {
    %c0_i32 = arith.constant 0 : i32
    %c0_i32_0 = arith.constant 0 : i32
    %c0_i32_1 = arith.constant 0 : i32
    return %c0_i32, %c0_i32_0 : i32, i32
  }
  func.func @transform_6(%arg0: i32) -> (i32, i32) {
    %c0_i32 = arith.constant 0 : i32
    %c0_i32_0 = arith.constant 0 : i32
    %c0_i32_1 = arith.constant 0 : i32
    return %c0_i32, %c0_i32_0 : i32, i32
  }
  func.func @transform_7(%arg0: i32) -> (i32, i32, i32) {
    %c0_i32 = arith.constant 0 : i32
    %c0_i32_0 = arith.constant 0 : i32
    %c0_i32_1 = arith.constant 0 : i32
    return %arg0, %c0_i32, %c0_i32_0 : i32, i32, i32
  }
}

</mosaic_0001>

<llo_original>
// kernel: vit_forward.1
$region0: #{vit_forward.1}
  #allocation0 [shape = 'u32[]', space=smem, size = 0x4, offset = 0x4, fixed_abs, tag = 'smem constant byte address 0x4 - core index']
  #allocation1 [shape = 'u32[144,128]{1,0:T(1,128)}', space=vmem, size = 0x12000, scoped, tag = 'internal scratch']
  %s0 = inlined_call_operand.vmem [shape: f32[2,16,192], index: 0, kind: input, shape index: {}]
  %s1 = inlined_call_operand.vmem [shape: f32[2,4,6], index: 1, kind: input, shape index: {}]
  %s2 = inlined_call_operand.vmem [shape: f32[16,32], index: 2, kind: input, shape index: {}]
  %s3 = inlined_call_operand.vmem [shape: f32[16,16], index: 3, kind: input, shape index: {}]
  %s4 = inlined_call_operand.vmem [shape: f32[16,4], index: 4, kind: input, shape index: {}]
  %s5 = inlined_call_operand.vmem [shape: f32[32,192], index: 5, kind: input, shape index: {}]
  %s6 = inlined_call_operand.vmem [shape: f32[552,128], index: 6, kind: input, shape index: {}]
  %s7 = inlined_call_operand.hbm [shape: f32[2,16,32], index: 7, kind: output, shape index: {}]
  %s8 = sld [smem:[#allocation0]]
  $region61: #{vit_forward.1} parent=0
    _
  %s10 = ssub.s32 1, %s8
  %s11 = scalar_select 0, %s10, %s8
  $region1: #{vit_forward.1} parent=0
    #allocation2 [shape = 'u8[16384]{0}', space=vmem, size = 0x4000, scoped, tag = 'output window, operand 0']
    #allocation3 [shape = 's32[2]{0}', space=sflag, size = 0x8, scoped, tag = 'scoped memory for vit_forward.1']
    %12 = vsyncpa [#allocation3], 0
    %s13 = scalar_lea.sflag [#allocation3], 1
    %14 = vsyncpa %s13, 0
    loop: start=0, step=1, limit=4
    $region2: #{vit_forward.1} parent=1 // loop_pre_header
      _
    $region3: #{vit_forward.1} parent=1 // loop_header
      %s16 = sphi 0, %s20
      %p17 = scmp.ge.s32.totalorder %s16, 4
      %s26 = sphi 0, %s28
      %s29 = sphi 0, %s26
      %s30 = sphi 0, %s29
      %s46 = sphi 0, %s30
      %s52 = sphi 0, %s54
      %s55 = sphi 0, %s52
      %s56 = sphi 0, %s55
      %s72 = sphi 0, %s56
      %s76 = sphi 0, %s76
      %s78 = sphi 0, %s76
      %s79 = sphi 0, %s78
      %s93 = sphi 0, %s79
      %s97 = sphi 0, %s97
      %s99 = sphi 0, %s97
      %s100 = sphi 0, %s99
      %s114 = sphi 0, %s100
      %s118 = sphi 0, %s118
      %s120 = sphi 0, %s118
      %s121 = sphi 0, %s120
      %s135 = sphi 0, %s121
      %s139 = sphi 0, %s139
      %s141 = sphi 0, %s139
      %s142 = sphi 0, %s141
      %s156 = sphi 0, %s142
      %s160 = sphi 0, %s160
      %s162 = sphi 0, %s160
      %s163 = sphi 0, %s162
      %s177 = sphi 0, %s163
      %s183 = sphi 0, %s185
      %s186 = sphi 0, %s183
      %s187 = sphi 0, %s186
      %s203 = sphi 0, %s187
    $region4: #{vit_forward.1} parent=1 // loop_header_branch
      %19 = sbr.rel (%p17) target = $region8
    $region5: #{vit_forward.1} parent=1 // loop_body
      %s21 = ssub.s32 %s16, 1
      %s22 = ssub.s32 %s16, 2
      %s23 = sadd.s32 %s16, 1
      %s24 = ssub.s32 %s16, %s23
      %p25 = scmp.eq.s32.totalorder %s24, 0
      %s27 = sadd.s32 %s26, 1
      %s28 = scalar_select %p25, %s26, %s27
      %p31 = pneg %p25
      %p32 = scmp.eq.s32.totalorder %s16, 1
      %p33 = por %p31, %p32
      %p34 = scmp.ne.s32.totalorder %s26, %s29
      %p35 = scmp.eq.s32.totalorder %s16, 0
      %p36 = por %p34, %p35
      %p37 = scmp.ne.s32.totalorder %s26, %s29
      %p38 = scmp.eq.s32.totalorder %s21, 1
      %p39 = por %p37, %p38
      %p40 = scmp.ne.s32.totalorder %s29, %s30
      %p41 = scmp.eq.s32.totalorder %s21, 0
      %p42 = por %p40, %p41
      %p43 = scmp.ne.s32.totalorder %s29, %s30
      %p44 = scmp.eq.s32.totalorder %s22, 1
      %p45 = por %p43, %p44
      %p47 = scmp.ne.s32.totalorder %s30, %s46
      %p48 = scmp.eq.s32.totalorder %s22, 0
      %p49 = por %p47, %p48
      %s50 = ssub.s32 %s16, %s23
      %p51 = scmp.eq.s32.totalorder %s50, 0
      %s53 = sadd.s32 %s52, 1
      %s54 = scalar_select %p51, %s52, %s53
      %p57 = pneg %p51
      %p58 = scmp.eq.s32.totalorder %s16, 1
      %p59 = por %p57, %p58
      %p60 = scmp.ne.s32.totalorder %s52, %s55
      %p61 = scmp.eq.s32.totalorder %s16, 0
      %p62 = por %p60, %p61
      %p63 = scmp.ne.s32.totalorder %s52, %s55
      %p64 = scmp.eq.s32.totalorder %s21, 1
      %p65 = por %p63, %p64
      %p66 = scmp.ne.s32.totalorder %s55, %s56
      %p67 = scmp.eq.s32.totalorder %s21, 0
      %p68 = por %p66, %p67
      %p69 = scmp.ne.s32.totalorder %s55, %s56
      %p70 = scmp.eq.s32.totalorder %s22, 1
      %p71 = por %p69, %p70
      %p73 = scmp.ne.s32.totalorder %s56, %s72
      %p74 = scmp.eq.s32.totalorder %s22, 0
      %p75 = por %p73, %p74
      %s77 = sadd.s32 %s76, 1
      %p80 = scmp.eq.s32.totalorder %s16, 1
      %p81 = scmp.ne.s32.totalorder %s76, %s78
      %p82 = scmp.eq.s32.totalorder %s16, 0
      %p83 = por %p81, %p82
      %p84 = scmp.ne.s32.totalorder %s76, %s78
      %p85 = scmp.eq.s32.totalorder %s21, 1
      %p86 = por %p84, %p85
      %p87 = scmp.ne.s32.totalorder %s78, %s79
      %p88 = scmp.eq.s32.totalorder %s21, 0
      %p89 = por %p87, %p88
      %p90 = scmp.ne.s32.totalorder %s78, %s79
      %p91 = scmp.eq.s32.totalorder %s22, 1
      %p92 = por %p90, %p91
      %p94 = scmp.ne.s32.totalorder %s79, %s93
      %p95 = scmp.eq.s32.totalorder %s22, 0
      %p96 = por %p94, %p95
      %s98 = sadd.s32 %s97, 1
      %p101 = scmp.eq.s32.totalorder %s16, 1
      %p102 = scmp.ne.s32.totalorder %s97, %s99
      %p103 = scmp.eq.s32.totalorder %s16, 0
      %p104 = por %p102, %p103
      %p105 = scmp.ne.s32.totalorder %s97, %s99
      %p106 = scmp.eq.s32.totalorder %s21, 1
      %p107 = por %p105, %p106
      %p108 = scmp.ne.s32.totalorder %s99, %s100
      %p109 = scmp.eq.s32.totalorder %s21, 0
      %p110 = por %p108, %p109
      %p111 = scmp.ne.s32.totalorder %s99, %s100
      %p112 = scmp.eq.s32.totalorder %s22, 1
      %p113 = por %p111, %p112
      %p115 = scmp.ne.s32.totalorder %s100, %s114
      %p116 = scmp.eq.s32.totalorder %s22, 0
      %p117 = por %p115, %p116
      %s119 = sadd.s32 %s118, 1
      %p122 = scmp.eq.s32.totalorder %s16, 1
      %p123 = scmp.ne.s32.totalorder %s118, %s120
      %p124 = scmp.eq.s32.totalorder %s16, 0
      %p125 = por %p123, %p124
      %p126 = scmp.ne.s32.totalorder %s118, %s120
      %p127 = scmp.eq.s32.totalorder %s21, 1
      %p128 = por %p126, %p127
      %p129 = scmp.ne.s32.totalorder %s120, %s121
      %p130 = scmp.eq.s32.totalorder %s21, 0
      %p131 = por %p129, %p130
      %p132 = scmp.ne.s32.totalorder %s120, %s121
      %p133 = scmp.eq.s32.totalorder %s22, 1
      %p134 = por %p132, %p133
      %p136 = scmp.ne.s32.totalorder %s121, %s135
      %p137 = scmp.eq.s32.totalorder %s22, 0
      %p138 = por %p136, %p137
      %s140 = sadd.s32 %s139, 1
      %p143 = scmp.eq.s32.totalorder %s16, 1
      %p144 = scmp.ne.s32.totalorder %s139, %s141
      %p145 = scmp.eq.s32.totalorder %s16, 0
      %p146 = por %p144, %p145
      %p147 = scmp.ne.s32.totalorder %s139, %s141
      %p148 = scmp.eq.s32.totalorder %s21, 1
      %p149 = por %p147, %p148
      %p150 = scmp.ne.s32.totalorder %s141, %s142
      %p151 = scmp.eq.s32.totalorder %s21, 0
      %p152 = por %p150, %p151
      %p153 = scmp.ne.s32.totalorder %s141, %s142
      %p154 = scmp.eq.s32.totalorder %s22, 1
      %p155 = por %p153, %p154
      %p157 = scmp.ne.s32.totalorder %s142, %s156
      %p158 = scmp.eq.s32.totalorder %s22, 0
      %p159 = por %p157, %p158
      %s161 = sadd.s32 %s160, 1
      %p164 = scmp.eq.s32.totalorder %s16, 1
      %p165 = scmp.ne.s32.totalorder %s160, %s162
      %p166 = scmp.eq.s32.totalorder %s16, 0
      %p167 = por %p165, %p166
      %p168 = scmp.ne.s32.totalorder %s160, %s162
      %p169 = scmp.eq.s32.totalorder %s21, 1
      %p170 = por %p168, %p169
      %p171 = scmp.ne.s32.totalorder %s162, %s163
      %p172 = scmp.eq.s32.totalorder %s21, 0
      %p173 = por %p171, %p172
      %p174 = scmp.ne.s32.totalorder %s162, %s163
      %p175 = scmp.eq.s32.totalorder %s22, 1
      %p176 = por %p174, %p175
      %p178 = scmp.ne.s32.totalorder %s163, %s177
      %p179 = scmp.eq.s32.totalorder %s22, 0
      %p180 = por %p178, %p179
      %s181 = ssub.s32 %s16, %s23
      %p182 = scmp.eq.s32.totalorder %s181, 0
      %s184 = sadd.s32 %s183, 1
      %s185 = scalar_select %p182, %s183, %s184
      %p188 = pneg %p182
      %p189 = scmp.eq.s32.totalorder %s16, 1
      %p190 = por %p188, %p189
      %p191 = scmp.ne.s32.totalorder %s183, %s186
      %p192 = scmp.eq.s32.totalorder %s16, 0
      %p193 = por %p191, %p192
      %p194 = scmp.ne.s32.totalorder %s183, %s186
      %p195 = scmp.eq.s32.totalorder %s21, 1
      %p196 = por %p194, %p195
      %p197 = scmp.ne.s32.totalorder %s186, %s187
      %p198 = scmp.eq.s32.totalorder %s21, 0
      %p199 = por %p197, %p198
      %p200 = scmp.ne.s32.totalorder %s186, %s187
      %p201 = scmp.eq.s32.totalorder %s22, 1
      %p202 = por %p200, %p201
      %p204 = scmp.ne.s32.totalorder %s187, %s203
      %p205 = scmp.eq.s32.totalorder %s22, 0
      %p206 = por %p204, %p205
      %p207 = scmp.le.s32.totalorder 1, %s16
      %p208 = scmp.lt.s32.totalorder %s16, 3
      %p209 = pnand %p207, %p208
      %p210 = pneg %p209
      // Predicated region
      $region9: #{vit_forward.1} parent=5 // pred_check
        _
      $region10: #{vit_forward.1} parent=5 // pred_check_branch
        %212 = sbr.rel (%p209) target = $region12
      $region11: #{vit_forward.1} parent=5 // pred_region
        %s213 = ssub.s32 %s16, 1
        // Predicated region
        $region13: #{vit_forward.1} parent=11 // pred_check
          %p214 = pneg %p89
        $region14: #{vit_forward.1} parent=11 // pred_check_branch
          %216 = sbr.rel (%p214) target = $region16
        $region15: #{vit_forward.1} parent=11 // pred_region
          _
        $region16: #{vit_forward.1} parent=11 // pred_fallthru
          _
        // Predicated region
        $region17: #{vit_forward.1} parent=11 // pred_check
          %p217 = pneg %p110
        $region18: #{vit_forward.1} parent=11 // pred_check_branch
          %219 = sbr.rel (%p217) target = $region20
        $region19: #{vit_forward.1} parent=11 // pred_region
          _
        $region20: #{vit_forward.1} parent=11 // pred_fallthru
          _
        // Predicated region
        $region21: #{vit_forward.1} parent=11 // pred_check
          %p220 = pneg %p131
        $region22: #{vit_forward.1} parent=11 // pred_check_branch
          %222 = sbr.rel (%p220) target = $region24
        $region23: #{vit_forward.1} parent=11 // pred_region
          _
        $region24: #{vit_forward.1} parent=11 // pred_fallthru
          _
        // Predicated region
        $region25: #{vit_forward.1} parent=11 // pred_check
          %p223 = pneg %p152
        $region26: #{vit_forward.1} parent=11 // pred_check_branch
          %225 = sbr.rel (%p223) target = $region28
        $region27: #{vit_forward.1} parent=11 // pred_region
          _
        $region28: #{vit_forward.1} parent=11 // pred_fallthru
          _
        // Predicated region
        $region29: #{vit_forward.1} parent=11 // pred_check
          %p226 = pneg %p173
        $region30: #{vit_forward.1} parent=11 // pred_check_branch
          %228 = sbr.rel (%p226) target = $region32
        $region31: #{vit_forward.1} parent=11 // pred_region
          _
        $region32: #{vit_forward.1} parent=11 // pred_fallthru
          _
      $region12: #{vit_forward.1} parent=5 // pred_fallthru
        _
      %p229 = scmp.lt.s32.totalorder %s16, 2
      // Predicated region
      $region33: #{vit_forward.1} parent=5 // pred_check
        %p230 = pneg %p229
      $region34: #{vit_forward.1} parent=5 // pred_check_branch
        %232 = sbr.rel (%p230) target = $region36
      $region35: #{vit_forward.1} parent=5 // pred_region
        // Predicated region
        $region37: #{vit_forward.1} parent=35 // pred_check
          %p233 = pneg %p36
        $region38: #{vit_forward.1} parent=35 // pred_check_branch
          %235 = sbr.rel (%p233) target = $region40
        $region39: #{vit_forward.1} parent=35 // pred_region
          %p236 = scmp.lt.s32.totalorder %s16, 1
          %s237 = scalar_select %p236, %s16, 1
          %s238 = smul.addr %s237, 4
          %s239 = smul.addr %s238, 8
          %s240 = scalar_lea.vmem %s0, %s239
        $region40: #{vit_forward.1} parent=35 // pred_fallthru
          _
        // Predicated region
        $region41: #{vit_forward.1} parent=35 // pred_check
          %p241 = pneg %p62
        $region42: #{vit_forward.1} parent=35 // pred_check_branch
          %243 = sbr.rel (%p241) target = $region44
        $region43: #{vit_forward.1} parent=35 // pred_region
          %p244 = scmp.lt.s32.totalorder %s16, 1
          %s245 = scalar_select %p244, %s16, 1
          %s246 = smul.addr %s245, 4
          %s247 = scalar_lea.vmem %s1, %s246
        $region44: #{vit_forward.1} parent=35 // pred_fallthru
          _
      $region36: #{vit_forward.1} parent=5 // pred_fallthru
        _
      %p248 = scmp.le.s32.totalorder 1, %s16
      %p249 = scmp.lt.s32.totalorder %s16, 3
      %p250 = pnand %p248, %p249
      %p251 = pneg %p250
      // Predicated region
      $region45: #{vit_forward.1} parent=5 // pred_check
        _
      $region46: #{vit_forward.1} parent=5 // pred_check_branch
        %253 = sbr.rel (%p250) target = $region48
      $region47: #{vit_forward.1} parent=5 // pred_region
        %s254 = ssub.s32 %s16, 1
        %p255 = scmp.lt.s32.totalorder %s21, 1
        %s256 = scalar_select %p255, %s21, 1
        %s257 = smul.addr %s256, 4
        %s258 = smul.addr %s257, 8
        %s259 = scalar_lea.vmem %s0, %s258
        %p260 = pneg %p42
        %p261 = pneg %p39
        %p262 = scmp.lt.s32.totalorder %s21, 1
        %s263 = scalar_select %p262, %s21, 1
        %s264 = smul.addr %s263, 4
        %s265 = scalar_lea.vmem %s1, %s264
        %p266 = pneg %p68
        %p267 = pneg %p65
        %p268 = pneg %p89
        %p269 = pneg %p86
        %p270 = pneg %p110
        %p271 = pneg %p107
        %p272 = pneg %p131
        %p273 = pneg %p128
        %p274 = pneg %p152
        %p275 = pneg %p149
        %p276 = pneg %p173
        %p277 = pneg %p170
        %p278 = pneg %p199
        %p279 = pneg %p196
        %s280 = sand.u32 %s186, 1
        %s281 = scalar_lea.sflag [#allocation3], %s280
        %s282 = sand.u32 %s186, 1
        %s283 = smul.addr %s282, 16
        %s284 = scalar_lea.vmem [#allocation2], %s283
        %p285 = scmp.lt.s32.totalorder %s21, 1
        %s286 = scalar_select %p285, %s21, 1
        %s287 = smul.addr %s286, 4
        %s288 = smul.addr %s287, 8
        %s289 = scalar_lea.vmem %s0, %s288
        %p290 = scmp.lt.s32.totalorder %s21, 1
        %s291 = scalar_select %p290, %s21, 1
        %s292 = smul.addr %s291, 4
        %s293 = scalar_lea.vmem %s1, %s292
        %v294 = vld [vmem:[%s289] sm:$0xff]
        %v295 = vld [vmem:[%s289 + $0x8] sm:$0xff]
        %v296 = vld [vmem:[%s289 + $0x10] sm:$0xff]
        %v297 = vld [vmem:[%s289 + $0x18] sm:$0xff]
        %vm298 = vcmask 523264
        %v299 = vsel %vm298, %v295, 0.0
        %v300 = vadd.f32 %v294, %v299
        %301 = vadd.xlane.f32.xlu0 %v300
        %v302 = vpop.xlane.xlu0 %301
        %v303 = vsel %vm298, %v297, 0.0
        %v304 = vadd.f32 %v296, %v303
        %305 = vadd.xlane.f32.xlu0 %v304
        %v306 = vpop.xlane.xlu0 %305
        %v307 = vrcp.pop 192.0
        %v308 = vmul.f32 %v302, %v307
        %v309 = vmul.f32 %v306, %v307
        %v310 = vsub.f32 %v294, %v308
        %v311 = vsub.f32 %v295, %v308
        %v312 = vsub.f32 %v296, %v309
        %v313 = vsub.f32 %v297, %v309
        %v314 = vmul.f32 %v310, %v310
        %v315 = vmul.f32 %v311, %v311
        %v316 = vmul.f32 %v312, %v312
        %v317 = vmul.f32 %v313, %v313
        %v318 = vsel %vm298, %v315, 0.0
        %v319 = vadd.f32 %v314, %v318
        %320 = vadd.xlane.f32.xlu0 %v319
        %v321 = vpop.xlane.xlu0 %320
        %v322 = vsel %vm298, %v317, 0.0
        %v323 = vadd.f32 %v316, %v322
        %324 = vadd.xlane.f32.xlu0 %v323
        %v325 = vpop.xlane.xlu0 %324
        %v326 = vmul.f32 %v321, %v307
        %v327 = vmul.f32 %v325, %v307
        %v328 = vadd.f32 %v326, 1e-05
        %v329 = vadd.f32 %v327, 1e-05
        %v330 = vrsqrt.pop %v328
        %v331 = vrsqrt.pop %v329
        %v332 = vmul.f32 %v310, %v330
        %v333 = vmul.f32 %v311, %v330
        %v334 = vmul.f32 %v312, %v331
        %v335 = vmul.f32 %v313, %v331
        %v336 = vld [vmem:[%s5] ss:$8 sm:$0x3]
        %v338 = vlaneseq
        %v339 = vshrl.u32 %v338, 7
        %v340 = vsub.s32 0, %v339
        %v341 = vrot.slane %v336, %v340
        %v342 = vlaneseq
        %v343 = vshrl.u32 %v342, 7
        %v344 = vsub.s32 1, %v343
        %v345 = vrot.slane %v336, %v344
        %v348 = vmul.f32 %v332, %v341
        %v349 = vmul.f32 %v333, %v345
        %v350 = vmul.f32 %v334, %v341
        %v351 = vmul.f32 %v335, %v345
        %s352 = scalar_lea.vmem %s5, 1
        %v353 = vld [vmem:[%s352] ss:$8 sm:$0x3]
        %v355 = vlaneseq
        %v356 = vshrl.u32 %v355, 7
        %v357 = vsub.s32 0, %v356
        %v358 = vrot.slane %v353, %v357
        %v359 = vlaneseq
        %v360 = vshrl.u32 %v359, 7
        %v361 = vsub.s32 1, %v360
        %v362 = vrot.slane %v353, %v361
        %v365 = vadd.f32 %v348, %v358
        %v366 = vadd.f32 %v349, %v362
        %v367 = vadd.f32 %v350, %v358
        %v368 = vadd.f32 %v351, %v362
        %v369 = vld [vmem:[%s6] sm:$0xff]
        %v370 = vld [vmem:[%s6 + $0x8] sm:$0xff]
        %v371 = vld [vmem:[%s6 + $0x10] sm:$0xff]
        %v372 = vld [vmem:[%s6 + $0x18] sm:$0xff]
        %v373 = vld [vmem:[%s6 + $0x20] sm:$0xff]
        %v374 = vld [vmem:[%s6 + $0x28] sm:$0xff]
        %v375 = vld [vmem:[%s6 + $0x30] sm:$0xff]
        %v376 = vld [vmem:[%s6 + $0x38] sm:$0xff]
        %v377 = vld [vmem:[%s6 + $0x40] sm:$0xff]
        %v378 = vld [vmem:[%s6 + $0x48] sm:$0xff]
        %v379 = vld [vmem:[%s6 + $0x50] sm:$0xff]
        %v380 = vld [vmem:[%s6 + $0x58] sm:$0xff]
        %v381 = vld [vmem:[%s6 + $0x60] sm:$0xff]
        %v382 = vld [vmem:[%s6 + $0x68] sm:$0xff]
        %v383 = vld [vmem:[%s6 + $0x70] sm:$0xff]
        %v384 = vld [vmem:[%s6 + $0x78] sm:$0xff]
        %v385 = vld [vmem:[%s6 + $0x80] sm:$0xff]
        %v386 = vld [vmem:[%s6 + $0x88] sm:$0xff]
        %v387 = vld [vmem:[%s6 + $0x90] sm:$0xff]
        %v388 = vld [vmem:[%s6 + $0x98] sm:$0xff]
        %v389 = vld [vmem:[%s6 + $0xa0] sm:$0xff]
        %v390 = vld [vmem:[%s6 + $0xa8] sm:$0xff]
        %v391 = vld [vmem:[%s6 + $0xb0] sm:$0xff]
        %v392 = vld [vmem:[%s6 + $0xb8] sm:$0xff]
        %v393 = vld [vmem:[%s5 + $0x2] ss:$0 sm:$0xff]
        %v395 = vsel %vm298, %v366, 0
        %v398 = vsel %vm298, %v368, 0
        %400 = vmatprep.subr.mxu0 0.0
        %401 = vmatpush1.msra.mxu0 %v369
        %402 = vmatprep.subr.mxu0 0.0
        %403 = vmatpush1.msra.mxu0 %v370
        %404 = vmatprep.subr.mxu0 0.0
        %405 = vmatpush1.msra.mxu0 %v371
        %406 = vmatprep.subr.mxu0 0.0
        %407 = vmatpush1.msra.mxu0 %v372
        %408 = vmatprep.subr.mxu0 0.0
        %409 = vmatpush1.msra.mxu0 %v373
        %410 = vmatprep.subr.mxu0 0.0
        %411 = vmatpush1.msra.mxu0 %v374
        %412 = vmatprep.subr.mxu0 0.0
        %413 = vmatpush1.msra.mxu0 %v375
        %414 = vmatprep.subr.mxu0 0.0
        %415 = vmatpush1.msra.mxu0 %v376
        %416 = vmatprep.subr.mxu0 0.0
        %417 = vmatpush1.msra.mxu0 %v377
        %418 = vmatprep.subr.mxu0 0.0
        %419 = vmatpush1.msra.mxu0 %v378
        %420 = vmatprep.subr.mxu0 0.0
        %421 = vmatpush1.msra.mxu0 %v379
        %422 = vmatprep.subr.mxu0 0.0
        %423 = vmatpush1.msra.mxu0 %v380
        %424 = vmatprep.subr.mxu0 0.0
        %425 = vmatpush1.msra.mxu0 %v381
        %426 = vmatprep.subr.mxu0 0.0
        %427 = vmatpush1.msra.mxu0 %v382
        %428 = vmatprep.subr.mxu0 0.0
        %429 = vmatpush1.msra.mxu0 %v383
        %430 = vmatprep.subr.mxu0 0.0
        %431 = vmatpush1.msra.mxu0 %v384
        %432 = vmatprep.subr.mxu0 0.0
        %433 = vmatpush1.msra.mxu0 %v385
        %434 = vmatprep.subr.mxu0 0.0
        %435 = vmatpush1.msra.mxu0 %v386
        %436 = vmatprep.subr.mxu0 0.0
        %437 = vmatpush1.msra.mxu0 %v387
        %438 = vmatprep.subr.mxu0 0.0
        %439 = vmatpush1.msra.mxu0 %v388
        %440 = vmatprep.subr.mxu0 0.0
        %441 = vmatpush1.msra.mxu0 %v389
        %442 = vmatprep.subr.mxu0 0.0
        %443 = vmatpush1.msra.mxu0 %v390
        %444 = vmatprep.subr.mxu0 0.0
        %445 = vmatpush1.msra.mxu0 %v391
        %446 = vmatprep.subr.mxu0 0.0
        %447 = vmatpush1.msra.mxu0 %v392
        %448 = vmatprep.subr.mxu0 0.0
        %449 = vmatpush1.msra.mxu0 0.0
        %450 = vmatprep.subr.mxu0 0.0
        %451 = vmatpush1.msra.mxu0 0.0
        %452 = vmatprep.subr.mxu0 0.0
        %453 = vmatpush1.msra.mxu0 0.0
        %454 = vmatprep.subr.mxu0 0.0
        %455 = vmatpush1.msra.mxu0 0.0
        %456 = vmatprep.subr.mxu0 0.0
        %457 = vmatpush1.msra.mxu0 0.0
        %458 = vmatprep.subr.mxu0 0.0
        %459 = vmatpush1.msra.mxu0 0.0
        %460 = vmatprep.subr.mxu0 0.0
        %461 = vmatpush1.msra.mxu0 0.0
        %462 = vmatprep.subr.mxu0 0.0
        %463 = vmatpush1.msra.mxu0 0.0
        %464 = vmatprep.mubr.f32.mxu0 %v395
        %465 = vmatmul.mubr.f32.gmra.mrb[0].mxu0 %v365
        %v466 = vpop.f32.mrb[0].mxu0
        %v467 = vadd.f32 %v393, %v466
        %v468 = vpop.f32.mrb[0].mxu0
        %469 = vmatprep.mubr.f32.mxu0 %v398
        %470 = vmatmul.mubr.f32.gmra.mrb[0].mxu0 %v367
        %v471 = vpop.f32.mrb[0].mxu0
        %v472 = vadd.f32 %v393, %v471
        %v473 = vpop.f32.mrb[0].mxu0
        %474 = vdwg.mxu0
        %vm475 = vcmask 261120
        %v476 = vsel %vm475, %v467, 0.0
        %477 = vadd.xlane.f32.xlu0 %v476
        %v478 = vpop.xlane.xlu0 %477
        %v479 = vsel %vm475, %v472, 0.0
        %480 = vadd.xlane.f32.xlu0 %v479
        %v481 = vpop.xlane.xlu0 %480
        %v482 = vrcp.pop 32.0
        %v483 = vmul.f32 %v478, %v482
        %v484 = vmul.f32 %v481, %v482
        %v485 = vsub.f32 %v467, %v483
        %v486 = vsub.f32 %v472, %v484
        %v487 = vmul.f32 %v485, %v485
        %v488 = vmul.f32 %v486, %v486
        %v489 = vsel %vm475, %v487, 0.0
        %490 = vadd.xlane.f32.xlu0 %v489
        %v491 = vpop.xlane.xlu0 %490
        %v492 = vsel %vm475, %v488, 0.0
        %493 = vadd.xlane.f32.xlu0 %v492
        %v494 = vpop.xlane.xlu0 %493
        %v495 = vmul.f32 %v491, %v482
        %v496 = vmul.f32 %v494, %v482
        %v497 = vadd.f32 %v495, 1e-05
        %v498 = vadd.f32 %v496, 1e-05
        %v499 = vrsqrt.pop %v497
        %v500 = vrsqrt.pop %v498
        %v501 = vmul.f32 %v485, %v499
        %v502 = vmul.f32 %v486, %v500
        %v503 = vld [vmem:[%s5 + $0x3] ss:$0 sm:$0xff]
        %v504 = vmul.f32 %v501, %v503
        %v505 = vmul.f32 %v502, %v503
        %v506 = vld [vmem:[%s5 + $0x4] ss:$0 sm:$0xff]
        %v507 = vadd.f32 %v504, %v506
        %v508 = vadd.f32 %v505, %v506
        %v509 = vld [vmem:[%s293] sm:$0xf]
        %v510 = vld [vmem:[%s6 + $0xc0] sm:$0x3f]
        %v511 = vld [vmem:[%s5 + $0x5] ss:$0 sm:$0xff]
        %vm512 = vcmask 48128
        %v514 = vsel %vm512, %v509, 0
        %vm516 = vcmask 1045504
        %v518 = vsel %vm516, %v510, 0
        %520 = vmatprep.subr.mxu0 0.0
        %521 = vmatpush1.msra.mxu0 %v518
        %522 = vmatprep.subr.mxu0 0.0
        %523 = vmatpush1.msra.mxu0 0.0
        %524 = vmatprep.subr.mxu0 0.0
        %525 = vmatpush1.msra.mxu0 0.0
        %526 = vmatprep.subr.mxu0 0.0
        %527 = vmatpush1.msra.mxu0 0.0
        %528 = vmatprep.subr.mxu0 0.0
        %529 = vmatpush1.msra.mxu0 0.0
        %530 = vmatprep.subr.mxu0 0.0
        %531 = vmatpush1.msra.mxu0 0.0
        %532 = vmatprep.subr.mxu0 0.0
        %533 = vmatpush1.msra.mxu0 0.0
        %534 = vmatprep.subr.mxu0 0.0
        %535 = vmatpush1.msra.mxu0 0.0
        %536 = vmatprep.subr.mxu0 0.0
        %537 = vmatpush1.msra.mxu0 0.0
        %538 = vmatprep.subr.mxu0 0.0
        %539 = vmatpush1.msra.mxu0 0.0
        %540 = vmatprep.subr.mxu0 0.0
        %541 = vmatpush1.msra.mxu0 0.0
        %542 = vmatprep.subr.mxu0 0.0
        %543 = vmatpush1.msra.mxu0 0.0
        %544 = vmatprep.subr.mxu0 0.0
        %545 = vmatpush1.msra.mxu0 0.0
        %546 = vmatprep.subr.mxu0 0.0
        %547 = vmatpush1.msra.mxu0 0.0
        %548 = vmatprep.subr.mxu0 0.0
        %549 = vmatpush1.msra.mxu0 0.0
        %550 = vmatprep.subr.mxu0 0.0
        %551 = vmatpush1.msra.mxu0 0.0
        %552 = vmatprep.subr.mxu0 0.0
        %553 = vmatpush1.msra.mxu0 0.0
        %554 = vmatprep.subr.mxu0 0.0
        %555 = vmatpush1.msra.mxu0 0.0
        %556 = vmatprep.subr.mxu0 0.0
        %557 = vmatpush1.msra.mxu0 0.0
        %558 = vmatprep.subr.mxu0 0.0
        %559 = vmatpush1.msra.mxu0 0.0
        %560 = vmatprep.subr.mxu0 0.0
        %561 = vmatpush1.msra.mxu0 0.0
        %562 = vmatprep.subr.mxu0 0.0
        %563 = vmatpush1.msra.mxu0 0.0
        %564 = vmatprep.subr.mxu0 0.0
        %565 = vmatpush1.msra.mxu0 0.0
        %566 = vmatprep.subr.mxu0 0.0
        %567 = vmatpush1.msra.mxu0 0.0
        %568 = vmatprep.subr.mxu0 0.0
        %569 = vmatpush1.msra.mxu0 0.0
        %570 = vmatprep.subr.mxu0 0.0
        %571 = vmatpush1.msra.mxu0 0.0
        %572 = vmatprep.subr.mxu0 0.0
        %573 = vmatpush1.msra.mxu0 0.0
        %574 = vmatprep.subr.mxu0 0.0
        %575 = vmatpush1.msra.mxu0 0.0
        %576 = vmatprep.subr.mxu0 0.0
        %577 = vmatpush1.msra.mxu0 0.0
        %578 = vmatprep.subr.mxu0 0.0
        %579 = vmatpush1.msra.mxu0 0.0
        %580 = vmatprep.subr.mxu0 0.0
        %581 = vmatpush1.msra.mxu0 0.0
        %582 = vmatprep.subr.mxu0 0.0
        %583 = vmatpush1.msra.mxu0 0.0
        %584 = vmatprep.mubr.f32.mxu0 0.0
        %585 = vmatmul.mubr.f32.gmra.mrb[0].mxu0 %v514
        %v586 = vpop.f32.mrb[0].mxu0
        %v587 = vadd.f32 %v511, %v586
        %v588 = vpop.f32.mrb[0].mxu0
        %589 = vdwg.mxu0
        %vm590 = vcmask 257024
        %v591 = vsel %vm590, %v587, 0.0
        %592 = vadd.xlane.f32.xlu0 %v591
        %v593 = vpop.xlane.xlu0 %592
        %v594 = vmul.f32 %v593, %v482
        %v595 = vsub.f32 %v587, %v594
        %v596 = vmul.f32 %v595, %v595
        %v597 = vsel %vm590, %v596, 0.0
        %598 = vadd.xlane.f32.xlu0 %v597
        %v599 = vpop.xlane.xlu0 %598
        %v600 = vmul.f32 %v599, %v482
        %v601 = vadd.f32 %v600, 1e-05
        %v602 = vrsqrt.pop %v601
        %v603 = vmul.f32 %v595, %v602
        %v604 = vld [vmem:[%s5 + $0x6] ss:$0 sm:$0xff]
        %v605 = vmul.f32 %v603, %v604
        %v606 = vld [vmem:[%s5 + $0x7] ss:$0 sm:$0xff]
        %v607 = vadd.f32 %v605, %v606
        %v608 = vmul.f32 %v607, 0.5
        %v609 = vmul.f32 %v607, 0.70710677
        %v610 = verf.f32.pop %v609
        %v611 = vadd.f32 %v610, 1.0
        %v612 = vmul.f32 %v608, %v611
        %v613 = vld [vmem:[%s6 + $0xc8] sm:$0xff]
        %v614 = vld [vmem:[%s6 + $0xd0] sm:$0xff]
        %v615 = vld [vmem:[%s6 + $0xd8] sm:$0xff]
        %v616 = vld [vmem:[%s6 + $0xe0] sm:$0xff]
        %v617 = vld [vmem:[%s5 + $0x10] ss:$0 sm:$0xff]
        %v619 = vsel %vm475, %v612, 0
        %621 = vmatprep.subr.mxu0 0.0
        %622 = vmatpush1.msra.mxu0 %v613
        %623 = vmatprep.subr.mxu0 0.0
        %624 = vmatpush1.msra.mxu0 %v614
        %625 = vmatprep.subr.mxu0 0.0
        %626 = vmatpush1.msra.mxu0 %v615
        %627 = vmatprep.subr.mxu0 0.0
        %628 = vmatpush1.msra.mxu0 %v616
        %629 = vmatprep.subr.mxu0 0.0
        %630 = vmatpush1.msra.mxu0 0.0
        %631 = vmatprep.subr.mxu0 0.0
        %632 = vmatpush1.msra.mxu0 0.0
        %633 = vmatprep.subr.mxu0 0.0
        %634 = vmatpush1.msra.mxu0 0.0
        %635 = vmatprep.subr.mxu0 0.0
        %636 = vmatpush1.msra.mxu0 0.0
        %637 = vmatprep.subr.mxu0 0.0
        %638 = vmatpush1.msra.mxu0 0.0
        %639 = vmatprep.subr.mxu0 0.0
        %640 = vmatpush1.msra.mxu0 0.0
        %641 = vmatprep.subr.mxu0 0.0
        %642 = vmatpush1.msra.mxu0 0.0
        %643 = vmatprep.subr.mxu0 0.0
        %644 = vmatpush1.msra.mxu0 0.0
        %645 = vmatprep.subr.mxu0 0.0
        %646 = vmatpush1.msra.mxu0 0.0
        %647 = vmatprep.subr.mxu0 0.0
        %648 = vmatpush1.msra.mxu0 0.0
        %649 = vmatprep.subr.mxu0 0.0
        %650 = vmatpush1.msra.mxu0 0.0
        %651 = vmatprep.subr.mxu0 0.0
        %652 = vmatpush1.msra.mxu0 0.0
        %653 = vmatprep.subr.mxu0 0.0
        %654 = vmatpush1.msra.mxu0 0.0
        %655 = vmatprep.subr.mxu0 0.0
        %656 = vmatpush1.msra.mxu0 0.0
        %657 = vmatprep.subr.mxu0 0.0
        %658 = vmatpush1.msra.mxu0 0.0
        %659 = vmatprep.subr.mxu0 0.0
        %660 = vmatpush1.msra.mxu0 0.0
        %661 = vmatprep.subr.mxu0 0.0
        %662 = vmatpush1.msra.mxu0 0.0
        %663 = vmatprep.subr.mxu0 0.0
        %664 = vmatpush1.msra.mxu0 0.0
        %665 = vmatprep.subr.mxu0 0.0
        %666 = vmatpush1.msra.mxu0 0.0
        %667 = vmatprep.subr.mxu0 0.0
        %668 = vmatpush1.msra.mxu0 0.0
        %669 = vmatprep.subr.mxu0 0.0
        %670 = vmatpush1.msra.mxu0 0.0
        %671 = vmatprep.subr.mxu0 0.0
        %672 = vmatpush1.msra.mxu0 0.0
        %673 = vmatprep.subr.mxu0 0.0
        %674 = vmatpush1.msra.mxu0 0.0
        %675 = vmatprep.subr.mxu0 0.0
        %676 = vmatpush1.msra.mxu0 0.0
        %677 = vmatprep.subr.mxu0 0.0
        %678 = vmatpush1.msra.mxu0 0.0
        %679 = vmatprep.subr.mxu0 0.0
        %680 = vmatpush1.msra.mxu0 0.0
        %681 = vmatprep.subr.mxu0 0.0
        %682 = vmatpush1.msra.mxu0 0.0
        %683 = vmatprep.subr.mxu0 0.0
        %684 = vmatpush1.msra.mxu0 0.0
        %685 = vmatprep.mubr.f32.mxu0 0.0
        %686 = vmatmul.mubr.f32.gmra.mrb[0].mxu0 %v619
        %v687 = vpop.f32.mrb[0].mxu0
        %v688 = vadd.f32 %v617, %v687
        %v689 = vpop.f32.mrb[0].mxu0
        %690 = vdwg.mxu0
        %v691 = vsel %vm590, %v688, 0.0
        %692 = vadd.xlane.f32.xlu0 %v691
        %v693 = vpop.xlane.xlu0 %692
        %v694 = vmul.f32 %v693, %v482
        %v695 = vsub.f32 %v688, %v694
        %v696 = vmul.f32 %v695, %v695
        %v697 = vsel %vm590, %v696, 0.0
        %698 = vadd.xlane.f32.xlu0 %v697
        %v699 = vpop.xlane.xlu0 %698
        %v700 = vmul.f32 %v699, %v482
        %v701 = vadd.f32 %v700, 1e-05
        %v702 = vrsqrt.pop %v701
        %v703 = vmul.f32 %v695, %v702
        %v704 = vld [vmem:[%s5 + $0x11] ss:$0 sm:$0xff]
        %v705 = vmul.f32 %v703, %v704
        %v706 = vld [vmem:[%s5 + $0x12] ss:$0 sm:$0xff]
        %v707 = vadd.f32 %v705, %v706
        %v708 = vld [vmem:[%s4] sm:$0xff]
        %v709 = vld [vmem:[%s4 + $0x8] sm:$0xff]
        %vm710 = vcmask 31744
        %v712 = vsel %vm710, %v708, 0
        %v715 = vsel %vm710, %v709, 0
        %vm717 = vcmask 1043456
        %v719 = vsel %vm717, %v707, 0
        %721 = vmatprep.subr.mxu0 0.0
        %722 = vmatpush1.msra.mxu0 %v719
        %723 = vmatprep.subr.mxu0 0.0
        %724 = vmatpush1.msra.mxu0 0.0
        %725 = vmatprep.subr.mxu0 0.0
        %726 = vmatpush1.msra.mxu0 0.0
        %727 = vmatprep.subr.mxu0 0.0
        %728 = vmatpush1.msra.mxu0 0.0
        %729 = vmatprep.subr.mxu0 0.0
        %730 = vmatpush1.msra.mxu0 0.0
        %731 = vmatprep.subr.mxu0 0.0
        %732 = vmatpush1.msra.mxu0 0.0
        %733 = vmatprep.subr.mxu0 0.0
        %734 = vmatpush1.msra.mxu0 0.0
        %735 = vmatprep.subr.mxu0 0.0
        %736 = vmatpush1.msra.mxu0 0.0
        %737 = vmatprep.subr.mxu0 0.0
        %738 = vmatpush1.msra.mxu0 0.0
        %739 = vmatprep.subr.mxu0 0.0
        %740 = vmatpush1.msra.mxu0 0.0
        %741 = vmatprep.subr.mxu0 0.0
        %742 = vmatpush1.msra.mxu0 0.0
        %743 = vmatprep.subr.mxu0 0.0
        %744 = vmatpush1.msra.mxu0 0.0
        %745 = vmatprep.subr.mxu0 0.0
        %746 = vmatpush1.msra.mxu0 0.0
        %747 = vmatprep.subr.mxu0 0.0
        %748 = vmatpush1.msra.mxu0 0.0
        %749 = vmatprep.subr.mxu0 0.0
        %750 = vmatpush1.msra.mxu0 0.0
        %751 = vmatprep.subr.mxu0 0.0
        %752 = vmatpush1.msra.mxu0 0.0
        %753 = vmatprep.subr.mxu0 0.0
        %754 = vmatpush1.msra.mxu0 0.0
        %755 = vmatprep.subr.mxu0 0.0
        %756 = vmatpush1.msra.mxu0 0.0
        %757 = vmatprep.subr.mxu0 0.0
        %758 = vmatpush1.msra.mxu0 0.0
        %759 = vmatprep.subr.mxu0 0.0
        %760 = vmatpush1.msra.mxu0 0.0
        %761 = vmatprep.subr.mxu0 0.0
        %762 = vmatpush1.msra.mxu0 0.0
        %763 = vmatprep.subr.mxu0 0.0
        %764 = vmatpush1.msra.mxu0 0.0
        %765 = vmatprep.subr.mxu0 0.0
        %766 = vmatpush1.msra.mxu0 0.0
        %767 = vmatprep.subr.mxu0 0.0
        %768 = vmatpush1.msra.mxu0 0.0
        %769 = vmatprep.subr.mxu0 0.0
        %770 = vmatpush1.msra.mxu0 0.0
        %771 = vmatprep.subr.mxu0 0.0
        %772 = vmatpush1.msra.mxu0 0.0
        %773 = vmatprep.subr.mxu0 0.0
        %774 = vmatpush1.msra.mxu0 0.0
        %775 = vmatprep.subr.mxu0 0.0
        %776 = vmatpush1.msra.mxu0 0.0
        %777 = vmatprep.subr.mxu0 0.0
        %778 = vmatpush1.msra.mxu0 0.0
        %779 = vmatprep.subr.mxu0 0.0
        %780 = vmatpush1.msra.mxu0 0.0
        %781 = vmatprep.subr.mxu0 0.0
        %782 = vmatpush1.msra.mxu0 0.0
        %783 = vmatprep.subr.mxu0 0.0
        %784 = vmatpush1.msra.mxu0 0.0
        %785 = vmatprep.mubr.f32.mxu0 0.0
        %786 = vmatmul.mubr.f32.gmra.mrb[0].mxu0 %v712
        %v787 = vpop.f32.mrb[0].mxu0
        %v788 = vadd.f32 0.0, %v787
        %v789 = vpop.f32.mrb[0].mxu0
        %790 = vmatprep.mubr.f32.mxu0 0.0
        %791 = vmatmul.mubr.f32.gmra.mrb[0].mxu0 %v715
        %v792 = vpop.f32.mrb[0].mxu0
        %v793 = vadd.f32 0.0, %v792
        %v794 = vpop.f32.mrb[0].mxu0
        %795 = vdwg.mxu0
        %v796 = vadd.f32 %v507, %v788
        %v797 = vadd.f32 %v508, %v793
        %v798 = vld [vmem:[%s2] sm:$0xff]
        %v799 = vld [vmem:[%s2 + $0x8] sm:$0xff]
        %v800 = vadd.f32 %v796, %v798
        %v801 = vadd.f32 %v797, %v799
        %v802 = vld [vmem:[%s3] sm:$0xff]
        %v803 = vld [vmem:[%s3 + $0x8] sm:$0xff]
        %v804 = vsel %vm475, %v800, 0.0
        %805 = vadd.xlane.f32.xlu0 %v804
        %v806 = vpop.xlane.xlu0 %805
        %v807 = vsel %vm475, %v801, 0.0
        %808 = vadd.xlane.f32.xlu0 %v807
        %v809 = vpop.xlane.xlu0 %808
        %v810 = vmul.f32 %v806, %v482
        %v811 = vmul.f32 %v809, %v482
        %v812 = vsub.f32 %v800, %v810
        %v813 = vsub.f32 %v801, %v811
        %v814 = vmul.f32 %v812, %v812
        %v815 = vmul.f32 %v813, %v813
        %v816 = vsel %vm475, %v814, 0.0
        %817 = vadd.xlane.f32.xlu0 %v816
        %v818 = vpop.xlane.xlu0 %817
        %v819 = vsel %vm475, %v815, 0.0
        %820 = vadd.xlane.f32.xlu0 %v819
        %v821 = vpop.xlane.xlu0 %820
        %v822 = vmul.f32 %v818, %v482
        %v823 = vmul.f32 %v821, %v482
        %v824 = vadd.f32 %v822, 1e-05
        %v825 = vadd.f32 %v823, 1e-05
        %v826 = vrsqrt.pop %v824
        %v827 = vrsqrt.pop %v825
        %v828 = vmul.f32 %v812, %v826
        %v829 = vmul.f32 %v813, %v827
        %v830 = vld [vmem:[%s5 + $0x15] ss:$0 sm:$0xff]
        %v831 = vmul.f32 %v828, %v830
        %v832 = vmul.f32 %v829, %v830
        %v833 = vld [vmem:[%s5 + $0x16] ss:$0 sm:$0xff]
        %v834 = vadd.f32 %v831, %v833
        %v835 = vadd.f32 %v832, %v833
        %v836 = vld [vmem:[%s6 + $0xe8] sm:$0xff]
        %v837 = vld [vmem:[%s6 + $0xf0] sm:$0xff]
        %v838 = vld [vmem:[%s6 + $0xf8] sm:$0xff]
        %v839 = vld [vmem:[%s6 + $0x100] sm:$0xff]
        %v841 = vsel %vm475, %v834, 0
        %v844 = vsel %vm475, %v835, 0
        %846 = vmatprep.subr.mxu0 0.0
        %847 = vmatpush1.msra.mxu0 %v836
        %848 = vmatprep.subr.mxu0 0.0
        %849 = vmatpush1.msra.mxu0 %v837
        %850 = vmatprep.subr.mxu0 0.0
        %851 = vmatpush1.msra.mxu0 %v838
        %852 = vmatprep.subr.mxu0 0.0
        %853 = vmatpush1.msra.mxu0 %v839
        %854 = vmatprep.subr.mxu0 0.0
        %855 = vmatpush1.msra.mxu0 0.0
        %856 = vmatprep.subr.mxu0 0.0
        %857 = vmatpush1.msra.mxu0 0.0
        %858 = vmatprep.subr.mxu0 0.0
        %859 = vmatpush1.msra.mxu0 0.0
        %860 = vmatprep.subr.mxu0 0.0
        %861 = vmatpush1.msra.mxu0 0.0
        %862 = vmatprep.subr.mxu0 0.0
        %863 = vmatpush1.msra.mxu0 0.0
        %864 = vmatprep.subr.mxu0 0.0
        %865 = vmatpush1.msra.mxu0 0.0
        %866 = vmatprep.subr.mxu0 0.0
        %867 = vmatpush1.msra.mxu0 0.0
        %868 = vmatprep.subr.mxu0 0.0
        %869 = vmatpush1.msra.mxu0 0.0
        %870 = vmatprep.subr.mxu0 0.0
        %871 = vmatpush1.msra.mxu0 0.0
        %872 = vmatprep.subr.mxu0 0.0
        %873 = vmatpush1.msra.mxu0 0.0
        %874 = vmatprep.subr.mxu0 0.0
        %875 = vmatpush1.msra.mxu0 0.0
        %876 = vmatprep.subr.mxu0 0.0
        %877 = vmatpush1.msra.mxu0 0.0
        %878 = vmatprep.subr.mxu0 0.0
        %879 = vmatpush1.msra.mxu0 0.0
        %880 = vmatprep.subr.mxu0 0.0
        %881 = vmatpush1.msra.mxu0 0.0
        %882 = vmatprep.subr.mxu0 0.0
        %883 = vmatpush1.msra.mxu0 0.0
        %884 = vmatprep.subr.mxu0 0.0
        %885 = vmatpush1.msra.mxu0 0.0
        %886 = vmatprep.subr.mxu0 0.0
        %887 = vmatpush1.msra.mxu0 0.0
        %888 = vmatprep.subr.mxu0 0.0
        %889 = vmatpush1.msra.mxu0 0.0
        %890 = vmatprep.subr.mxu0 0.0
        %891 = vmatpush1.msra.mxu0 0.0
        %892 = vmatprep.subr.mxu0 0.0
        %893 = vmatpush1.msra.mxu0 0.0
        %894 = vmatprep.subr.mxu0 0.0
        %895 = vmatpush1.msra.mxu0 0.0
        %896 = vmatprep.subr.mxu0 0.0
        %897 = vmatpush1.msra.mxu0 0.0
        %898 = vmatprep.subr.mxu0 0.0
        %899 = vmatpush1.msra.mxu0 0.0
        %900 = vmatprep.subr.mxu0 0.0
        %901 = vmatpush1.msra.mxu0 0.0
        %902 = vmatprep.subr.mxu0 0.0
        %903 = vmatpush1.msra.mxu0 0.0
        %904 = vmatprep.subr.mxu0 0.0
        %905 = vmatpush1.msra.mxu0 0.0
        %906 = vmatprep.subr.mxu0 0.0
        %907 = vmatpush1.msra.mxu0 0.0
        %908 = vmatprep.subr.mxu0 0.0
        %909 = vmatpush1.msra.mxu0 0.0
        %910 = vmatprep.mubr.f32.mxu0 0.0
        %911 = vmatmul.mubr.f32.gmra.mrb[0].mxu0 %v841
        %v912 = vpop.f32.mrb[0].mxu0
        %v913 = vadd.f32 0.0, %v912
        %v914 = vpop.f32.mrb[0].mxu0
        %915 = vmatprep.mubr.f32.mxu0 0.0
        %916 = vmatmul.mubr.f32.gmra.mrb[0].mxu0 %v844
        %v917 = vpop.f32.mrb[0].mxu0
        %v918 = vadd.f32 0.0, %v917
        %v919 = vpop.f32.mrb[0].mxu0
        %920 = vdwg.mxu0
        %v921 = vld [vmem:[%s6 + $0x108] sm:$0xff]
        %v922 = vld [vmem:[%s6 + $0x110] sm:$0xff]
        %v923 = vld [vmem:[%s6 + $0x118] sm:$0xff]
        %v924 = vld [vmem:[%s6 + $0x120] sm:$0xff]
        %927 = vrot.lane.b32.xlu0 %v913, 96
        %v928 = vpop.permute.xlu0 %927
        %929 = vrot.lane.b32.xlu0 %v918, 96
        %v930 = vpop.permute.xlu0 %929
        %vm931 = vcmask 64512
        %v932 = vsel %vm931, %v913, 0
        %v934 = vsel %vm931, %v918, 0
        %v936 = vsel %vm931, %v928, 0
        %v938 = vsel %vm931, %v930, 0
        %940 = vmatprep.subr.mxu0 0.0
        %941 = vmatpush1.xpose.msra.mxu0 %v936
        %942 = vmatprep.subr.mxu0 0.0
        %943 = vmatpush1.xpose.msra.mxu0 %v938
        %944 = vmatprep.subr.mxu0 0.0
        %945 = vmatpush1.xpose.msra.mxu0 0.0
        %946 = vmatprep.subr.mxu0 0.0
        %947 = vmatpush1.xpose.msra.mxu0 0.0
        %948 = vmatprep.subr.mxu0 0.0
        %949 = vmatpush1.xpose.msra.mxu0 0.0
        %950 = vmatprep.subr.mxu0 0.0
        %951 = vmatpush1.xpose.msra.mxu0 0.0
        %952 = vmatprep.subr.mxu0 0.0
        %953 = vmatpush1.xpose.msra.mxu0 0.0
        %954 = vmatprep.subr.mxu0 0.0
        %955 = vmatpush1.xpose.msra.mxu0 0.0
        %956 = vmatprep.subr.mxu0 0.0
        %957 = vmatpush1.xpose.msra.mxu0 0.0
        %958 = vmatprep.subr.mxu0 0.0
        %959 = vmatpush1.xpose.msra.mxu0 0.0
        %960 = vmatprep.subr.mxu0 0.0
        %961 = vmatpush1.xpose.msra.mxu0 0.0
        %962 = vmatprep.subr.mxu0 0.0
        %963 = vmatpush1.xpose.msra.mxu0 0.0
        %964 = vmatprep.subr.mxu0 0.0
        %965 = vmatpush1.xpose.msra.mxu0 0.0
        %966 = vmatprep.subr.mxu0 0.0
        %967 = vmatpush1.xpose.msra.mxu0 0.0
        %968 = vmatprep.subr.mxu0 0.0
        %969 = vmatpush1.xpose.msra.mxu0 0.0
        %970 = vmatprep.subr.mxu0 0.0
        %971 = vmatpush1.xpose.msra.mxu0 0.0
        %972 = vmatprep.subr.mxu0 0.0
        %973 = vmatpush1.xpose.msra.mxu0 0.0
        %974 = vmatprep.subr.mxu0 0.0
        %975 = vmatpush1.xpose.msra.mxu0 0.0
        %976 = vmatprep.subr.mxu0 0.0
        %977 = vmatpush1.xpose.msra.mxu0 0.0
        %978 = vmatprep.subr.mxu0 0.0
        %979 = vmatpush1.xpose.msra.mxu0 0.0
        %980 = vmatprep.subr.mxu0 0.0
        %981 = vmatpush1.xpose.msra.mxu0 0.0
        %982 = vmatprep.subr.mxu0 0.0
        %983 = vmatpush1.xpose.msra.mxu0 0.0
        %984 = vmatprep.subr.mxu0 0.0
        %985 = vmatpush1.xpose.msra.mxu0 0.0
        %986 = vmatprep.subr.mxu0 0.0
        %987 = vmatpush1.xpose.msra.mxu0 0.0
        %988 = vmatprep.subr.mxu0 0.0
        %989 = vmatpush1.xpose.msra.mxu0 0.0
        %990 = vmatprep.subr.mxu0 0.0
        %991 = vmatpush1.xpose.msra.mxu0 0.0
        %992 = vmatprep.subr.mxu0 0.0
        %993 = vmatpush1.xpose.msra.mxu0 0.0
        %994 = vmatprep.subr.mxu0 0.0
        %995 = vmatpush1.xpose.msra.mxu0 0.0
        %996 = vmatprep.subr.mxu0 0.0
        %997 = vmatpush1.xpose.msra.mxu0 0.0
        %998 = vmatprep.subr.mxu0 0.0
        %999 = vmatpush1.xpose.msra.mxu0 0.0
        %1000 = vmatprep.subr.mxu0 0.0
        %1001 = vmatpush1.xpose.msra.mxu0 0.0
        %1002 = vmatprep.subr.mxu0 0.0
        %1003 = vmatpush1.xpose.msra.mxu0 0.0
        %1004 = vmatprep.mubr.f32.mxu0 0.0
        %1005 = vmatmul.mubr.f32.gmra.mrb[0].mxu0 %v932
        %v1006 = vpop.f32.mrb[0].mxu0
        %v1007 = vadd.f32 0.0, %v1006
        %v1008 = vpop.f32.mrb[0].mxu0
        %1009 = vmatprep.mubr.f32.mxu0 0.0
        %1010 = vmatmul.mubr.f32.gmra.mrb[0].mxu0 %v934
        %v1011 = vpop.f32.mrb[0].mxu0
        %v1012 = vadd.f32 0.0, %v1011
        %v1013 = vpop.f32.mrb[0].mxu0
        %1014 = vdwg.mxu0
        %v1015 = vmul.f32 %v1007, 0.35355338
        %v1016 = vmul.f32 %v1012, 0.35355338
        %v1017 = vadd.f32 %v1015, %v802
        %v1018 = vadd.f32 %v1016, %v803
        %vm1019 = vcmask 130048
        %v1020 = vsel %vm1019, %v1017, -inf
        %1021 = vmax.xlane.f32.xlu0 %v1020
        %v1022 = vpop.xlane.xlu0 %1021
        %v1023 = vsel %vm1019, %v1018, -inf
        %1024 = vmax.xlane.f32.xlu0 %v1023
        %v1025 = vpop.xlane.xlu0 %1024
        %v1026 = vsub.f32 %v1017, %v1022
        %v1027 = vsub.f32 %v1018, %v1025
        %v1028 = vmul.f32 %v1026, 1.442695
        %v1029 = vpow.pop %v1028
        %v1030 = vmul.f32 %v1027, 1.442695
        %v1031 = vpow.pop %v1030
        %v1032 = vsel %vm1019, %v1029, 0.0
        %1033 = vadd.xlane.f32.xlu0 %v1032
        %v1034 = vpop.xlane.xlu0 %1033
        %v1035 = vsel %vm1019, %v1031, 0.0
        %1036 = vadd.xlane.f32.xlu0 %v1035
        %v1037 = vpop.xlane.xlu0 %1036
        %v1038 = vrcp.pop %v1034
        %v1039 = vrcp.pop %v1037
        %v1040 = vmul.f32 %v1029, %v1038
        %v1041 = vmul.f32 %v1031, %v1039
        %1042 = vrot.lane.b32.xlu0 %v913, 64
        %v1043 = vpop.permute.xlu0 %1042
        %1044 = vrot.lane.b32.xlu0 %v918, 64
        %v1045 = vpop.permute.xlu0 %1044
        %v1049 = vsel %vm1019, %v1040, 0
        %v1052 = vsel %vm1019, %v1041, 0
        %1054 = vmatprep.subr.mxu0 0.0
        %1055 = vmatpush1.msra.mxu0 %v1043
        %1056 = vmatprep.subr.mxu0 0.0
        %1057 = vmatpush1.msra.mxu0 %v1045
        %1058 = vmatprep.subr.mxu0 0.0
        %1059 = vmatpush1.msra.mxu0 0.0
        %1060 = vmatprep.subr.mxu0 0.0
        %1061 = vmatpush1.msra.mxu0 0.0
        %1062 = vmatprep.subr.mxu0 0.0
        %1063 = vmatpush1.msra.mxu0 0.0
        %1064 = vmatprep.subr.mxu0 0.0
        %1065 = vmatpush1.msra.mxu0 0.0
        %1066 = vmatprep.subr.mxu0 0.0
        %1067 = vmatpush1.msra.mxu0 0.0
        %1068 = vmatprep.subr.mxu0 0.0
        %1069 = vmatpush1.msra.mxu0 0.0
        %1070 = vmatprep.subr.mxu0 0.0
        %1071 = vmatpush1.msra.mxu0 0.0
        %1072 = vmatprep.subr.mxu0 0.0
        %1073 = vmatpush1.msra.mxu0 0.0
        %1074 = vmatprep.subr.mxu0 0.0
        %1075 = vmatpush1.msra.mxu0 0.0
        %1076 = vmatprep.subr.mxu0 0.0
        %1077 = vmatpush1.msra.mxu0 0.0
        %1078 = vmatprep.subr.mxu0 0.0
        %1079 = vmatpush1.msra.mxu0 0.0
        %1080 = vmatprep.subr.mxu0 0.0
        %1081 = vmatpush1.msra.mxu0 0.0
        %1082 = vmatprep.subr.mxu0 0.0
        %1083 = vmatpush1.msra.mxu0 0.0
        %1084 = vmatprep.subr.mxu0 0.0
        %1085 = vmatpush1.msra.mxu0 0.0
        %1086 = vmatprep.subr.mxu0 0.0
        %1087 = vmatpush1.msra.mxu0 0.0
        %1088 = vmatprep.subr.mxu0 0.0
        %1089 = vmatpush1.msra.mxu0 0.0
        %1090 = vmatprep.subr.mxu0 0.0
        %1091 = vmatpush1.msra.mxu0 0.0
        %1092 = vmatprep.subr.mxu0 0.0
        %1093 = vmatpush1.msra.mxu0 0.0
        %1094 = vmatprep.subr.mxu0 0.0
        %1095 = vmatpush1.msra.mxu0 0.0
        %1096 = vmatprep.subr.mxu0 0.0
        %1097 = vmatpush1.msra.mxu0 0.0
        %1098 = vmatprep.subr.mxu0 0.0
        %1099 = vmatpush1.msra.mxu0 0.0
        %1100 = vmatprep.subr.mxu0 0.0
        %1101 = vmatpush1.msra.mxu0 0.0
        %1102 = vmatprep.subr.mxu0 0.0
        %1103 = vmatpush1.msra.mxu0 0.0
        %1104 = vmatprep.subr.mxu0 0.0
        %1105 = vmatpush1.msra.mxu0 0.0
        %1106 = vmatprep.subr.mxu0 0.0
        %1107 = vmatpush1.msra.mxu0 0.0
        %1108 = vmatprep.subr.mxu0 0.0
        %1109 = vmatpush1.msra.mxu0 0.0
        %1110 = vmatprep.subr.mxu0 0.0
        %1111 = vmatpush1.msra.mxu0 0.0
        %1112 = vmatprep.subr.mxu0 0.0
        %1113 = vmatpush1.msra.mxu0 0.0
        %1114 = vmatprep.subr.mxu0 0.0
        %1115 = vmatpush1.msra.mxu0 0.0
        %1116 = vmatprep.subr.mxu0 0.0
        %1117 = vmatpush1.msra.mxu0 0.0
        %1118 = vmatprep.mubr.f32.mxu0 0.0
        %1119 = vmatmul.mubr.f32.gmra.mrb[0].mxu0 %v1049
        %v1120 = vpop.f32.mrb[0].mxu0
        %v1121 = vadd.f32 0.0, %v1120
        %v1122 = vpop.f32.mrb[0].mxu0
        %1123 = vmatprep.mubr.f32.mxu0 0.0
        %1124 = vmatmul.mubr.f32.gmra.mrb[0].mxu0 %v1052
        %v1125 = vpop.f32.mrb[0].mxu0
        %v1126 = vadd.f32 0.0, %v1125
        %v1127 = vpop.f32.mrb[0].mxu0
        %1128 = vdwg.mxu0
        %1129 = vrot.lane.b32.xlu0 %v913, 120
        %v1130 = vpop.permute.xlu0 %1129
        %1131 = vrot.lane.b32.xlu0 %v918, 120
        %v1132 = vpop.permute.xlu0 %1131
        %1133 = vrot.lane.b32.xlu0 %v913, 88
        %v1134 = vpop.permute.xlu0 %1133
        %1135 = vrot.lane.b32.xlu0 %v918, 88
        %v1136 = vpop.permute.xlu0 %1135
        %v1137 = vsel %vm931, %v1130, 0
        %v1139 = vsel %vm931, %v1132, 0
        %v1141 = vsel %vm931, %v1134, 0
        %v1143 = vsel %vm931, %v1136, 0
        %1145 = vmatprep.subr.mxu0 0.0
        %1146 = vmatpush1.xpose.msra.mxu0 %v1141
        %1147 = vmatprep.subr.mxu0 0.0
        %1148 = vmatpush1.xpose.msra.mxu0 %v1143
        %1149 = vmatprep.subr.mxu0 0.0
        %1150 = vmatpush1.xpose.msra.mxu0 0.0
        %1151 = vmatprep.subr.mxu0 0.0
        %1152 = vmatpush1.xpose.msra.mxu0 0.0
        %1153 = vmatprep.subr.mxu0 0.0
        %1154 = vmatpush1.xpose.msra.mxu0 0.0
        %1155 = vmatprep.subr.mxu0 0.0
        %1156 = vmatpush1.xpose.msra.mxu0 0.0
        %1157 = vmatprep.subr.mxu0 0.0
        %1158 = vmatpush1.xpose.msra.mxu0 0.0
        %1159 = vmatprep.subr.mxu0 0.0
        %1160 = vmatpush1.xpose.msra.mxu0 0.0
        %1161 = vmatprep.subr.mxu0 0.0
        %1162 = vmatpush1.xpose.msra.mxu0 0.0
        %1163 = vmatprep.subr.mxu0 0.0
        %1164 = vmatpush1.xpose.msra.mxu0 0.0
        %1165 = vmatprep.subr.mxu0 0.0
        %1166 = vmatpush1.xpose.msra.mxu0 0.0
        %1167 = vmatprep.subr.mxu0 0.0
        %1168 = vmatpush1.xpose.msra.mxu0 0.0
        %1169 = vmatprep.subr.mxu0 0.0
        %1170 = vmatpush1.xpose.msra.mxu0 0.0
        %1171 = vmatprep.subr.mxu0 0.0
        %1172 = vmatpush1.xpose.msra.mxu0 0.0
        %1173 = vmatprep.subr.mxu0 0.0
        %1174 = vmatpush1.xpose.msra.mxu0 0.0
        %1175 = vmatprep.subr.mxu0 0.0
        %1176 = vmatpush1.xpose.msra.mxu0 0.0
        %1177 = vmatprep.subr.mxu0 0.0
        %1178 = vmatpush1.xpose.msra.mxu0 0.0
        %1179 = vmatprep.subr.mxu0 0.0
        %1180 = vmatpush1.xpose.msra.mxu0 0.0
        %1181 = vmatprep.subr.mxu0 0.0
        %1182 = vmatpush1.xpose.msra.mxu0 0.0
        %1183 = vmatprep.subr.mxu0 0.0
        %1184 = vmatpush1.xpose.msra.mxu0 0.0
        %1185 = vmatprep.subr.mxu0 0.0
        %1186 = vmatpush1.xpose.msra.mxu0 0.0
        %1187 = vmatprep.subr.mxu0 0.0
        %1188 = vmatpush1.xpose.msra.mxu0 0.0
        %1189 = vmatprep.subr.mxu0 0.0
        %1190 = vmatpush1.xpose.msra.mxu0 0.0
        %1191 = vmatprep.subr.mxu0 0.0
        %1192 = vmatpush1.xpose.msra.mxu0 0.0
        %1193 = vmatprep.subr.mxu0 0.0
        %1194 = vmatpush1.xpose.msra.mxu0 0.0
        %1195 = vmatprep.subr.mxu0 0.0
        %1196 = vmatpush1.xpose.msra.mxu0 0.0
        %1197 = vmatprep.subr.mxu0 0.0
        %1198 = vmatpush1.xpose.msra.mxu0 0.0
        %1199 = vmatprep.subr.mxu0 0.0
        %1200 = vmatpush1.xpose.msra.mxu0 0.0
        %1201 = vmatprep.subr.mxu0 0.0
        %1202 = vmatpush1.xpose.msra.mxu0 0.0
        %1203 = vmatprep.subr.mxu0 0.0
        %1204 = vmatpush1.xpose.msra.mxu0 0.0
        %1205 = vmatprep.subr.mxu0 0.0
        %1206 = vmatpush1.xpose.msra.mxu0 0.0
        %1207 = vmatprep.subr.mxu0 0.0
        %1208 = vmatpush1.xpose.msra.mxu0 0.0
        %1209 = vmatprep.mubr.f32.mxu0 0.0
        %1210 = vmatmul.mubr.f32.gmra.mrb[0].mxu0 %v1137
        %v1211 = vpop.f32.mrb[0].mxu0
        %v1212 = vadd.f32 0.0, %v1211
        %v1213 = vpop.f32.mrb[0].mxu0
        %1214 = vmatprep.mubr.f32.mxu0 0.0
        %1215 = vmatmul.mubr.f32.gmra.mrb[0].mxu0 %v1139
        %v1216 = vpop.f32.mrb[0].mxu0
        %v1217 = vadd.f32 0.0, %v1216
        %v1218 = vpop.f32.mrb[0].mxu0
        %1219 = vdwg.mxu0
        %v1220 = vmul.f32 %v1212, 0.35355338
        %v1221 = vmul.f32 %v1217, 0.35355338
        %v1222 = vadd.f32 %v1220, %v802
        %v1223 = vadd.f32 %v1221, %v803
        %v1224 = vsel %vm1019, %v1222, -inf
        %1225 = vmax.xlane.f32.xlu0 %v1224
        %v1226 = vpop.xlane.xlu0 %1225
        %v1227 = vsel %vm1019, %v1223, -inf
        %1228 = vmax.xlane.f32.xlu0 %v1227
        %v1229 = vpop.xlane.xlu0 %1228
        %v1230 = vsub.f32 %v1222, %v1226
        %v1231 = vsub.f32 %v1223, %v1229
        %v1232 = vmul.f32 %v1230, 1.442695
        %v1233 = vpow.pop %v1232
        %v1234 = vmul.f32 %v1231, 1.442695
        %v1235 = vpow.pop %v1234
        %v1236 = vsel %vm1019, %v1233, 0.0
        %1237 = vadd.xlane.f32.xlu0 %v1236
        %v1238 = vpop.xlane.xlu0 %1237
        %v1239 = vsel %vm1019, %v1235, 0.0
        %1240 = vadd.xlane.f32.xlu0 %v1239
        %v1241 = vpop.xlane.xlu0 %1240
        %v1242 = vrcp.pop %v1238
        %v1243 = vrcp.pop %v1241
        %v1244 = vmul.f32 %v1233, %v1242
        %v1245 = vmul.f32 %v1235, %v1243
        %1246 = vrot.lane.b32.xlu0 %v913, 56
        %v1247 = vpop.permute.xlu0 %1246
        %1248 = vrot.lane.b32.xlu0 %v918, 56
        %v1249 = vpop.permute.xlu0 %1248
        %v1253 = vsel %vm1019, %v1244, 0
        %v1256 = vsel %vm1019, %v1245, 0
        %1258 = vmatprep.subr.mxu0 0.0
        %1259 = vmatpush1.msra.mxu0 %v1247
        %1260 = vmatprep.subr.mxu0 0.0
        %1261 = vmatpush1.msra.mxu0 %v1249
        %1262 = vmatprep.subr.mxu0 0.0
        %1263 = vmatpush1.msra.mxu0 0.0
        %1264 = vmatprep.subr.mxu0 0.0
        %1265 = vmatpush1.msra.mxu0 0.0
        %1266 = vmatprep.subr.mxu0 0.0
        %1267 = vmatpush1.msra.mxu0 0.0
        %1268 = vmatprep.subr.mxu0 0.0
        %1269 = vmatpush1.msra.mxu0 0.0
        %1270 = vmatprep.subr.mxu0 0.0
        %1271 = vmatpush1.msra.mxu0 0.0
        %1272 = vmatprep.subr.mxu0 0.0
        %1273 = vmatpush1.msra.mxu0 0.0
        %1274 = vmatprep.subr.mxu0 0.0
        %1275 = vmatpush1.msra.mxu0 0.0
        %1276 = vmatprep.subr.mxu0 0.0
        %1277 = vmatpush1.msra.mxu0 0.0
        %1278 = vmatprep.subr.mxu0 0.0
        %1279 = vmatpush1.msra.mxu0 0.0
        %1280 = vmatprep.subr.mxu0 0.0
        %1281 = vmatpush1.msra.mxu0 0.0
        %1282 = vmatprep.subr.mxu0 0.0
        %1283 = vmatpush1.msra.mxu0 0.0
        %1284 = vmatprep.subr.mxu0 0.0
        %1285 = vmatpush1.msra.mxu0 0.0
        %1286 = vmatprep.subr.mxu0 0.0
        %1287 = vmatpush1.msra.mxu0 0.0
        %1288 = vmatprep.subr.mxu0 0.0
        %1289 = vmatpush1.msra.mxu0 0.0
        %1290 = vmatprep.subr.mxu0 0.0
        %1291 = vmatpush1.msra.mxu0 0.0
        %1292 = vmatprep.subr.mxu0 0.0
        %1293 = vmatpush1.msra.mxu0 0.0
        %1294 = vmatprep.subr.mxu0 0.0
        %1295 = vmatpush1.msra.mxu0 0.0
        %1296 = vmatprep.subr.mxu0 0.0
        %1297 = vmatpush1.msra.mxu0 0.0
        %1298 = vmatprep.subr.mxu0 0.0
        %1299 = vmatpush1.msra.mxu0 0.0
        %1300 = vmatprep.subr.mxu0 0.0
        %1301 = vmatpush1.msra.mxu0 0.0
        %1302 = vmatprep.subr.mxu0 0.0
        %1303 = vmatpush1.msra.mxu0 0.0
        %1304 = vmatprep.subr.mxu0 0.0
        %1305 = vmatpush1.msra.mxu0 0.0
        %1306 = vmatprep.subr.mxu0 0.0
        %1307 = vmatpush1.msra.mxu0 0.0
        %1308 = vmatprep.subr.mxu0 0.0
        %1309 = vmatpush1.msra.mxu0 0.0
        %1310 = vmatprep.subr.mxu0 0.0
        %1311 = vmatpush1.msra.mxu0 0.0
        %1312 = vmatprep.subr.mxu0 0.0
        %1313 = vmatpush1.msra.mxu0 0.0
        %1314 = vmatprep.subr.mxu0 0.0
        %1315 = vmatpush1.msra.mxu0 0.0
        %1316 = vmatprep.subr.mxu0 0.0
        %1317 = vmatpush1.msra.mxu0 0.0
        %1318 = vmatprep.subr.mxu0 0.0
        %1319 = vmatpush1.msra.mxu0 0.0
        %1320 = vmatprep.subr.mxu0 0.0
        %1321 = vmatpush1.msra.mxu0 0.0
        %1322 = vmatprep.mubr.f32.mxu0 0.0
        %1323 = vmatmul.mubr.f32.gmra.mrb[0].mxu0 %v1253
        %v1324 = vpop.f32.mrb[0].mxu0
        %v1325 = vadd.f32 0.0, %v1324
        %v1326 = vpop.f32.mrb[0].mxu0
        %1327 = vmatprep.mubr.f32.mxu0 0.0
        %1328 = vmatmul.mubr.f32.gmra.mrb[0].mxu0 %v1256
        %v1329 = vpop.f32.mrb[0].mxu0
        %v1330 = vadd.f32 0.0, %v1329
        %v1331 = vpop.f32.mrb[0].mxu0
        %1332 = vdwg.mxu0
        %v1334 = vsel %vm931, %v1325, 0
        %v1337 = vsel %vm931, %v1330, 0
        %1339 = vmatprep.subr.mxu0 0.0
        %1340 = vmatpush1.msra.mxu0 %v922
        %1341 = vmatprep.subr.mxu0 0.0
        %1342 = vmatpush1.msra.mxu0 0.0
        %1343 = vmatprep.subr.mxu0 0.0
        %1344 = vmatpush1.msra.mxu0 0.0
        %1345 = vmatprep.subr.mxu0 0.0
        %1346 = vmatpush1.msra.mxu0 0.0
        %1347 = vmatprep.subr.mxu0 0.0
        %1348 = vmatpush1.msra.mxu0 0.0
        %1349 = vmatprep.subr.mxu0 0.0
        %1350 = vmatpush1.msra.mxu0 0.0
        %1351 = vmatprep.subr.mxu0 0.0
        %1352 = vmatpush1.msra.mxu0 0.0
        %1353 = vmatprep.subr.mxu0 0.0
        %1354 = vmatpush1.msra.mxu0 0.0
        %1355 = vmatprep.subr.mxu0 0.0
        %1356 = vmatpush1.msra.mxu0 0.0
        %1357 = vmatprep.subr.mxu0 0.0
        %1358 = vmatpush1.msra.mxu0 0.0
        %1359 = vmatprep.subr.mxu0 0.0
        %1360 = vmatpush1.msra.mxu0 0.0
        %1361 = vmatprep.subr.mxu0 0.0
        %1362 = vmatpush1.msra.mxu0 0.0
        %1363 = vmatprep.subr.mxu0 0.0
        %1364 = vmatpush1.msra.mxu0 0.0
        %1365 = vmatprep.subr.mxu0 0.0
        %1366 = vmatpush1.msra.mxu0 0.0
        %1367 = vmatprep.subr.mxu0 0.0
        %1368 = vmatpush1.msra.mxu0 0.0
        %1369 = vmatprep.subr.mxu0 0.0
        %1370 = vmatpush1.msra.mxu0 0.0
        %1371 = vmatprep.subr.mxu0 0.0
        %1372 = vmatpush1.msra.mxu0 0.0
        %1373 = vmatprep.subr.mxu0 0.0
        %1374 = vmatpush1.msra.mxu0 0.0
        %1375 = vmatprep.subr.mxu0 0.0
        %1376 = vmatpush1.msra.mxu0 0.0
        %1377 = vmatprep.subr.mxu0 0.0
        %1378 = vmatpush1.msra.mxu0 0.0
        %1379 = vmatprep.subr.mxu0 0.0
        %1380 = vmatpush1.msra.mxu0 0.0
        %1381 = vmatprep.subr.mxu0 0.0
        %1382 = vmatpush1.msra.mxu0 0.0
        %1383 = vmatprep.subr.mxu0 0.0
        %1384 = vmatpush1.msra.mxu0 0.0
        %1385 = vmatprep.subr.mxu0 0.0
        %1386 = vmatpush1.msra.mxu0 0.0
        %1387 = vmatprep.subr.mxu0 0.0
        %1388 = vmatpush1.msra.mxu0 0.0
        %1389 = vmatprep.subr.mxu0 0.0
        %1390 = vmatpush1.msra.mxu0 0.0
        %1391 = vmatprep.subr.mxu0 0.0
        %1392 = vmatpush1.msra.mxu0 0.0
        %1393 = vmatprep.subr.mxu0 0.0
        %1394 = vmatpush1.msra.mxu0 0.0
        %1395 = vmatprep.subr.mxu0 0.0
        %1396 = vmatpush1.msra.mxu0 0.0
        %1397 = vmatprep.subr.mxu0 0.0
        %1398 = vmatpush1.msra.mxu0 0.0
        %1399 = vmatprep.subr.mxu0 0.0
        %1400 = vmatpush1.msra.mxu0 0.0
        %1401 = vmatprep.subr.mxu0 0.0
        %1402 = vmatpush1.msra.mxu0 0.0
        %1403 = vmatprep.mubr.f32.mxu0 0.0
        %1404 = vmatmul.mubr.f32.gmra.mrb[0].mxu0 %v1334
        %v1405 = vpop.f32.mrb[0].mxu0
        %v1406 = vadd.f32 0.0, %v1405
        %v1407 = vpop.f32.mrb[0].mxu0
        %1408 = vmatprep.mubr.f32.mxu0 0.0
        %1409 = vmatmul.mubr.f32.gmra.mrb[0].mxu0 %v1337
        %v1410 = vpop.f32.mrb[0].mxu0
        %v1411 = vadd.f32 0.0, %v1410
        %v1412 = vpop.f32.mrb[0].mxu0
        %1413 = vdwg.mxu0
        %v1415 = vsel %vm931, %v1121, 0
        %v1418 = vsel %vm931, %v1126, 0
        %1420 = vmatprep.subr.mxu0 0.0
        %1421 = vmatpush1.msra.mxu0 %v921
        %1422 = vmatprep.subr.mxu0 0.0
        %1423 = vmatpush1.msra.mxu0 0.0
        %1424 = vmatprep.subr.mxu0 0.0
        %1425 = vmatpush1.msra.mxu0 0.0
        %1426 = vmatprep.subr.mxu0 0.0
        %1427 = vmatpush1.msra.mxu0 0.0
        %1428 = vmatprep.subr.mxu0 0.0
        %1429 = vmatpush1.msra.mxu0 0.0
        %1430 = vmatprep.subr.mxu0 0.0
        %1431 = vmatpush1.msra.mxu0 0.0
        %1432 = vmatprep.subr.mxu0 0.0
        %1433 = vmatpush1.msra.mxu0 0.0
        %1434 = vmatprep.subr.mxu0 0.0
        %1435 = vmatpush1.msra.mxu0 0.0
        %1436 = vmatprep.subr.mxu0 0.0
        %1437 = vmatpush1.msra.mxu0 0.0
        %1438 = vmatprep.subr.mxu0 0.0
        %1439 = vmatpush1.msra.mxu0 0.0
        %1440 = vmatprep.subr.mxu0 0.0
        %1441 = vmatpush1.msra.mxu0 0.0
        %1442 = vmatprep.subr.mxu0 0.0
        %1443 = vmatpush1.msra.mxu0 0.0
        %1444 = vmatprep.subr.mxu0 0.0
        %1445 = vmatpush1.msra.mxu0 0.0
        %1446 = vmatprep.subr.mxu0 0.0
        %1447 = vmatpush1.msra.mxu0 0.0
        %1448 = vmatprep.subr.mxu0 0.0
        %1449 = vmatpush1.msra.mxu0 0.0
        %1450 = vmatprep.subr.mxu0 0.0
        %1451 = vmatpush1.msra.mxu0 0.0
        %1452 = vmatprep.subr.mxu0 0.0
        %1453 = vmatpush1.msra.mxu0 0.0
        %1454 = vmatprep.subr.mxu0 0.0
        %1455 = vmatpush1.msra.mxu0 0.0
        %1456 = vmatprep.subr.mxu0 0.0
        %1457 = vmatpush1.msra.mxu0 0.0
        %1458 = vmatprep.subr.mxu0 0.0
        %1459 = vmatpush1.msra.mxu0 0.0
        %1460 = vmatprep.subr.mxu0 0.0
        %1461 = vmatpush1.msra.mxu0 0.0
        %1462 = vmatprep.subr.mxu0 0.0
        %1463 = vmatpush1.msra.mxu0 0.0
        %1464 = vmatprep.subr.mxu0 0.0
        %1465 = vmatpush1.msra.mxu0 0.0
        %1466 = vmatprep.subr.mxu0 0.0
        %1467 = vmatpush1.msra.mxu0 0.0
        %1468 = vmatprep.subr.mxu0 0.0
        %1469 = vmatpush1.msra.mxu0 0.0
        %1470 = vmatprep.subr.mxu0 0.0
        %1471 = vmatpush1.msra.mxu0 0.0
        %1472 = vmatprep.subr.mxu0 0.0
        %1473 = vmatpush1.msra.mxu0 0.0
        %1474 = vmatprep.subr.mxu0 0.0
        %1475 = vmatpush1.msra.mxu0 0.0
        %1476 = vmatprep.subr.mxu0 0.0
        %1477 = vmatpush1.msra.mxu0 0.0
        %1478 = vmatprep.subr.mxu0 0.0
        %1479 = vmatpush1.msra.mxu0 0.0
        %1480 = vmatprep.subr.mxu0 0.0
        %1481 = vmatpush1.msra.mxu0 0.0
        %1482 = vmatprep.subr.mxu0 0.0
        %1483 = vmatpush1.msra.mxu0 0.0
        %1484 = vmatprep.mubr.f32.mxu0 0.0
        %1485 = vmatmul.mubr.f32.gmra.mrb[0].mxu0 %v1415
        %v1486 = vpop.f32.mrb[0].mxu0
        %v1487 = vadd.f32 %v1406, %v1486
        %v1488 = vpop.f32.mrb[0].mxu0
        %1489 = vmatprep.mubr.f32.mxu0 0.0
        %1490 = vmatmul.mubr.f32.gmra.mrb[0].mxu0 %v1418
        %v1491 = vpop.f32.mrb[0].mxu0
        %v1492 = vadd.f32 %v1411, %v1491
        %v1493 = vpop.f32.mrb[0].mxu0
        %1494 = vdwg.mxu0
        %1495 = vrot.lane.b32.xlu0 %v913, 112
        %v1496 = vpop.permute.xlu0 %1495
        %1497 = vrot.lane.b32.xlu0 %v918, 112
        %v1498 = vpop.permute.xlu0 %1497
        %1499 = vrot.lane.b32.xlu0 %v913, 80
        %v1500 = vpop.permute.xlu0 %1499
        %1501 = vrot.lane.b32.xlu0 %v918, 80
        %v1502 = vpop.permute.xlu0 %1501
        %v1503 = vsel %vm931, %v1496, 0
        %v1505 = vsel %vm931, %v1498, 0
        %v1507 = vsel %vm931, %v1500, 0
        %v1509 = vsel %vm931, %v1502, 0
        %1511 = vmatprep.subr.mxu0 0.0
        %1512 = vmatpush1.xpose.msra.mxu0 %v1507
        %1513 = vmatprep.subr.mxu0 0.0
        %1514 = vmatpush1.xpose.msra.mxu0 %v1509
        %1515 = vmatprep.subr.mxu0 0.0
        %1516 = vmatpush1.xpose.msra.mxu0 0.0
        %1517 = vmatprep.subr.mxu0 0.0
        %1518 = vmatpush1.xpose.msra.mxu0 0.0
        %1519 = vmatprep.subr.mxu0 0.0
        %1520 = vmatpush1.xpose.msra.mxu0 0.0
        %1521 = vmatprep.subr.mxu0 0.0
        %1522 = vmatpush1.xpose.msra.mxu0 0.0
        %1523 = vmatprep.subr.mxu0 0.0
        %1524 = vmatpush1.xpose.msra.mxu0 0.0
        %1525 = vmatprep.subr.mxu0 0.0
        %1526 = vmatpush1.xpose.msra.mxu0 0.0
        %1527 = vmatprep.subr.mxu0 0.0
        %1528 = vmatpush1.xpose.msra.mxu0 0.0
        %1529 = vmatprep.subr.mxu0 0.0
        %1530 = vmatpush1.xpose.msra.mxu0 0.0
        %1531 = vmatprep.subr.mxu0 0.0
        %1532 = vmatpush1.xpose.msra.mxu0 0.0
        %1533 = vmatprep.subr.mxu0 0.0
        %1534 = vmatpush1.xpose.msra.mxu0 0.0
        %1535 = vmatprep.subr.mxu0 0.0
        %1536 = vmatpush1.xpose.msra.mxu0 0.0
        %1537 = vmatprep.subr.mxu0 0.0
        %1538 = vmatpush1.xpose.msra.mxu0 0.0
        %1539 = vmatprep.subr.mxu0 0.0
        %1540 = vmatpush1.xpose.msra.mxu0 0.0
        %1541 = vmatprep.subr.mxu0 0.0
        %1542 = vmatpush1.xpose.msra.mxu0 0.0
        %1543 = vmatprep.subr.mxu0 0.0
        %1544 = vmatpush1.xpose.msra.mxu0 0.0
        %1545 = vmatprep.subr.mxu0 0.0
        %1546 = vmatpush1.xpose.msra.mxu0 0.0
        %1547 = vmatprep.subr.mxu0 0.0
        %1548 = vmatpush1.xpose.msra.mxu0 0.0
        %1549 = vmatprep.subr.mxu0 0.0
        %1550 = vmatpush1.xpose.msra.mxu0 0.0
        %1551 = vmatprep.subr.mxu0 0.0
        %1552 = vmatpush1.xpose.msra.mxu0 0.0
        %1553 = vmatprep.subr.mxu0 0.0
        %1554 = vmatpush1.xpose.msra.mxu0 0.0
        %1555 = vmatprep.subr.mxu0 0.0
        %1556 = vmatpush1.xpose.msra.mxu0 0.0
        %1557 = vmatprep.subr.mxu0 0.0
        %1558 = vmatpush1.xpose.msra.mxu0 0.0
        %1559 = vmatprep.subr.mxu0 0.0
        %1560 = vmatpush1.xpose.msra.mxu0 0.0
        %1561 = vmatprep.subr.mxu0 0.0
        %1562 = vmatpush1.xpose.msra.mxu0 0.0
        %1563 = vmatprep.subr.mxu0 0.0
        %1564 = vmatpush1.xpose.msra.mxu0 0.0
        %1565 = vmatprep.subr.mxu0 0.0
        %1566 = vmatpush1.xpose.msra.mxu0 0.0
        %1567 = vmatprep.subr.mxu0 0.0
        %1568 = vmatpush1.xpose.msra.mxu0 0.0
        %1569 = vmatprep.subr.mxu0 0.0
        %1570 = vmatpush1.xpose.msra.mxu0 0.0
        %1571 = vmatprep.subr.mxu0 0.0
        %1572 = vmatpush1.xpose.msra.mxu0 0.0
        %1573 = vmatprep.subr.mxu0 0.0
        %1574 = vmatpush1.xpose.msra.mxu0 0.0
        %1575 = vmatprep.mubr.f32.mxu0 0.0
        %1576 = vmatmul.mubr.f32.gmra.mrb[0].mxu0 %v1503
        %v1577 = vpop.f32.mrb[0].mxu0
        %v1578 = vadd.f32 0.0, %v1577
        %v1579 = vpop.f32.mrb[0].mxu0
        %1580 = vmatprep.mubr.f32.mxu0 0.0
        %1581 = vmatmul.mubr.f32.gmra.mrb[0].mxu0 %v1505
        %v1582 = vpop.f32.mrb[0].mxu0
        %v1583 = vadd.f32 0.0, %v1582
        %v1584 = vpop.f32.mrb[0].mxu0
        %1585 = vdwg.mxu0
        %v1586 = vmul.f32 %v1578, 0.35355338
        %v1587 = vmul.f32 %v1583, 0.35355338
        %v1588 = vadd.f32 %v1586, %v802
        %v1589 = vadd.f32 %v1587, %v803
        %v1590 = vsel %vm1019, %v1588, -inf
        %1591 = vmax.xlane.f32.xlu0 %v1590
        %v1592 = vpop.xlane.xlu0 %1591
        %v1593 = vsel %vm1019, %v1589, -inf
        %1594 = vmax.xlane.f32.xlu0 %v1593
        %v1595 = vpop.xlane.xlu0 %1594
        %v1596 = vsub.f32 %v1588, %v1592
        %v1597 = vsub.f32 %v1589, %v1595
        %v1598 = vmul.f32 %v1596, 1.442695
        %v1599 = vpow.pop %v1598
        %v1600 = vmul.f32 %v1597, 1.442695
        %v1601 = vpow.pop %v1600
        %v1602 = vsel %vm1019, %v1599, 0.0
        %1603 = vadd.xlane.f32.xlu0 %v1602
        %v1604 = vpop.xlane.xlu0 %1603
        %v1605 = vsel %vm1019, %v1601, 0.0
        %1606 = vadd.xlane.f32.xlu0 %v1605
        %v1607 = vpop.xlane.xlu0 %1606
        %v1608 = vrcp.pop %v1604
        %v1609 = vrcp.pop %v1607
        %v1610 = vmul.f32 %v1599, %v1608
        %v1611 = vmul.f32 %v1601, %v1609
        %1612 = vrot.lane.b32.xlu0 %v913, 48
        %v1613 = vpop.permute.xlu0 %1612
        %1614 = vrot.lane.b32.xlu0 %v918, 48
        %v1615 = vpop.permute.xlu0 %1614
        %v1619 = vsel %vm1019, %v1610, 0
        %v1622 = vsel %vm1019, %v1611, 0
        %1624 = vmatprep.subr.mxu0 0.0
        %1625 = vmatpush1.msra.mxu0 %v1613
        %1626 = vmatprep.subr.mxu0 0.0
        %1627 = vmatpush1.msra.mxu0 %v1615
        %1628 = vmatprep.subr.mxu0 0.0
        %1629 = vmatpush1.msra.mxu0 0.0
        %1630 = vmatprep.subr.mxu0 0.0
        %1631 = vmatpush1.msra.mxu0 0.0
        %1632 = vmatprep.subr.mxu0 0.0
        %1633 = vmatpush1.msra.mxu0 0.0
        %1634 = vmatprep.subr.mxu0 0.0
        %1635 = vmatpush1.msra.mxu0 0.0
        %1636 = vmatprep.subr.mxu0 0.0
        %1637 = vmatpush1.msra.mxu0 0.0
        %1638 = vmatprep.subr.mxu0 0.0
        %1639 = vmatpush1.msra.mxu0 0.0
        %1640 = vmatprep.subr.mxu0 0.0
        %1641 = vmatpush1.msra.mxu0 0.0
        %1642 = vmatprep.subr.mxu0 0.0
        %1643 = vmatpush1.msra.mxu0 0.0
        %1644 = vmatprep.subr.mxu0 0.0
        %1645 = vmatpush1.msra.mxu0 0.0
        %1646 = vmatprep.subr.mxu0 0.0
        %1647 = vmatpush1.msra.mxu0 0.0
        %1648 = vmatprep.subr.mxu0 0.0
        %1649 = vmatpush1.msra.mxu0 0.0
        %1650 = vmatprep.subr.mxu0 0.0
        %1651 = vmatpush1.msra.mxu0 0.0
        %1652 = vmatprep.subr.mxu0 0.0
        %1653 = vmatpush1.msra.mxu0 0.0
        %1654 = vmatprep.subr.mxu0 0.0
        %1655 = vmatpush1.msra.mxu0 0.0
        %1656 = vmatprep.subr.mxu0 0.0
        %1657 = vmatpush1.msra.mxu0 0.0
        %1658 = vmatprep.subr.mxu0 0.0
        %1659 = vmatpush1.msra.mxu0 0.0
        %1660 = vmatprep.subr.mxu0 0.0
        %1661 = vmatpush1.msra.mxu0 0.0
        %1662 = vmatprep.subr.mxu0 0.0
        %1663 = vmatpush1.msra.mxu0 0.0
        %1664 = vmatprep.subr.mxu0 0.0
        %1665 = vmatpush1.msra.mxu0 0.0
        %1666 = vmatprep.subr.mxu0 0.0
        %1667 = vmatpush1.msra.mxu0 0.0
        %1668 = vmatprep.subr.mxu0 0.0
        %1669 = vmatpush1.msra.mxu0 0.0
        %1670 = vmatprep.subr.mxu0 0.0
        %1671 = vmatpush1.msra.mxu0 0.0
        %1672 = vmatprep.subr.mxu0 0.0
        %1673 = vmatpush1.msra.mxu0 0.0
        %1674 = vmatprep.subr.mxu0 0.0
        %1675 = vmatpush1.msra.mxu0 0.0
        %1676 = vmatprep.subr.mxu0 0.0
        %1677 = vmatpush1.msra.mxu0 0.0
        %1678 = vmatprep.subr.mxu0 0.0
        %1679 = vmatpush1.msra.mxu0 0.0
        %1680 = vmatprep.subr.mxu0 0.0
        %1681 = vmatpush1.msra.mxu0 0.0
        %1682 = vmatprep.subr.mxu0 0.0
        %1683 = vmatpush1.msra.mxu0 0.0
        %1684 = vmatprep.subr.mxu0 0.0
        %1685 = vmatpush1.msra.mxu0 0.0
        %1686 = vmatprep.subr.mxu0 0.0
        %1687 = vmatpush1.msra.mxu0 0.0
        %1688 = vmatprep.mubr.f32.mxu0 0.0
        %1689 = vmatmul.mubr.f32.gmra.mrb[0].mxu0 %v1619
        %v1690 = vpop.f32.mrb[0].mxu0
        %v1691 = vadd.f32 0.0, %v1690
        %v1692 = vpop.f32.mrb[0].mxu0
        %1693 = vmatprep.mubr.f32.mxu0 0.0
        %1694 = vmatmul.mubr.f32.gmra.mrb[0].mxu0 %v1622
        %v1695 = vpop.f32.mrb[0].mxu0
        %v1696 = vadd.f32 0.0, %v1695
        %v1697 = vpop.f32.mrb[0].mxu0
        %1698 = vdwg.mxu0
        %v1700 = vsel %vm931, %v1691, 0
        %v1703 = vsel %vm931, %v1696, 0
        %1705 = vmatprep.subr.mxu0 0.0
        %1706 = vmatpush1.msra.mxu0 %v923
        %1707 = vmatprep.subr.mxu0 0.0
        %1708 = vmatpush1.msra.mxu0 0.0
        %1709 = vmatprep.subr.mxu0 0.0
        %1710 = vmatpush1.msra.mxu0 0.0
        %1711 = vmatprep.subr.mxu0 0.0
        %1712 = vmatpush1.msra.mxu0 0.0
        %1713 = vmatprep.subr.mxu0 0.0
        %1714 = vmatpush1.msra.mxu0 0.0
        %1715 = vmatprep.subr.mxu0 0.0
        %1716 = vmatpush1.msra.mxu0 0.0
        %1717 = vmatprep.subr.mxu0 0.0
        %1718 = vmatpush1.msra.mxu0 0.0
        %1719 = vmatprep.subr.mxu0 0.0
        %1720 = vmatpush1.msra.mxu0 0.0
        %1721 = vmatprep.subr.mxu0 0.0
        %1722 = vmatpush1.msra.mxu0 0.0
        %1723 = vmatprep.subr.mxu0 0.0
        %1724 = vmatpush1.msra.mxu0 0.0
        %1725 = vmatprep.subr.mxu0 0.0
        %1726 = vmatpush1.msra.mxu0 0.0
        %1727 = vmatprep.subr.mxu0 0.0
        %1728 = vmatpush1.msra.mxu0 0.0
        %1729 = vmatprep.subr.mxu0 0.0
        %1730 = vmatpush1.msra.mxu0 0.0
        %1731 = vmatprep.subr.mxu0 0.0
        %1732 = vmatpush1.msra.mxu0 0.0
        %1733 = vmatprep.subr.mxu0 0.0
        %1734 = vmatpush1.msra.mxu0 0.0
        %1735 = vmatprep.subr.mxu0 0.0
        %1736 = vmatpush1.msra.mxu0 0.0
        %1737 = vmatprep.subr.mxu0 0.0
        %1738 = vmatpush1.msra.mxu0 0.0
        %1739 = vmatprep.subr.mxu0 0.0
        %1740 = vmatpush1.msra.mxu0 0.0
        %1741 = vmatprep.subr.mxu0 0.0
        %1742 = vmatpush1.msra.mxu0 0.0
        %1743 = vmatprep.subr.mxu0 0.0
        %1744 = vmatpush1.msra.mxu0 0.0
        %1745 = vmatprep.subr.mxu0 0.0
        %1746 = vmatpush1.msra.mxu0 0.0
        %1747 = vmatprep.subr.mxu0 0.0
        %1748 = vmatpush1.msra.mxu0 0.0
        %1749 = vmatprep.subr.mxu0 0.0
        %1750 = vmatpush1.msra.mxu0 0.0
        %1751 = vmatprep.subr.mxu0 0.0
        %1752 = vmatpush1.msra.mxu0 0.0
        %1753 = vmatprep.subr.mxu0 0.0
        %1754 = vmatpush1.msra.mxu0 0.0
        %1755 = vmatprep.subr.mxu0 0.0
        %1756 = vmatpush1.msra.mxu0 0.0
        %1757 = vmatprep.subr.mxu0 0.0
        %1758 = vmatpush1.msra.mxu0 0.0
        %1759 = vmatprep.subr.mxu0 0.0
        %1760 = vmatpush1.msra.mxu0 0.0
        %1761 = vmatprep.subr.mxu0 0.0
        %1762 = vmatpush1.msra.mxu0 0.0
        %1763 = vmatprep.subr.mxu0 0.0
        %1764 = vmatpush1.msra.mxu0 0.0
        %1765 = vmatprep.subr.mxu0 0.0
        %1766 = vmatpush1.msra.mxu0 0.0
        %1767 = vmatprep.subr.mxu0 0.0
        %1768 = vmatpush1.msra.mxu0 0.0
        %1769 = vmatprep.mubr.f32.mxu0 0.0
        %1770 = vmatmul.mubr.f32.gmra.mrb[0].mxu0 %v1700
        %v1771 = vpop.f32.mrb[0].mxu0
        %v1772 = vadd.f32 0.0, %v1771
        %v1773 = vpop.f32.mrb[0].mxu0
        %1774 = vmatprep.mubr.f32.mxu0 0.0
        %1775 = vmatmul.mubr.f32.gmra.mrb[0].mxu0 %v1703
        %v1776 = vpop.f32.mrb[0].mxu0
        %v1777 = vadd.f32 0.0, %v1776
        %v1778 = vpop.f32.mrb[0].mxu0
        %1779 = vdwg.mxu0
        %v1780 = vadd.f32 %v1487, %v1772
        %v1781 = vadd.f32 %v1492, %v1777
        %1782 = vrot.lane.b32.xlu0 %v913, 104
        %v1783 = vpop.permute.xlu0 %1782
        %1784 = vrot.lane.b32.xlu0 %v918, 104
        %v1785 = vpop.permute.xlu0 %1784
        %1786 = vrot.lane.b32.xlu0 %v913, 72
        %v1787 = vpop.permute.xlu0 %1786
        %1788 = vrot.lane.b32.xlu0 %v918, 72
        %v1789 = vpop.permute.xlu0 %1788
        %v1790 = vsel %vm931, %v1783, 0
        %v1792 = vsel %vm931, %v1785, 0
        %v1794 = vsel %vm931, %v1787, 0
        %v1796 = vsel %vm931, %v1789, 0
        %1798 = vmatprep.subr.mxu0 0.0
        %1799 = vmatpush1.xpose.msra.mxu0 %v1794
        %1800 = vmatprep.subr.mxu0 0.0
        %1801 = vmatpush1.xpose.msra.mxu0 %v1796
        %1802 = vmatprep.subr.mxu0 0.0
        %1803 = vmatpush1.xpose.msra.mxu0 0.0
        %1804 = vmatprep.subr.mxu0 0.0
        %1805 = vmatpush1.xpose.msra.mxu0 0.0
        %1806 = vmatprep.subr.mxu0 0.0
        %1807 = vmatpush1.xpose.msra.mxu0 0.0
        %1808 = vmatprep.subr.mxu0 0.0
        %1809 = vmatpush1.xpose.msra.mxu0 0.0
        %1810 = vmatprep.subr.mxu0 0.0
        %1811 = vmatpush1.xpose.msra.mxu0 0.0
        %1812 = vmatprep.subr.mxu0 0.0
        %1813 = vmatpush1.xpose.msra.mxu0 0.0
        %1814 = vmatprep.subr.mxu0 0.0
        %1815 = vmatpush1.xpose.msra.mxu0 0.0
        %1816 = vmatprep.subr.mxu0 0.0
        %1817 = vmatpush1.xpose.msra.mxu0 0.0
        %1818 = vmatprep.subr.mxu0 0.0
        %1819 = vmatpush1.xpose.msra.mxu0 0.0
        %1820 = vmatprep.subr.mxu0 0.0
        %1821 = vmatpush1.xpose.msra.mxu0 0.0
        %1822 = vmatprep.subr.mxu0 0.0
        %1823 = vmatpush1.xpose.msra.mxu0 0.0
        %1824 = vmatprep.subr.mxu0 0.0
        %1825 = vmatpush1.xpose.msra.mxu0 0.0
        %1826 = vmatprep.subr.mxu0 0.0
        %1827 = vmatpush1.xpose.msra.mxu0 0.0
        %1828 = vmatprep.subr.mxu0 0.0
        %1829 = vmatpush1.xpose.msra.mxu0 0.0
        %1830 = vmatprep.subr.mxu0 0.0
        %1831 = vmatpush1.xpose.msra.mxu0 0.0
        %1832 = vmatprep.subr.mxu0 0.0
        %1833 = vmatpush1.xpose.msra.mxu0 0.0
        %1834 = vmatprep.subr.mxu0 0.0
        %1835 = vmatpush1.xpose.msra.mxu0 0.0
        %1836 = vmatprep.subr.mxu0 0.0
        %1837 = vmatpush1.xpose.msra.mxu0 0.0
        %1838 = vmatprep.subr.mxu0 0.0
        %1839 = vmatpush1.xpose.msra.mxu0 0.0
        %1840 = vmatprep.subr.mxu0 0.0
        %1841 = vmatpush1.xpose.msra.mxu0 0.0
        %1842 = vmatprep.subr.mxu0 0.0
        %1843 = vmatpush1.xpose.msra.mxu0 0.0
        %1844 = vmatprep.subr.mxu0 0.0
        %1845 = vmatpush1.xpose.msra.mxu0 0.0
        %1846 = vmatprep.subr.mxu0 0.0
        %1847 = vmatpush1.xpose.msra.mxu0 0.0
        %1848 = vmatprep.subr.mxu0 0.0
        %1849 = vmatpush1.xpose.msra.mxu0 0.0
        %1850 = vmatprep.subr.mxu0 0.0
        %1851 = vmatpush1.xpose.msra.mxu0 0.0
        %1852 = vmatprep.subr.mxu0 0.0
        %1853 = vmatpush1.xpose.msra.mxu0 0.0
        %1854 = vmatprep.subr.mxu0 0.0
        %1855 = vmatpush1.xpose.msra.mxu0 0.0
        %1856 = vmatprep.subr.mxu0 0.0
        %1857 = vmatpush1.xpose.msra.mxu0 0.0
        %1858 = vmatprep.subr.mxu0 0.0
        %1859 = vmatpush1.xpose.msra.mxu0 0.0
        %1860 = vmatprep.subr.mxu0 0.0
        %1861 = vmatpush1.xpose.msra.mxu0 0.0
        %1862 = vmatprep.mubr.f32.mxu0 0.0
        %1863 = vmatmul.mubr.f32.gmra.mrb[0].mxu0 %v1790
        %v1864 = vpop.f32.mrb[0].mxu0
        %v1865 = vadd.f32 0.0, %v1864
        %v1866 = vpop.f32.mrb[0].mxu0
        %1867 = vmatprep.mubr.f32.mxu0 0.0
        %1868 = vmatmul.mubr.f32.gmra.mrb[0].mxu0 %v1792
        %v1869 = vpop.f32.mrb[0].mxu0
        %v1870 = vadd.f32 0.0, %v1869
        %v1871 = vpop.f32.mrb[0].mxu0
        %1872 = vdwg.mxu0
        %v1873 = vmul.f32 %v1865, 0.35355338
        %v1874 = vmul.f32 %v1870, 0.35355338
        %v1875 = vadd.f32 %v1873, %v802
        %v1876 = vadd.f32 %v1874, %v803
        %v1877 = vsel %vm1019, %v1875, -inf
        %1878 = vmax.xlane.f32.xlu0 %v1877
        %v1879 = vpop.xlane.xlu0 %1878
        %v1880 = vsel %vm1019, %v1876, -inf
        %1881 = vmax.xlane.f32.xlu0 %v1880
        %v1882 = vpop.xlane.xlu0 %1881
        %v1883 = vsub.f32 %v1875, %v1879
        %v1884 = vsub.f32 %v1876, %v1882
        %v1885 = vmul.f32 %v1883, 1.442695
        %v1886 = vpow.pop %v1885
        %v1887 = vmul.f32 %v1884, 1.442695
        %v1888 = vpow.pop %v1887
        %v1889 = vsel %vm1019, %v1886, 0.0
        %1890 = vadd.xlane.f32.xlu0 %v1889
        %v1891 = vpop.xlane.xlu0 %1890
        %v1892 = vsel %vm1019, %v1888, 0.0
        %1893 = vadd.xlane.f32.xlu0 %v1892
        %v1894 = vpop.xlane.xlu0 %1893
        %v1895 = vrcp.pop %v1891
        %v1896 = vrcp.pop %v1894
        %v1897 = vmul.f32 %v1886, %v1895
        %v1898 = vmul.f32 %v1888, %v1896
        %1899 = vrot.lane.b32.xlu0 %v913, 40
        %v1900 = vpop.permute.xlu0 %1899
        %1901 = vrot.lane.b32.xlu0 %v918, 40
        %v1902 = vpop.permute.xlu0 %1901
        %v1906 = vsel %vm1019, %v1897, 0
        %v1909 = vsel %vm1019, %v1898, 0
        %1911 = vmatprep.subr.mxu0 0.0
        %1912 = vmatpush1.msra.mxu0 %v1900
        %1913 = vmatprep.subr.mxu0 0.0
        %1914 = vmatpush1.msra.mxu0 %v1902
        %1915 = vmatprep.subr.mxu0 0.0
        %1916 = vmatpush1.msra.mxu0 0.0
        %1917 = vmatprep.subr.mxu0 0.0
        %1918 = vmatpush1.msra.mxu0 0.0
        %1919 = vmatprep.subr.mxu0 0.0
        %1920 = vmatpush1.msra.mxu0 0.0
        %1921 = vmatprep.subr.mxu0 0.0
        %1922 = vmatpush1.msra.mxu0 0.0
        %1923 = vmatprep.subr.mxu0 0.0
        %1924 = vmatpush1.msra.mxu0 0.0
        %1925 = vmatprep.subr.mxu0 0.0
        %1926 = vmatpush1.msra.mxu0 0.0
        %1927 = vmatprep.subr.mxu0 0.0
        %1928 = vmatpush1.msra.mxu0 0.0
        %1929 = vmatprep.subr.mxu0 0.0
        %1930 = vmatpush1.msra.mxu0 0.0
        %1931 = vmatprep.subr.mxu0 0.0
        %1932 = vmatpush1.msra.mxu0 0.0
        %1933 = vmatprep.subr.mxu0 0.0
        %1934 = vmatpush1.msra.mxu0 0.0
        %1935 = vmatprep.subr.mxu0 0.0
        %1936 = vmatpush1.msra.mxu0 0.0
        %1937 = vmatprep.subr.mxu0 0.0
        %1938 = vmatpush1.msra.mxu0 0.0
        %1939 = vmatprep.subr.mxu0 0.0
        %1940 = vmatpush1.msra.mxu0 0.0
        %1941 = vmatprep.subr.mxu0 0.0
        %1942 = vmatpush1.msra.mxu0 0.0
        %1943 = vmatprep.subr.mxu0 0.0
        %1944 = vmatpush1.msra.mxu0 0.0
        %1945 = vmatprep.subr.mxu0 0.0
        %1946 = vmatpush1.msra.mxu0 0.0
        %1947 = vmatprep.subr.mxu0 0.0
        %1948 = vmatpush1.msra.mxu0 0.0
        %1949 = vmatprep.subr.mxu0 0.0
        %1950 = vmatpush1.msra.mxu0 0.0
        %1951 = vmatprep.subr.mxu0 0.0
        %1952 = vmatpush1.msra.mxu0 0.0
        %1953 = vmatprep.subr.mxu0 0.0
        %1954 = vmatpush1.msra.mxu0 0.0
        %1955 = vmatprep.subr.mxu0 0.0
        %1956 = vmatpush1.msra.mxu0 0.0
        %1957 = vmatprep.subr.mxu0 0.0
        %1958 = vmatpush1.msra.mxu0 0.0
        %1959 = vmatprep.subr.mxu0 0.0
        %1960 = vmatpush1.msra.mxu0 0.0
        %1961 = vmatprep.subr.mxu0 0.0
        %1962 = vmatpush1.msra.mxu0 0.0
        %1963 = vmatprep.subr.mxu0 0.0
        %1964 = vmatpush1.msra.mxu0 0.0
        %1965 = vmatprep.subr.mxu0 0.0
        %1966 = vmatpush1.msra.mxu0 0.0
        %1967 = vmatprep.subr.mxu0 0.0
        %1968 = vmatpush1.msra.mxu0 0.0
        %1969 = vmatprep.subr.mxu0 0.0
        %1970 = vmatpush1.msra.mxu0 0.0
        %1971 = vmatprep.subr.mxu0 0.0
        %1972 = vmatpush1.msra.mxu0 0.0
        %1973 = vmatprep.subr.mxu0 0.0
        %1974 = vmatpush1.msra.mxu0 0.0
        %1975 = vmatprep.mubr.f32.mxu0 0.0
        %1976 = vmatmul.mubr.f32.gmra.mrb[0].mxu0 %v1906
        %v1977 = vpop.f32.mrb[0].mxu0
        %v1978 = vadd.f32 0.0, %v1977
        %v1979 = vpop.f32.mrb[0].mxu0
        %1980 = vmatprep.mubr.f32.mxu0 0.0
        %1981 = vmatmul.mubr.f32.gmra.mrb[0].mxu0 %v1909
        %v1982 = vpop.f32.mrb[0].mxu0
        %v1983 = vadd.f32 0.0, %v1982
        %v1984 = vpop.f32.mrb[0].mxu0
        %1985 = vdwg.mxu0
        %v1987 = vsel %vm931, %v1978, 0
        %v1990 = vsel %vm931, %v1983, 0
        %1992 = vmatprep.subr.mxu0 0.0
        %1993 = vmatpush1.msra.mxu0 %v924
        %1994 = vmatprep.subr.mxu0 0.0
        %1995 = vmatpush1.msra.mxu0 0.0
        %1996 = vmatprep.subr.mxu0 0.0
        %1997 = vmatpush1.msra.mxu0 0.0
        %1998 = vmatprep.subr.mxu0 0.0
        %1999 = vmatpush1.msra.mxu0 0.0
        %2000 = vmatprep.subr.mxu0 0.0
        %2001 = vmatpush1.msra.mxu0 0.0
        %2002 = vmatprep.subr.mxu0 0.0
        %2003 = vmatpush1.msra.mxu0 0.0
        %2004 = vmatprep.subr.mxu0 0.0
        %2005 = vmatpush1.msra.mxu0 0.0
        %2006 = vmatprep.subr.mxu0 0.0
        %2007 = vmatpush1.msra.mxu0 0.0
        %2008 = vmatprep.subr.mxu0 0.0
        %2009 = vmatpush1.msra.mxu0 0.0
        %2010 = vmatprep.subr.mxu0 0.0
        %2011 = vmatpush1.msra.mxu0 0.0
        %2012 = vmatprep.subr.mxu0 0.0
        %2013 = vmatpush1.msra.mxu0 0.0
        %2014 = vmatprep.subr.mxu0 0.0
        %2015 = vmatpush1.msra.mxu0 0.0
        %2016 = vmatprep.subr.mxu0 0.0
        %2017 = vmatpush1.msra.mxu0 0.0
        %2018 = vmatprep.subr.mxu0 0.0
        %2019 = vmatpush1.msra.mxu0 0.0
        %2020 = vmatprep.subr.mxu0 0.0
        %2021 = vmatpush1.msra.mxu0 0.0
        %2022 = vmatprep.subr.mxu0 0.0
        %2023 = vmatpush1.msra.mxu0 0.0
        %2024 = vmatprep.subr.mxu0 0.0
        %2025 = vmatpush1.msra.mxu0 0.0
        %2026 = vmatprep.subr.mxu0 0.0
        %2027 = vmatpush1.msra.mxu0 0.0
        %2028 = vmatprep.subr.mxu0 0.0
        %2029 = vmatpush1.msra.mxu0 0.0
        %2030 = vmatprep.subr.mxu0 0.0
        %2031 = vmatpush1.msra.mxu0 0.0
        %2032 = vmatprep.subr.mxu0 0.0
        %2033 = vmatpush1.msra.mxu0 0.0
        %2034 = vmatprep.subr.mxu0 0.0
        %2035 = vmatpush1.msra.mxu0 0.0
        %2036 = vmatprep.subr.mxu0 0.0
        %2037 = vmatpush1.msra.mxu0 0.0
        %2038 = vmatprep.subr.mxu0 0.0
        %2039 = vmatpush1.msra.mxu0 0.0
        %2040 = vmatprep.subr.mxu0 0.0
        %2041 = vmatpush1.msra.mxu0 0.0
        %2042 = vmatprep.subr.mxu0 0.0
        %2043 = vmatpush1.msra.mxu0 0.0
        %2044 = vmatprep.subr.mxu0 0.0
        %2045 = vmatpush1.msra.mxu0 0.0
        %2046 = vmatprep.subr.mxu0 0.0
        %2047 = vmatpush1.msra.mxu0 0.0
        %2048 = vmatprep.subr.mxu0 0.0
        %2049 = vmatpush1.msra.mxu0 0.0
        %2050 = vmatprep.subr.mxu0 0.0
        %2051 = vmatpush1.msra.mxu0 0.0
        %2052 = vmatprep.subr.mxu0 0.0
        %2053 = vmatpush1.msra.mxu0 0.0
        %2054 = vmatprep.subr.mxu0 0.0
        %2055 = vmatpush1.msra.mxu0 0.0
        %2056 = vmatprep.mubr.f32.mxu0 0.0
        %2057 = vmatmul.mubr.f32.gmra.mrb[0].mxu0 %v1987
        %v2058 = vpop.f32.mrb[0].mxu0
        %v2059 = vadd.f32 0.0, %v2058
        %v2060 = vpop.f32.mrb[0].mxu0
        %2061 = vmatprep.mubr.f32.mxu0 0.0
        %2062 = vmatmul.mubr.f32.gmra.mrb[0].mxu0 %v1990
        %v2063 = vpop.f32.mrb[0].mxu0
        %v2064 = vadd.f32 0.0, %v2063
        %v2065 = vpop.f32.mrb[0].mxu0
        %2066 = vdwg.mxu0
        %v2067 = vadd.f32 %v1780, %v2059
        %v2068 = vadd.f32 %v1781, %v2064
        %v2069 = vadd.f32 %v800, %v2067
        %v2070 = vadd.f32 %v801, %v2068
        %v2071 = vld [vmem:[%s5 + $0x17] ss:$0 sm:$0xff]
        %v2072 = vadd.f32 %v2069, %v2071
        %v2073 = vadd.f32 %v2070, %v2071
        %v2074 = vsel %vm475, %v2072, 0.0
        %2075 = vadd.xlane.f32.xlu0 %v2074
        %v2076 = vpop.xlane.xlu0 %2075
        %v2077 = vsel %vm475, %v2073, 0.0
        %2078 = vadd.xlane.f32.xlu0 %v2077
        %v2079 = vpop.xlane.xlu0 %2078
        %v2080 = vmul.f32 %v2076, %v482
        %v2081 = vmul.f32 %v2079, %v482
        %v2082 = vsub.f32 %v2072, %v2080
        %v2083 = vsub.f32 %v2073, %v2081
        %v2084 = vmul.f32 %v2082, %v2082
        %v2085 = vmul.f32 %v2083, %v2083
        %v2086 = vsel %vm475, %v2084, 0.0
        %2087 = vadd.xlane.f32.xlu0 %v2086
        %v2088 = vpop.xlane.xlu0 %2087
        %v2089 = vsel %vm475, %v2085, 0.0
        %2090 = vadd.xlane.f32.xlu0 %v2089
        %v2091 = vpop.xlane.xlu0 %2090
        %v2092 = vmul.f32 %v2088, %v482
        %v2093 = vmul.f32 %v2091, %v482
        %v2094 = vadd.f32 %v2092, 1e-05
        %v2095 = vadd.f32 %v2093, 1e-05
        %v2096 = vrsqrt.pop %v2094
        %v2097 = vrsqrt.pop %v2095
        %v2098 = vmul.f32 %v2082, %v2096
        %v2099 = vmul.f32 %v2083, %v2097
        %v2100 = vld [vmem:[%s5 + $0x20] ss:$0 sm:$0xff]
        %v2101 = vmul.f32 %v2098, %v2100
        %v2102 = vmul.f32 %v2099, %v2100
        %v2103 = vld [vmem:[%s5 + $0x21] ss:$0 sm:$0xff]
        %v2104 = vadd.f32 %v2101, %v2103
        %v2105 = vadd.f32 %v2102, %v2103
        %v2106 = vld [vmem:[%s6 + $0x128] sm:$0xff]
        %v2107 = vld [vmem:[%s6 + $0x130] sm:$0xff]
        %v2108 = vld [vmem:[%s6 + $0x138] sm:$0xff]
        %v2109 = vld [vmem:[%s6 + $0x140] sm:$0xff]
        %v2110 = vld [vmem:[%s5 + $0x22] ss:$0 sm:$0xff]
        %v2112 = vsel %vm475, %v2104, 0
        %v2115 = vsel %vm475, %v2105, 0
        %2117 = vmatprep.subr.mxu0 0.0
        %2118 = vmatpush1.msra.mxu0 %v2106
        %2119 = vmatprep.subr.mxu0 0.0
        %2120 = vmatpush1.msra.mxu0 %v2107
        %2121 = vmatprep.subr.mxu0 0.0
        %2122 = vmatpush1.msra.mxu0 %v2108
        %2123 = vmatprep.subr.mxu0 0.0
        %2124 = vmatpush1.msra.mxu0 %v2109
        %2125 = vmatprep.subr.mxu0 0.0
        %2126 = vmatpush1.msra.mxu0 0.0
        %2127 = vmatprep.subr.mxu0 0.0
        %2128 = vmatpush1.msra.mxu0 0.0
        %2129 = vmatprep.subr.mxu0 0.0
        %2130 = vmatpush1.msra.mxu0 0.0
        %2131 = vmatprep.subr.mxu0 0.0
        %2132 = vmatpush1.msra.mxu0 0.0
        %2133 = vmatprep.subr.mxu0 0.0
        %2134 = vmatpush1.msra.mxu0 0.0
        %2135 = vmatprep.subr.mxu0 0.0
        %2136 = vmatpush1.msra.mxu0 0.0
        %2137 = vmatprep.subr.mxu0 0.0
        %2138 = vmatpush1.msra.mxu0 0.0
        %2139 = vmatprep.subr.mxu0 0.0
        %2140 = vmatpush1.msra.mxu0 0.0
        %2141 = vmatprep.subr.mxu0 0.0
        %2142 = vmatpush1.msra.mxu0 0.0
        %2143 = vmatprep.subr.mxu0 0.0
        %2144 = vmatpush1.msra.mxu0 0.0
        %2145 = vmatprep.subr.mxu0 0.0
        %2146 = vmatpush1.msra.mxu0 0.0
        %2147 = vmatprep.subr.mxu0 0.0
        %2148 = vmatpush1.msra.mxu0 0.0
        %2149 = vmatprep.subr.mxu0 0.0
        %2150 = vmatpush1.msra.mxu0 0.0
        %2151 = vmatprep.subr.mxu0 0.0
        %2152 = vmatpush1.msra.mxu0 0.0
        %2153 = vmatprep.subr.mxu0 0.0
        %2154 = vmatpush1.msra.mxu0 0.0
        %2155 = vmatprep.subr.mxu0 0.0
        %2156 = vmatpush1.msra.mxu0 0.0
        %2157 = vmatprep.subr.mxu0 0.0
        %2158 = vmatpush1.msra.mxu0 0.0
        %2159 = vmatprep.subr.mxu0 0.0
        %2160 = vmatpush1.msra.mxu0 0.0
        %2161 = vmatprep.subr.mxu0 0.0
        %2162 = vmatpush1.msra.mxu0 0.0
        %2163 = vmatprep.subr.mxu0 0.0
        %2164 = vmatpush1.msra.mxu0 0.0
        %2165 = vmatprep.subr.mxu0 0.0
        %2166 = vmatpush1.msra.mxu0 0.0
        %2167 = vmatprep.subr.mxu0 0.0
        %2168 = vmatpush1.msra.mxu0 0.0
        %2169 = vmatprep.subr.mxu0 0.0
        %2170 = vmatpush1.msra.mxu0 0.0
        %2171 = vmatprep.subr.mxu0 0.0
        %2172 = vmatpush1.msra.mxu0 0.0
        %2173 = vmatprep.subr.mxu0 0.0
        %2174 = vmatpush1.msra.mxu0 0.0
        %2175 = vmatprep.subr.mxu0 0.0
        %2176 = vmatpush1.msra.mxu0 0.0
        %2177 = vmatprep.subr.mxu0 0.0
        %2178 = vmatpush1.msra.mxu0 0.0
        %2179 = vmatprep.subr.mxu0 0.0
        %2180 = vmatpush1.msra.mxu0 0.0
        %2181 = vmatprep.mubr.f32.mxu0 0.0
        %2182 = vmatmul.mubr.f32.gmra.mrb[0].mxu0 %v2112
        %v2183 = vpop.f32.mrb[0].mxu0
        %v2184 = vadd.f32 %v2110, %v2183
        %v2185 = vpop.f32.mrb[0].mxu0
        %2186 = vmatprep.mubr.f32.mxu0 0.0
        %2187 = vmatmul.mubr.f32.gmra.mrb[0].mxu0 %v2115
        %v2188 = vpop.f32.mrb[0].mxu0
        %v2189 = vadd.f32 %v2110, %v2188
        %v2190 = vpop.f32.mrb[0].mxu0
        %2191 = vdwg.mxu0
        %v2192 = vmul.f32 %v2184, 0.5
        %v2193 = vmul.f32 %v2189, 0.5
        %v2194 = vmul.f32 %v2184, 0.70710677
        %v2195 = vmul.f32 %v2189, 0.70710677
        %v2196 = verf.f32.pop %v2194
        %v2197 = verf.f32.pop %v2195
        %v2198 = vadd.f32 %v2196, 1.0
        %v2199 = vadd.f32 %v2197, 1.0
        %v2200 = vmul.f32 %v2192, %v2198
        %v2201 = vmul.f32 %v2193, %v2199
        %v2202 = vld [vmem:[%s6 + $0x148] sm:$0xff]
        %v2203 = vld [vmem:[%s6 + $0x150] sm:$0xff]
        %v2204 = vld [vmem:[%s6 + $0x158] sm:$0xff]
        %v2205 = vld [vmem:[%s6 + $0x160] sm:$0xff]
        %v2206 = vld [vmem:[%s6 + $0x168] sm:$0xff]
        %v2207 = vld [vmem:[%s6 + $0x170] sm:$0xff]
        %v2208 = vld [vmem:[%s6 + $0x178] sm:$0xff]
        %v2209 = vld [vmem:[%s6 + $0x180] sm:$0xff]
        %v2211 = vsel %vm298, %v2200, 0
        %v2214 = vsel %vm298, %v2201, 0
        %2216 = vmatprep.subr.mxu0 0.0
        %2217 = vmatpush1.msra.mxu0 %v2202
        %2218 = vmatprep.subr.mxu0 0.0
        %2219 = vmatpush1.msra.mxu0 %v2203
        %2220 = vmatprep.subr.mxu0 0.0
        %2221 = vmatpush1.msra.mxu0 %v2204
        %2222 = vmatprep.subr.mxu0 0.0
        %2223 = vmatpush1.msra.mxu0 %v2205
        %2224 = vmatprep.subr.mxu0 0.0
        %2225 = vmatpush1.msra.mxu0 %v2206
        %2226 = vmatprep.subr.mxu0 0.0
        %2227 = vmatpush1.msra.mxu0 %v2207
        %2228 = vmatprep.subr.mxu0 0.0
        %2229 = vmatpush1.msra.mxu0 %v2208
        %2230 = vmatprep.subr.mxu0 0.0
        %2231 = vmatpush1.msra.mxu0 %v2209
        %2232 = vmatprep.subr.mxu0 0.0
        %2233 = vmatpush1.msra.mxu0 0.0
        %2234 = vmatprep.subr.mxu0 0.0
        %2235 = vmatpush1.msra.mxu0 0.0
        %2236 = vmatprep.subr.mxu0 0.0
        %2237 = vmatpush1.msra.mxu0 0.0
        %2238 = vmatprep.subr.mxu0 0.0
        %2239 = vmatpush1.msra.mxu0 0.0
        %2240 = vmatprep.subr.mxu0 0.0
        %2241 = vmatpush1.msra.mxu0 0.0
        %2242 = vmatprep.subr.mxu0 0.0
        %2243 = vmatpush1.msra.mxu0 0.0
        %2244 = vmatprep.subr.mxu0 0.0
        %2245 = vmatpush1.msra.mxu0 0.0
        %2246 = vmatprep.subr.mxu0 0.0
        %2247 = vmatpush1.msra.mxu0 0.0
        %2248 = vmatprep.subr.mxu0 0.0
        %2249 = vmatpush1.msra.mxu0 0.0
        %2250 = vmatprep.subr.mxu0 0.0
        %2251 = vmatpush1.msra.mxu0 0.0
        %2252 = vmatprep.subr.mxu0 0.0
        %2253 = vmatpush1.msra.mxu0 0.0
        %2254 = vmatprep.subr.mxu0 0.0
        %2255 = vmatpush1.msra.mxu0 0.0
        %2256 = vmatprep.subr.mxu0 0.0
        %2257 = vmatpush1.msra.mxu0 0.0
        %2258 = vmatprep.subr.mxu0 0.0
        %2259 = vmatpush1.msra.mxu0 0.0
        %2260 = vmatprep.subr.mxu0 0.0
        %2261 = vmatpush1.msra.mxu0 0.0
        %2262 = vmatprep.subr.mxu0 0.0
        %2263 = vmatpush1.msra.mxu0 0.0
        %2264 = vmatprep.subr.mxu0 0.0
        %2265 = vmatpush1.msra.mxu0 0.0
        %2266 = vmatprep.subr.mxu0 0.0
        %2267 = vmatpush1.msra.mxu0 0.0
        %2268 = vmatprep.subr.mxu0 0.0
        %2269 = vmatpush1.msra.mxu0 0.0
        %2270 = vmatprep.subr.mxu0 0.0
        %2271 = vmatpush1.msra.mxu0 0.0
        %2272 = vmatprep.subr.mxu0 0.0
        %2273 = vmatpush1.msra.mxu0 0.0
        %2274 = vmatprep.subr.mxu0 0.0
        %2275 = vmatpush1.msra.mxu0 0.0
        %2276 = vmatprep.subr.mxu0 0.0
        %2277 = vmatpush1.msra.mxu0 0.0
        %2278 = vmatprep.subr.mxu0 0.0
        %2279 = vmatpush1.msra.mxu0 0.0
        %2280 = vmatprep.mubr.f32.mxu0 0.0
        %2281 = vmatmul.mubr.f32.gmra.mrb[0].mxu0 %v2211
        %v2282 = vpop.f32.mrb[0].mxu0
        %v2283 = vadd.f32 0.0, %v2282
        %v2284 = vpop.f32.mrb[0].mxu0
        %2285 = vmatprep.mubr.f32.mxu0 0.0
        %2286 = vmatmul.mubr.f32.gmra.mrb[0].mxu0 %v2214
        %v2287 = vpop.f32.mrb[0].mxu0
        %v2288 = vadd.f32 0.0, %v2287
        %v2289 = vpop.f32.mrb[0].mxu0
        %2290 = vdwg.mxu0
        %v2291 = vadd.f32 %v2072, %v2283
        %v2292 = vadd.f32 %v2073, %v2288
        %v2293 = vld [vmem:[%s5 + $0x23] ss:$0 sm:$0xff]
        %v2294 = vadd.f32 %v2291, %v2293
        %v2295 = vadd.f32 %v2292, %v2293
        %v2296 = vsel %vm475, %v2294, 0.0
        %2297 = vadd.xlane.f32.xlu0 %v2296
        %v2298 = vpop.xlane.xlu0 %2297
        %v2299 = vsel %vm475, %v2295, 0.0
        %2300 = vadd.xlane.f32.xlu0 %v2299
        %v2301 = vpop.xlane.xlu0 %2300
        %v2302 = vmul.f32 %v2298, %v482
        %v2303 = vmul.f32 %v2301, %v482
        %v2304 = vsub.f32 %v2294, %v2302
        %v2305 = vsub.f32 %v2295, %v2303
        %v2306 = vmul.f32 %v2304, %v2304
        %v2307 = vmul.f32 %v2305, %v2305
        %v2308 = vsel %vm475, %v2306, 0.0
        %2309 = vadd.xlane.f32.xlu0 %v2308
        %v2310 = vpop.xlane.xlu0 %2309
        %v2311 = vsel %vm475, %v2307, 0.0
        %2312 = vadd.xlane.f32.xlu0 %v2311
        %v2313 = vpop.xlane.xlu0 %2312
        %v2314 = vmul.f32 %v2310, %v482
        %v2315 = vmul.f32 %v2313, %v482
        %v2316 = vadd.f32 %v2314, 1e-05
        %v2317 = vadd.f32 %v2315, 1e-05
        %v2318 = vrsqrt.pop %v2316
        %v2319 = vrsqrt.pop %v2317
        %v2320 = vmul.f32 %v2304, %v2318
        %v2321 = vmul.f32 %v2305, %v2319
        %v2322 = vld [vmem:[%s5 + $0x24] ss:$0 sm:$0xff]
        %v2323 = vmul.f32 %v2320, %v2322
        %v2324 = vmul.f32 %v2321, %v2322
        %v2325 = vld [vmem:[%s5 + $0x25] ss:$0 sm:$0xff]
        %v2326 = vadd.f32 %v2323, %v2325
        %v2327 = vadd.f32 %v2324, %v2325
        %v2328 = vld [vmem:[%s6 + $0x188] sm:$0xff]
        %v2329 = vld [vmem:[%s6 + $0x190] sm:$0xff]
        %v2330 = vld [vmem:[%s6 + $0x198] sm:$0xff]
        %v2331 = vld [vmem:[%s6 + $0x1a0] sm:$0xff]
        %v2333 = vsel %vm475, %v2326, 0
        %v2336 = vsel %vm475, %v2327, 0
        %2338 = vmatprep.subr.mxu0 0.0
        %2339 = vmatpush1.msra.mxu0 %v2328
        %2340 = vmatprep.subr.mxu0 0.0
        %2341 = vmatpush1.msra.mxu0 %v2329
        %2342 = vmatprep.subr.mxu0 0.0
        %2343 = vmatpush1.msra.mxu0 %v2330
        %2344 = vmatprep.subr.mxu0 0.0
        %2345 = vmatpush1.msra.mxu0 %v2331
        %2346 = vmatprep.subr.mxu0 0.0
        %2347 = vmatpush1.msra.mxu0 0.0
        %2348 = vmatprep.subr.mxu0 0.0
        %2349 = vmatpush1.msra.mxu0 0.0
        %2350 = vmatprep.subr.mxu0 0.0
        %2351 = vmatpush1.msra.mxu0 0.0
        %2352 = vmatprep.subr.mxu0 0.0
        %2353 = vmatpush1.msra.mxu0 0.0
        %2354 = vmatprep.subr.mxu0 0.0
        %2355 = vmatpush1.msra.mxu0 0.0
        %2356 = vmatprep.subr.mxu0 0.0
        %2357 = vmatpush1.msra.mxu0 0.0
        %2358 = vmatprep.subr.mxu0 0.0
        %2359 = vmatpush1.msra.mxu0 0.0
        %2360 = vmatprep.subr.mxu0 0.0
        %2361 = vmatpush1.msra.mxu0 0.0
        %2362 = vmatprep.subr.mxu0 0.0
        %2363 = vmatpush1.msra.mxu0 0.0
        %2364 = vmatprep.subr.mxu0 0.0
        %2365 = vmatpush1.msra.mxu0 0.0
        %2366 = vmatprep.subr.mxu0 0.0
        %2367 = vmatpush1.msra.mxu0 0.0
        %2368 = vmatprep.subr.mxu0 0.0
        %2369 = vmatpush1.msra.mxu0 0.0
        %2370 = vmatprep.subr.mxu0 0.0
        %2371 = vmatpush1.msra.mxu0 0.0
        %2372 = vmatprep.subr.mxu0 0.0
        %2373 = vmatpush1.msra.mxu0 0.0
        %2374 = vmatprep.subr.mxu0 0.0
        %2375 = vmatpush1.msra.mxu0 0.0
        %2376 = vmatprep.subr.mxu0 0.0
        %2377 = vmatpush1.msra.mxu0 0.0
        %2378 = vmatprep.subr.mxu0 0.0
        %2379 = vmatpush1.msra.mxu0 0.0
        %2380 = vmatprep.subr.mxu0 0.0
        %2381 = vmatpush1.msra.mxu0 0.0
        %2382 = vmatprep.subr.mxu0 0.0
        %2383 = vmatpush1.msra.mxu0 0.0
        %2384 = vmatprep.subr.mxu0 0.0
        %2385 = vmatpush1.msra.mxu0 0.0
        %2386 = vmatprep.subr.mxu0 0.0
        %2387 = vmatpush1.msra.mxu0 0.0
        %2388 = vmatprep.subr.mxu0 0.0
        %2389 = vmatpush1.msra.mxu0 0.0
        %2390 = vmatprep.subr.mxu0 0.0
        %2391 = vmatpush1.msra.mxu0 0.0
        %2392 = vmatprep.subr.mxu0 0.0
        %2393 = vmatpush1.msra.mxu0 0.0
        %2394 = vmatprep.subr.mxu0 0.0
        %2395 = vmatpush1.msra.mxu0 0.0
        %2396 = vmatprep.subr.mxu0 0.0
        %2397 = vmatpush1.msra.mxu0 0.0
        %2398 = vmatprep.subr.mxu0 0.0
        %2399 = vmatpush1.msra.mxu0 0.0
        %2400 = vmatprep.subr.mxu0 0.0
        %2401 = vmatpush1.msra.mxu0 0.0
        %2402 = vmatprep.mubr.f32.mxu0 0.0
        %2403 = vmatmul.mubr.f32.gmra.mrb[0].mxu0 %v2333
        %v2404 = vpop.f32.mrb[0].mxu0
        %v2405 = vadd.f32 0.0, %v2404
        %v2406 = vpop.f32.mrb[0].mxu0
        %2407 = vmatprep.mubr.f32.mxu0 0.0
        %2408 = vmatmul.mubr.f32.gmra.mrb[0].mxu0 %v2336
        %v2409 = vpop.f32.mrb[0].mxu0
        %v2410 = vadd.f32 0.0, %v2409
        %v2411 = vpop.f32.mrb[0].mxu0
        %2412 = vdwg.mxu0
        %v2413 = vld [vmem:[%s6 + $0x1a8] sm:$0xff]
        %v2414 = vld [vmem:[%s6 + $0x1b0] sm:$0xff]
        %v2415 = vld [vmem:[%s6 + $0x1b8] sm:$0xff]
        %v2416 = vld [vmem:[%s6 + $0x1c0] sm:$0xff]
        %2419 = vrot.lane.b32.xlu0 %v2405, 96
        %v2420 = vpop.permute.xlu0 %2419
        %2421 = vrot.lane.b32.xlu0 %v2410, 96
        %v2422 = vpop.permute.xlu0 %2421
        %v2423 = vsel %vm931, %v2405, 0
        %v2425 = vsel %vm931, %v2410, 0
        %v2427 = vsel %vm931, %v2420, 0
        %v2429 = vsel %vm931, %v2422, 0
        %2431 = vmatprep.subr.mxu0 0.0
        %2432 = vmatpush1.xpose.msra.mxu0 %v2427
        %2433 = vmatprep.subr.mxu0 0.0
        %2434 = vmatpush1.xpose.msra.mxu0 %v2429
        %2435 = vmatprep.subr.mxu0 0.0
        %2436 = vmatpush1.xpose.msra.mxu0 0.0
        %2437 = vmatprep.subr.mxu0 0.0
        %2438 = vmatpush1.xpose.msra.mxu0 0.0
        %2439 = vmatprep.subr.mxu0 0.0
        %2440 = vmatpush1.xpose.msra.mxu0 0.0
        %2441 = vmatprep.subr.mxu0 0.0
        %2442 = vmatpush1.xpose.msra.mxu0 0.0
        %2443 = vmatprep.subr.mxu0 0.0
        %2444 = vmatpush1.xpose.msra.mxu0 0.0
        %2445 = vmatprep.subr.mxu0 0.0
        %2446 = vmatpush1.xpose.msra.mxu0 0.0
        %2447 = vmatprep.subr.mxu0 0.0
        %2448 = vmatpush1.xpose.msra.mxu0 0.0
        %2449 = vmatprep.subr.mxu0 0.0
        %2450 = vmatpush1.xpose.msra.mxu0 0.0
        %2451 = vmatprep.subr.mxu0 0.0
        %2452 = vmatpush1.xpose.msra.mxu0 0.0
        %2453 = vmatprep.subr.mxu0 0.0
        %2454 = vmatpush1.xpose.msra.mxu0 0.0
        %2455 = vmatprep.subr.mxu0 0.0
        %2456 = vmatpush1.xpose.msra.mxu0 0.0
        %2457 = vmatprep.subr.mxu0 0.0
        %2458 = vmatpush1.xpose.msra.mxu0 0.0
        %2459 = vmatprep.subr.mxu0 0.0
        %2460 = vmatpush1.xpose.msra.mxu0 0.0
        %2461 = vmatprep.subr.mxu0 0.0
        %2462 = vmatpush1.xpose.msra.mxu0 0.0
        %2463 = vmatprep.subr.mxu0 0.0
        %2464 = vmatpush1.xpose.msra.mxu0 0.0
        %2465 = vmatprep.subr.mxu0 0.0
        %2466 = vmatpush1.xpose.msra.mxu0 0.0
        %2467 = vmatprep.subr.mxu0 0.0
        %2468 = vmatpush1.xpose.msra.mxu0 0.0
        %2469 = vmatprep.subr.mxu0 0.0
        %2470 = vmatpush1.xpose.msra.mxu0 0.0
        %2471 = vmatprep.subr.mxu0 0.0
        %2472 = vmatpush1.xpose.msra.mxu0 0.0
        %2473 = vmatprep.subr.mxu0 0.0
        %2474 = vmatpush1.xpose.msra.mxu0 0.0
        %2475 = vmatprep.subr.mxu0 0.0
        %2476 = vmatpush1.xpose.msra.mxu0 0.0
        %2477 = vmatprep.subr.mxu0 0.0
        %2478 = vmatpush1.xpose.msra.mxu0 0.0
        %2479 = vmatprep.subr.mxu0 0.0
        %2480 = vmatpush1.xpose.msra.mxu0 0.0
        %2481 = vmatprep.subr.mxu0 0.0
        %2482 = vmatpush1.xpose.msra.mxu0 0.0
        %2483 = vmatprep.subr.mxu0 0.0
        %2484 = vmatpush1.xpose.msra.mxu0 0.0
        %2485 = vmatprep.subr.mxu0 0.0
        %2486 = vmatpush1.xpose.msra.mxu0 0.0
        %2487 = vmatprep.subr.mxu0 0.0
        %2488 = vmatpush1.xpose.msra.mxu0 0.0
        %2489 = vmatprep.subr.mxu0 0.0
        %2490 = vmatpush1.xpose.msra.mxu0 0.0
        %2491 = vmatprep.subr.mxu0 0.0
        %2492 = vmatpush1.xpose.msra.mxu0 0.0
        %2493 = vmatprep.subr.mxu0 0.0
        %2494 = vmatpush1.xpose.msra.mxu0 0.0
        %2495 = vmatprep.mubr.f32.mxu0 0.0
        %2496 = vmatmul.mubr.f32.gmra.mrb[0].mxu0 %v2423
        %v2497 = vpop.f32.mrb[0].mxu0
        %v2498 = vadd.f32 0.0, %v2497
        %v2499 = vpop.f32.mrb[0].mxu0
        %2500 = vmatprep.mubr.f32.mxu0 0.0
        %2501 = vmatmul.mubr.f32.gmra.mrb[0].mxu0 %v2425
        %v2502 = vpop.f32.mrb[0].mxu0
        %v2503 = vadd.f32 0.0, %v2502
        %v2504 = vpop.f32.mrb[0].mxu0
        %2505 = vdwg.mxu0
        %v2506 = vmul.f32 %v2498, 0.35355338
        %v2507 = vmul.f32 %v2503, 0.35355338
        %v2508 = vadd.f32 %v2506, %v802
        %v2509 = vadd.f32 %v2507, %v803
        %v2510 = vsel %vm1019, %v2508, -inf
        %2511 = vmax.xlane.f32.xlu0 %v2510
        %v2512 = vpop.xlane.xlu0 %2511
        %v2513 = vsel %vm1019, %v2509, -inf
        %2514 = vmax.xlane.f32.xlu0 %v2513
        %v2515 = vpop.xlane.xlu0 %2514
        %v2516 = vsub.f32 %v2508, %v2512
        %v2517 = vsub.f32 %v2509, %v2515
        %v2518 = vmul.f32 %v2516, 1.442695
        %v2519 = vpow.pop %v2518
        %v2520 = vmul.f32 %v2517, 1.442695
        %v2521 = vpow.pop %v2520
        %v2522 = vsel %vm1019, %v2519, 0.0
        %2523 = vadd.xlane.f32.xlu0 %v2522
        %v2524 = vpop.xlane.xlu0 %2523
        %v2525 = vsel %vm1019, %v2521, 0.0
        %2526 = vadd.xlane.f32.xlu0 %v2525
        %v2527 = vpop.xlane.xlu0 %2526
        %v2528 = vrcp.pop %v2524
        %v2529 = vrcp.pop %v2527
        %v2530 = vmul.f32 %v2519, %v2528
        %v2531 = vmul.f32 %v2521, %v2529
        %2532 = vrot.lane.b32.xlu0 %v2405, 64
        %v2533 = vpop.permute.xlu0 %2532
        %2534 = vrot.lane.b32.xlu0 %v2410, 64
        %v2535 = vpop.permute.xlu0 %2534
        %v2539 = vsel %vm1019, %v2530, 0
        %v2542 = vsel %vm1019, %v2531, 0
        %2544 = vmatprep.subr.mxu0 0.0
        %2545 = vmatpush1.msra.mxu0 %v2533
        %2546 = vmatprep.subr.mxu0 0.0
        %2547 = vmatpush1.msra.mxu0 %v2535
        %2548 = vmatprep.subr.mxu0 0.0
        %2549 = vmatpush1.msra.mxu0 0.0
        %2550 = vmatprep.subr.mxu0 0.0
        %2551 = vmatpush1.msra.mxu0 0.0
        %2552 = vmatprep.subr.mxu0 0.0
        %2553 = vmatpush1.msra.mxu0 0.0
        %2554 = vmatprep.subr.mxu0 0.0
        %2555 = vmatpush1.msra.mxu0 0.0
        %2556 = vmatprep.subr.mxu0 0.0
        %2557 = vmatpush1.msra.mxu0 0.0
        %2558 = vmatprep.subr.mxu0 0.0
        %2559 = vmatpush1.msra.mxu0 0.0
        %2560 = vmatprep.subr.mxu0 0.0
        %2561 = vmatpush1.msra.mxu0 0.0
        %2562 = vmatprep.subr.mxu0 0.0
        %2563 = vmatpush1.msra.mxu0 0.0
        %2564 = vmatprep.subr.mxu0 0.0
        %2565 = vmatpush1.msra.mxu0 0.0
        %2566 = vmatprep.subr.mxu0 0.0
        %2567 = vmatpush1.msra.mxu0 0.0
        %2568 = vmatprep.subr.mxu0 0.0
        %2569 = vmatpush1.msra.mxu0 0.0
        %2570 = vmatprep.subr.mxu0 0.0
        %2571 = vmatpush1.msra.mxu0 0.0
        %2572 = vmatprep.subr.mxu0 0.0
        %2573 = vmatpush1.msra.mxu0 0.0
        %2574 = vmatprep.subr.mxu0 0.0
        %2575 = vmatpush1.msra.mxu0 0.0
        %2576 = vmatprep.subr.mxu0 0.0
        %2577 = vmatpush1.msra.mxu0 0.0
        %2578 = vmatprep.subr.mxu0 0.0
        %2579 = vmatpush1.msra.mxu0 0.0
        %2580 = vmatprep.subr.mxu0 0.0
        %2581 = vmatpush1.msra.mxu0 0.0
        %2582 = vmatprep.subr.mxu0 0.0
        %2583 = vmatpush1.msra.mxu0 0.0
        %2584 = vmatprep.subr.mxu0 0.0
        %2585 = vmatpush1.msra.mxu0 0.0
        %2586 = vmatprep.subr.mxu0 0.0
        %2587 = vmatpush1.msra.mxu0 0.0
        %2588 = vmatprep.subr.mxu0 0.0
        %2589 = vmatpush1.msra.mxu0 0.0
        %2590 = vmatprep.subr.mxu0 0.0
        %2591 = vmatpush1.msra.mxu0 0.0
        %2592 = vmatprep.subr.mxu0 0.0
        %2593 = vmatpush1.msra.mxu0 0.0
        %2594 = vmatprep.subr.mxu0 0.0
        %2595 = vmatpush1.msra.mxu0 0.0
        %2596 = vmatprep.subr.mxu0 0.0
        %2597 = vmatpush1.msra.mxu0 0.0
        %2598 = vmatprep.subr.mxu0 0.0
        %2599 = vmatpush1.msra.mxu0 0.0
        %2600 = vmatprep.subr.mxu0 0.0
        %2601 = vmatpush1.msra.mxu0 0.0
        %2602 = vmatprep.subr.mxu0 0.0
        %2603 = vmatpush1.msra.mxu0 0.0
        %2604 = vmatprep.subr.mxu0 0.0
        %2605 = vmatpush1.msra.mxu0 0.0
        %2606 = vmatprep.subr.mxu0 0.0
        %2607 = vmatpush1.msra.mxu0 0.0
        %2608 = vmatprep.mubr.f32.mxu0 0.0
        %2609 = vmatmul.mubr.f32.gmra.mrb[0].mxu0 %v2539
        %v2610 = vpop.f32.mrb[0].mxu0
        %v2611 = vadd.f32 0.0, %v2610
        %v2612 = vpop.f32.mrb[0].mxu0
        %2613 = vmatprep.mubr.f32.mxu0 0.0
        %2614 = vmatmul.mubr.f32.gmra.mrb[0].mxu0 %v2542
        %v2615 = vpop.f32.mrb[0].mxu0
        %v2616 = vadd.f32 0.0, %v2615
        %v2617 = vpop.f32.mrb[0].mxu0
        %2618 = vdwg.mxu0
        %2619 = vrot.lane.b32.xlu0 %v2405, 120
        %v2620 = vpop.permute.xlu0 %2619
        %2621 = vrot.lane.b32.xlu0 %v2410, 120
        %v2622 = vpop.permute.xlu0 %2621
        %2623 = vrot.lane.b32.xlu0 %v2405, 88
        %v2624 = vpop.permute.xlu0 %2623
        %2625 = vrot.lane.b32.xlu0 %v2410, 88
        %v2626 = vpop.permute.xlu0 %2625
        %v2627 = vsel %vm931, %v2620, 0
        %v2629 = vsel %vm931, %v2622, 0
        %v2631 = vsel %vm931, %v2624, 0
        %v2633 = vsel %vm931, %v2626, 0
        %2635 = vmatprep.subr.mxu0 0.0
        %2636 = vmatpush1.xpose.msra.mxu0 %v2631
        %2637 = vmatprep.subr.mxu0 0.0
        %2638 = vmatpush1.xpose.msra.mxu0 %v2633
        %2639 = vmatprep.subr.mxu0 0.0
        %2640 = vmatpush1.xpose.msra.mxu0 0.0
        %2641 = vmatprep.subr.mxu0 0.0
        %2642 = vmatpush1.xpose.msra.mxu0 0.0
        %2643 = vmatprep.subr.mxu0 0.0
        %2644 = vmatpush1.xpose.msra.mxu0 0.0
        %2645 = vmatprep.subr.mxu0 0.0
        %2646 = vmatpush1.xpose.msra.mxu0 0.0
        %2647 = vmatprep.subr.mxu0 0.0
        %2648 = vmatpush1.xpose.msra.mxu0 0.0
        %2649 = vmatprep.subr.mxu0 0.0
        %2650 = vmatpush1.xpose.msra.mxu0 0.0
        %2651 = vmatprep.subr.mxu0 0.0
        %2652 = vmatpush1.xpose.msra.mxu0 0.0
        %2653 = vmatprep.subr.mxu0 0.0
        %2654 = vmatpush1.xpose.msra.mxu0 0.0
        %2655 = vmatprep.subr.mxu0 0.0
        %2656 = vmatpush1.xpose.msra.mxu0 0.0
        %2657 = vmatprep.subr.mxu0 0.0
        %2658 = vmatpush1.xpose.msra.mxu0 0.0
        %2659 = vmatprep.subr.mxu0 0.0
        %2660 = vmatpush1.xpose.msra.mxu0 0.0
        %2661 = vmatprep.subr.mxu0 0.0
        %2662 = vmatpush1.xpose.msra.mxu0 0.0
        %2663 = vmatprep.subr.mxu0 0.0
        %2664 = vmatpush1.xpose.msra.mxu0 0.0
        %2665 = vmatprep.subr.mxu0 0.0
        %2666 = vmatpush1.xpose.msra.mxu0 0.0
        %2667 = vmatprep.subr.mxu0 0.0
        %2668 = vmatpush1.xpose.msra.mxu0 0.0
        %2669 = vmatprep.subr.mxu0 0.0
        %2670 = vmatpush1.xpose.msra.mxu0 0.0
        %2671 = vmatprep.subr.mxu0 0.0
        %2672 = vmatpush1.xpose.msra.mxu0 0.0
        %2673 = vmatprep.subr.mxu0 0.0
        %2674 = vmatpush1.xpose.msra.mxu0 0.0
        %2675 = vmatprep.subr.mxu0 0.0
        %2676 = vmatpush1.xpose.msra.mxu0 0.0
        %2677 = vmatprep.subr.mxu0 0.0
        %2678 = vmatpush1.xpose.msra.mxu0 0.0
        %2679 = vmatprep.subr.mxu0 0.0
        %2680 = vmatpush1.xpose.msra.mxu0 0.0
        %2681 = vmatprep.subr.mxu0 0.0
        %2682 = vmatpush1.xpose.msra.mxu0 0.0
        %2683 = vmatprep.subr.mxu0 0.0
        %2684 = vmatpush1.xpose.msra.mxu0 0.0
        %2685 = vmatprep.subr.mxu0 0.0
        %2686 = vmatpush1.xpose.msra.mxu0 0.0
        %2687 = vmatprep.subr.mxu0 0.0
        %2688 = vmatpush1.xpose.msra.mxu0 0.0
        %2689 = vmatprep.subr.mxu0 0.0
        %2690 = vmatpush1.xpose.msra.mxu0 0.0
        %2691 = vmatprep.subr.mxu0 0.0
        %2692 = vmatpush1.xpose.msra.mxu0 0.0
        %2693 = vmatprep.subr.mxu0 0.0
        %2694 = vmatpush1.xpose.msra.mxu0 0.0
        %2695 = vmatprep.subr.mxu0 0.0
        %2696 = vmatpush1.xpose.msra.mxu0 0.0
        %2697 = vmatprep.subr.mxu0 0.0
        %2698 = vmatpush1.xpose.msra.mxu0 0.0
        %2699 = vmatprep.mubr.f32.mxu0 0.0
        %2700 = vmatmul.mubr.f32.gmra.mrb[0].mxu0 %v2627
        %v2701 = vpop.f32.mrb[0].mxu0
        %v2702 = vadd.f32 0.0, %v2701
        %v2703 = vpop.f32.mrb[0].mxu0
        %2704 = vmatprep.mubr.f32.mxu0 0.0
        %2705 = vmatmul.mubr.f32.gmra.mrb[0].mxu0 %v2629
        %v2706 = vpop.f32.mrb[0].mxu0
        %v2707 = vadd.f32 0.0, %v2706
        %v2708 = vpop.f32.mrb[0].mxu0
        %2709 = vdwg.mxu0
        %v2710 = vmul.f32 %v2702, 0.35355338
        %v2711 = vmul.f32 %v2707, 0.35355338
        %v2712 = vadd.f32 %v2710, %v802
        %v2713 = vadd.f32 %v2711, %v803
        %v2714 = vsel %vm1019, %v2712, -inf
        %2715 = vmax.xlane.f32.xlu0 %v2714
        %v2716 = vpop.xlane.xlu0 %2715
        %v2717 = vsel %vm1019, %v2713, -inf
        %2718 = vmax.xlane.f32.xlu0 %v2717
        %v2719 = vpop.xlane.xlu0 %2718
        %v2720 = vsub.f32 %v2712, %v2716
        %v2721 = vsub.f32 %v2713, %v2719
        %v2722 = vmul.f32 %v2720, 1.442695
        %v2723 = vpow.pop %v2722
        %v2724 = vmul.f32 %v2721, 1.442695
        %v2725 = vpow.pop %v2724
        %v2726 = vsel %vm1019, %v2723, 0.0
        %2727 = vadd.xlane.f32.xlu0 %v2726
        %v2728 = vpop.xlane.xlu0 %2727
        %v2729 = vsel %vm1019, %v2725, 0.0
        %2730 = vadd.xlane.f32.xlu0 %v2729
        %v2731 = vpop.xlane.xlu0 %2730
        %v2732 = vrcp.pop %v2728
        %v2733 = vrcp.pop %v2731
        %v2734 = vmul.f32 %v2723, %v2732
        %v2735 = vmul.f32 %v2725, %v2733
        %2736 = vrot.lane.b32.xlu0 %v2405, 56
        %v2737 = vpop.permute.xlu0 %2736
        %2738 = vrot.lane.b32.xlu0 %v2410, 56
        %v2739 = vpop.permute.xlu0 %2738
        %v2743 = vsel %vm1019, %v2734, 0
        %v2746 = vsel %vm1019, %v2735, 0
        %2748 = vmatprep.subr.mxu0 0.0
        %2749 = vmatpush1.msra.mxu0 %v2737
        %2750 = vmatprep.subr.mxu0 0.0
        %2751 = vmatpush1.msra.mxu0 %v2739
        %2752 = vmatprep.subr.mxu0 0.0
        %2753 = vmatpush1.msra.mxu0 0.0
        %2754 = vmatprep.subr.mxu0 0.0
        %2755 = vmatpush1.msra.mxu0 0.0
        %2756 = vmatprep.subr.mxu0 0.0
        %2757 = vmatpush1.msra.mxu0 0.0
        %2758 = vmatprep.subr.mxu0 0.0
        %2759 = vmatpush1.msra.mxu0 0.0
        %2760 = vmatprep.subr.mxu0 0.0
        %2761 = vmatpush1.msra.mxu0 0.0
        %2762 = vmatprep.subr.mxu0 0.0
        %2763 = vmatpush1.msra.mxu0 0.0
        %2764 = vmatprep.subr.mxu0 0.0
        %2765 = vmatpush1.msra.mxu0 0.0
        %2766 = vmatprep.subr.mxu0 0.0
        %2767 = vmatpush1.msra.mxu0 0.0
        %2768 = vmatprep.subr.mxu0 0.0
        %2769 = vmatpush1.msra.mxu0 0.0
        %2770 = vmatprep.subr.mxu0 0.0
        %2771 = vmatpush1.msra.mxu0 0.0
        %2772 = vmatprep.subr.mxu0 0.0
        %2773 = vmatpush1.msra.mxu0 0.0
        %2774 = vmatprep.subr.mxu0 0.0
        %2775 = vmatpush1.msra.mxu0 0.0
        %2776 = vmatprep.subr.mxu0 0.0
        %2777 = vmatpush1.msra.mxu0 0.0
        %2778 = vmatprep.subr.mxu0 0.0
        %2779 = vmatpush1.msra.mxu0 0.0
        %2780 = vmatprep.subr.mxu0 0.0
        %2781 = vmatpush1.msra.mxu0 0.0
        %2782 = vmatprep.subr.mxu0 0.0
        %2783 = vmatpush1.msra.mxu0 0.0
        %2784 = vmatprep.subr.mxu0 0.0
        %2785 = vmatpush1.msra.mxu0 0.0
        %2786 = vmatprep.subr.mxu0 0.0
        %2787 = vmatpush1.msra.mxu0 0.0
        %2788 = vmatprep.subr.mxu0 0.0
        %2789 = vmatpush1.msra.mxu0 0.0
        %2790 = vmatprep.subr.mxu0 0.0
        %2791 = vmatpush1.msra.mxu0 0.0
        %2792 = vmatprep.subr.mxu0 0.0
        %2793 = vmatpush1.msra.mxu0 0.0
        %2794 = vmatprep.subr.mxu0 0.0
        %2795 = vmatpush1.msra.mxu0 0.0
        %2796 = vmatprep.subr.mxu0 0.0
        %2797 = vmatpush1.msra.mxu0 0.0
        %2798 = vmatprep.subr.mxu0 0.0
        %2799 = vmatpush1.msra.mxu0 0.0
        %2800 = vmatprep.subr.mxu0 0.0
        %2801 = vmatpush1.msra.mxu0 0.0
        %2802 = vmatprep.subr.mxu0 0.0
        %2803 = vmatpush1.msra.mxu0 0.0
        %2804 = vmatprep.subr.mxu0 0.0
        %2805 = vmatpush1.msra.mxu0 0.0
        %2806 = vmatprep.subr.mxu0 0.0
        %2807 = vmatpush1.msra.mxu0 0.0
        %2808 = vmatprep.subr.mxu0 0.0
        %2809 = vmatpush1.msra.mxu0 0.0
        %2810 = vmatprep.subr.mxu0 0.0
        %2811 = vmatpush1.msra.mxu0 0.0
        %2812 = vmatprep.mubr.f32.mxu0 0.0
        %2813 = vmatmul.mubr.f32.gmra.mrb[0].mxu0 %v2743
        %v2814 = vpop.f32.mrb[0].mxu0
        %v2815 = vadd.f32 0.0, %v2814
        %v2816 = vpop.f32.mrb[0].mxu0
        %2817 = vmatprep.mubr.f32.mxu0 0.0
        %2818 = vmatmul.mubr.f32.gmra.mrb[0].mxu0 %v2746
        %v2819 = vpop.f32.mrb[0].mxu0
        %v2820 = vadd.f32 0.0, %v2819
        %v2821 = vpop.f32.mrb[0].mxu0
        %2822 = vdwg.mxu0
        %v2824 = vsel %vm931, %v2815, 0
        %v2827 = vsel %vm931, %v2820, 0
        %2829 = vmatprep.subr.mxu0 0.0
        %2830 = vmatpush1.msra.mxu0 %v2414
        %2831 = vmatprep.subr.mxu0 0.0
        %2832 = vmatpush1.msra.mxu0 0.0
        %2833 = vmatprep.subr.mxu0 0.0
        %2834 = vmatpush1.msra.mxu0 0.0
        %2835 = vmatprep.subr.mxu0 0.0
        %2836 = vmatpush1.msra.mxu0 0.0
        %2837 = vmatprep.subr.mxu0 0.0
        %2838 = vmatpush1.msra.mxu0 0.0
        %2839 = vmatprep.subr.mxu0 0.0
        %2840 = vmatpush1.msra.mxu0 0.0
        %2841 = vmatprep.subr.mxu0 0.0
        %2842 = vmatpush1.msra.mxu0 0.0
        %2843 = vmatprep.subr.mxu0 0.0
        %2844 = vmatpush1.msra.mxu0 0.0
        %2845 = vmatprep.subr.mxu0 0.0
        %2846 = vmatpush1.msra.mxu0 0.0
        %2847 = vmatprep.subr.mxu0 0.0
        %2848 = vmatpush1.msra.mxu0 0.0
        %2849 = vmatprep.subr.mxu0 0.0
        %2850 = vmatpush1.msra.mxu0 0.0
        %2851 = vmatprep.subr.mxu0 0.0
        %2852 = vmatpush1.msra.mxu0 0.0
        %2853 = vmatprep.subr.mxu0 0.0
        %2854 = vmatpush1.msra.mxu0 0.0
        %2855 = vmatprep.subr.mxu0 0.0
        %2856 = vmatpush1.msra.mxu0 0.0
        %2857 = vmatprep.subr.mxu0 0.0
        %2858 = vmatpush1.msra.mxu0 0.0
        %2859 = vmatprep.subr.mxu0 0.0
        %2860 = vmatpush1.msra.mxu0 0.0
        %2861 = vmatprep.subr.mxu0 0.0
        %2862 = vmatpush1.msra.mxu0 0.0
        %2863 = vmatprep.subr.mxu0 0.0
        %2864 = vmatpush1.msra.mxu0 0.0
        %2865 = vmatprep.subr.mxu0 0.0
        %2866 = vmatpush1.msra.mxu0 0.0
        %2867 = vmatprep.subr.mxu0 0.0
        %2868 = vmatpush1.msra.mxu0 0.0
        %2869 = vmatprep.subr.mxu0 0.0
        %2870 = vmatpush1.msra.mxu0 0.0
        %2871 = vmatprep.subr.mxu0 0.0
        %2872 = vmatpush1.msra.mxu0 0.0
        %2873 = vmatprep.subr.mxu0 0.0
        %2874 = vmatpush1.msra.mxu0 0.0
        %2875 = vmatprep.subr.mxu0 0.0
        %2876 = vmatpush1.msra.mxu0 0.0
        %2877 = vmatprep.subr.mxu0 0.0
        %2878 = vmatpush1.msra.mxu0 0.0
        %2879 = vmatprep.subr.mxu0 0.0
        %2880 = vmatpush1.msra.mxu0 0.0
        %2881 = vmatprep.subr.mxu0 0.0
        %2882 = vmatpush1.msra.mxu0 0.0
        %2883 = vmatprep.subr.mxu0 0.0
        %2884 = vmatpush1.msra.mxu0 0.0
        %2885 = vmatprep.subr.mxu0 0.0
        %2886 = vmatpush1.msra.mxu0 0.0
        %2887 = vmatprep.subr.mxu0 0.0
        %2888 = vmatpush1.msra.mxu0 0.0
        %2889 = vmatprep.subr.mxu0 0.0
        %2890 = vmatpush1.msra.mxu0 0.0
        %2891 = vmatprep.subr.mxu0 0.0
        %2892 = vmatpush1.msra.mxu0 0.0
        %2893 = vmatprep.mubr.f32.mxu0 0.0
        %2894 = vmatmul.mubr.f32.gmra.mrb[0].mxu0 %v2824
        %v2895 = vpop.f32.mrb[0].mxu0
        %v2896 = vadd.f32 0.0, %v2895
        %v2897 = vpop.f32.mrb[0].mxu0
        %2898 = vmatprep.mubr.f32.mxu0 0.0
        %2899 = vmatmul.mubr.f32.gmra.mrb[0].mxu0 %v2827
        %v2900 = vpop.f32.mrb[0].mxu0
        %v2901 = vadd.f32 0.0, %v2900
        %v2902 = vpop.f32.mrb[0].mxu0
        %2903 = vdwg.mxu0
        %v2905 = vsel %vm931, %v2611, 0
        %v2908 = vsel %vm931, %v2616, 0
        %2910 = vmatprep.subr.mxu0 0.0
        %2911 = vmatpush1.msra.mxu0 %v2413
        %2912 = vmatprep.subr.mxu0 0.0
        %2913 = vmatpush1.msra.mxu0 0.0
        %2914 = vmatprep.subr.mxu0 0.0
        %2915 = vmatpush1.msra.mxu0 0.0
        %2916 = vmatprep.subr.mxu0 0.0
        %2917 = vmatpush1.msra.mxu0 0.0
        %2918 = vmatprep.subr.mxu0 0.0
        %2919 = vmatpush1.msra.mxu0 0.0
        %2920 = vmatprep.subr.mxu0 0.0
        %2921 = vmatpush1.msra.mxu0 0.0
        %2922 = vmatprep.subr.mxu0 0.0
        %2923 = vmatpush1.msra.mxu0 0.0
        %2924 = vmatprep.subr.mxu0 0.0
        %2925 = vmatpush1.msra.mxu0 0.0
        %2926 = vmatprep.subr.mxu0 0.0
        %2927 = vmatpush1.msra.mxu0 0.0
        %2928 = vmatprep.subr.mxu0 0.0
        %2929 = vmatpush1.msra.mxu0 0.0
        %2930 = vmatprep.subr.mxu0 0.0
        %2931 = vmatpush1.msra.mxu0 0.0
        %2932 = vmatprep.subr.mxu0 0.0
        %2933 = vmatpush1.msra.mxu0 0.0
        %2934 = vmatprep.subr.mxu0 0.0
        %2935 = vmatpush1.msra.mxu0 0.0
        %2936 = vmatprep.subr.mxu0 0.0
        %2937 = vmatpush1.msra.mxu0 0.0
        %2938 = vmatprep.subr.mxu0 0.0
        %2939 = vmatpush1.msra.mxu0 0.0
        %2940 = vmatprep.subr.mxu0 0.0
        %2941 = vmatpush1.msra.mxu0 0.0
        %2942 = vmatprep.subr.mxu0 0.0
        %2943 = vmatpush1.msra.mxu0 0.0
        %2944 = vmatprep.subr.mxu0 0.0
        %2945 = vmatpush1.msra.mxu0 0.0
        %2946 = vmatprep.subr.mxu0 0.0
        %2947 = vmatpush1.msra.mxu0 0.0
        %2948 = vmatprep.subr.mxu0 0.0
        %2949 = vmatpush1.msra.mxu0 0.0
        %2950 = vmatprep.subr.mxu0 0.0
        %2951 = vmatpush1.msra.mxu0 0.0
        %2952 = vmatprep.subr.mxu0 0.0
        %2953 = vmatpush1.msra.mxu0 0.0
        %2954 = vmatprep.subr.mxu0 0.0
        %2955 = vmatpush1.msra.mxu0 0.0
        %2956 = vmatprep.subr.mxu0 0.0
        %2957 = vmatpush1.msra.mxu0 0.0
        %2958 = vmatprep.subr.mxu0 0.0
        %2959 = vmatpush1.msra.mxu0 0.0
        %2960 = vmatprep.subr.mxu0 0.0
        %2961 = vmatpush1.msra.mxu0 0.0
        %2962 = vmatprep.subr.mxu0 0.0
        %2963 = vmatpush1.msra.mxu0 0.0
        %2964 = vmatprep.subr.mxu0 0.0
        %2965 = vmatpush1.msra.mxu0 0.0
        %2966 = vmatprep.subr.mxu0 0.0
        %2967 = vmatpush1.msra.mxu0 0.0
        %2968 = vmatprep.subr.mxu0 0.0
        %2969 = vmatpush1.msra.mxu0 0.0
        %2970 = vmatprep.subr.mxu0 0.0
        %2971 = vmatpush1.msra.mxu0 0.0
        %2972 = vmatprep.subr.mxu0 0.0
        %2973 = vmatpush1.msra.mxu0 0.0
        %2974 = vmatprep.mubr.f32.mxu0 0.0
        %2975 = vmatmul.mubr.f32.gmra.mrb[0].mxu0 %v2905
        %v2976 = vpop.f32.mrb[0].mxu0
        %v2977 = vadd.f32 %v2896, %v2976
        %v2978 = vpop.f32.mrb[0].mxu0
        %2979 = vmatprep.mubr.f32.mxu0 0.0
        %2980 = vmatmul.mubr.f32.gmra.mrb[0].mxu0 %v2908
        %v2981 = vpop.f32.mrb[0].mxu0
        %v2982 = vadd.f32 %v2901, %v2981
        %v2983 = vpop.f32.mrb[0].mxu0
        %2984 = vdwg.mxu0
        %2985 = vrot.lane.b32.xlu0 %v2405, 112
        %v2986 = vpop.permute.xlu0 %2985
        %2987 = vrot.lane.b32.xlu0 %v2410, 112
        %v2988 = vpop.permute.xlu0 %2987
        %2989 = vrot.lane.b32.xlu0 %v2405, 80
        %v2990 = vpop.permute.xlu0 %2989
        %2991 = vrot.lane.b32.xlu0 %v2410, 80
        %v2992 = vpop.permute.xlu0 %2991
        %v2993 = vsel %vm931, %v2986, 0
        %v2995 = vsel %vm931, %v2988, 0
        %v2997 = vsel %vm931, %v2990, 0
        %v2999 = vsel %vm931, %v2992, 0
        %3001 = vmatprep.subr.mxu0 0.0
        %3002 = vmatpush1.xpose.msra.mxu0 %v2997
        %3003 = vmatprep.subr.mxu0 0.0
        %3004 = vmatpush1.xpose.msra.mxu0 %v2999
        %3005 = vmatprep.subr.mxu0 0.0
        %3006 = vmatpush1.xpose.msra.mxu0 0.0
        %3007 = vmatprep.subr.mxu0 0.0
        %3008 = vmatpush1.xpose.msra.mxu0 0.0
        %3009 = vmatprep.subr.mxu0 0.0
        %3010 = vmatpush1.xpose.msra.mxu0 0.0
        %3011 = vmatprep.subr.mxu0 0.0
        %3012 = vmatpush1.xpose.msra.mxu0 0.0
        %3013 = vmatprep.subr.mxu0 0.0
        %3014 = vmatpush1.xpose.msra.mxu0 0.0
        %3015 = vmatprep.subr.mxu0 0.0
        %3016 = vmatpush1.xpose.msra.mxu0 0.0
        %3017 = vmatprep.subr.mxu0 0.0
        %3018 = vmatpush1.xpose.msra.mxu0 0.0
        %3019 = vmatprep.subr.mxu0 0.0
        %3020 = vmatpush1.xpose.msra.mxu0 0.0
        %3021 = vmatprep.subr.mxu0 0.0
        %3022 = vmatpush1.xpose.msra.mxu0 0.0
        %3023 = vmatprep.subr.mxu0 0.0
        %3024 = vmatpush1.xpose.msra.mxu0 0.0
        %3025 = vmatprep.subr.mxu0 0.0
        %3026 = vmatpush1.xpose.msra.mxu0 0.0
        %3027 = vmatprep.subr.mxu0 0.0
        %3028 = vmatpush1.xpose.msra.mxu0 0.0
        %3029 = vmatprep.subr.mxu0 0.0
        %3030 = vmatpush1.xpose.msra.mxu0 0.0
        %3031 = vmatprep.subr.mxu0 0.0
        %3032 = vmatpush1.xpose.msra.mxu0 0.0
        %3033 = vmatprep.subr.mxu0 0.0
        %3034 = vmatpush1.xpose.msra.mxu0 0.0
        %3035 = vmatprep.subr.mxu0 0.0
        %3036 = vmatpush1.xpose.msra.mxu0 0.0
        %3037 = vmatprep.subr.mxu0 0.0
        %3038 = vmatpush1.xpose.msra.mxu0 0.0
        %3039 = vmatprep.subr.mxu0 0.0
        %3040 = vmatpush1.xpose.msra.mxu0 0.0
        %3041 = vmatprep.subr.mxu0 0.0
        %3042 = vmatpush1.xpose.msra.mxu0 0.0
        %3043 = vmatprep.subr.mxu0 0.0
        %3044 = vmatpush1.xpose.msra.mxu0 0.0
        %3045 = vmatprep.subr.mxu0 0.0
        %3046 = vmatpush1.xpose.msra.mxu0 0.0
        %3047 = vmatprep.subr.mxu0 0.0
        %3048 = vmatpush1.xpose.msra.mxu0 0.0
        %3049 = vmatprep.subr.mxu0 0.0
        %3050 = vmatpush1.xpose.msra.mxu0 0.0
        %3051 = vmatprep.subr.mxu0 0.0
        %3052 = vmatpush1.xpose.msra.mxu0 0.0
        %3053 = vmatprep.subr.mxu0 0.0
        %3054 = vmatpush1.xpose.msra.mxu0 0.0
        %3055 = vmatprep.subr.mxu0 0.0
        %3056 = vmatpush1.xpose.msra.mxu0 0.0
        %3057 = vmatprep.subr.mxu0 0.0
        %3058 = vmatpush1.xpose.msra.mxu0 0.0
        %3059 = vmatprep.subr.mxu0 0.0
        %3060 = vmatpush1.xpose.msra.mxu0 0.0
        %3061 = vmatprep.subr.mxu0 0.0
        %3062 = vmatpush1.xpose.msra.mxu0 0.0
        %3063 = vmatprep.subr.mxu0 0.0
        %3064 = vmatpush1.xpose.msra.mxu0 0.0
        %3065 = vmatprep.mubr.f32.mxu0 0.0
        %3066 = vmatmul.mubr.f32.gmra.mrb[0].mxu0 %v2993
        %v3067 = vpop.f32.mrb[0].mxu0
        %v3068 = vadd.f32 0.0, %v3067
        %v3069 = vpop.f32.mrb[0].mxu0
        %3070 = vmatprep.mubr.f32.mxu0 0.0
        %3071 = vmatmul.mubr.f32.gmra.mrb[0].mxu0 %v2995
        %v3072 = vpop.f32.mrb[0].mxu0
        %v3073 = vadd.f32 0.0, %v3072
        %v3074 = vpop.f32.mrb[0].mxu0
        %3075 = vdwg.mxu0
        %v3076 = vmul.f32 %v3068, 0.35355338
        %v3077 = vmul.f32 %v3073, 0.35355338
        %v3078 = vadd.f32 %v3076, %v802
        %v3079 = vadd.f32 %v3077, %v803
        %v3080 = vsel %vm1019, %v3078, -inf
        %3081 = vmax.xlane.f32.xlu0 %v3080
        %v3082 = vpop.xlane.xlu0 %3081
        %v3083 = vsel %vm1019, %v3079, -inf
        %3084 = vmax.xlane.f32.xlu0 %v3083
        %v3085 = vpop.xlane.xlu0 %3084
        %v3086 = vsub.f32 %v3078, %v3082
        %v3087 = vsub.f32 %v3079, %v3085
        %v3088 = vmul.f32 %v3086, 1.442695
        %v3089 = vpow.pop %v3088
        %v3090 = vmul.f32 %v3087, 1.442695
        %v3091 = vpow.pop %v3090
        %v3092 = vsel %vm1019, %v3089, 0.0
        %3093 = vadd.xlane.f32.xlu0 %v3092
        %v3094 = vpop.xlane.xlu0 %3093
        %v3095 = vsel %vm1019, %v3091, 0.0
        %3096 = vadd.xlane.f32.xlu0 %v3095
        %v3097 = vpop.xlane.xlu0 %3096
        %v3098 = vrcp.pop %v3094
        %v3099 = vrcp.pop %v3097
        %v3100 = vmul.f32 %v3089, %v3098
        %v3101 = vmul.f32 %v3091, %v3099
        %3102 = vrot.lane.b32.xlu0 %v2405, 48
        %v3103 = vpop.permute.xlu0 %3102
        %3104 = vrot.lane.b32.xlu0 %v2410, 48
        %v3105 = vpop.permute.xlu0 %3104
        %v3109 = vsel %vm1019, %v3100, 0
        %v3112 = vsel %vm1019, %v3101, 0
        %3114 = vmatprep.subr.mxu0 0.0
        %3115 = vmatpush1.msra.mxu0 %v3103
        %3116 = vmatprep.subr.mxu0 0.0
        %3117 = vmatpush1.msra.mxu0 %v3105
        %3118 = vmatprep.subr.mxu0 0.0
        %3119 = vmatpush1.msra.mxu0 0.0
        %3120 = vmatprep.subr.mxu0 0.0
        %3121 = vmatpush1.msra.mxu0 0.0
        %3122 = vmatprep.subr.mxu0 0.0
        %3123 = vmatpush1.msra.mxu0 0.0
        %3124 = vmatprep.subr.mxu0 0.0
        %3125 = vmatpush1.msra.mxu0 0.0
        %3126 = vmatprep.subr.mxu0 0.0
        %3127 = vmatpush1.msra.mxu0 0.0
        %3128 = vmatprep.subr.mxu0 0.0
        %3129 = vmatpush1.msra.mxu0 0.0
        %3130 = vmatprep.subr.mxu0 0.0
        %3131 = vmatpush1.msra.mxu0 0.0
        %3132 = vmatprep.subr.mxu0 0.0
        %3133 = vmatpush1.msra.mxu0 0.0
        %3134 = vmatprep.subr.mxu0 0.0
        %3135 = vmatpush1.msra.mxu0 0.0
        %3136 = vmatprep.subr.mxu0 0.0
        %3137 = vmatpush1.msra.mxu0 0.0
        %3138 = vmatprep.subr.mxu0 0.0
        %3139 = vmatpush1.msra.mxu0 0.0
        %3140 = vmatprep.subr.mxu0 0.0
        %3141 = vmatpush1.msra.mxu0 0.0
        %3142 = vmatprep.subr.mxu0 0.0
        %3143 = vmatpush1.msra.mxu0 0.0
        %3144 = vmatprep.subr.mxu0 0.0
        %3145 = vmatpush1.msra.mxu0 0.0
        %3146 = vmatprep.subr.mxu0 0.0
        %3147 = vmatpush1.msra.mxu0 0.0
        %3148 = vmatprep.subr.mxu0 0.0
        %3149 = vmatpush1.msra.mxu0 0.0
        %3150 = vmatprep.subr.mxu0 0.0
        %3151 = vmatpush1.msra.mxu0 0.0
        %3152 = vmatprep.subr.mxu0 0.0
        %3153 = vmatpush1.msra.mxu0 0.0
        %3154 = vmatprep.subr.mxu0 0.0
        %3155 = vmatpush1.msra.mxu0 0.0
        %3156 = vmatprep.subr.mxu0 0.0
        %3157 = vmatpush1.msra.mxu0 0.0
        %3158 = vmatprep.subr.mxu0 0.0
        %3159 = vmatpush1.msra.mxu0 0.0
        %3160 = vmatprep.subr.mxu0 0.0
        %3161 = vmatpush1.msra.mxu0 0.0
        %3162 = vmatprep.subr.mxu0 0.0
        %3163 = vmatpush1.msra.mxu0 0.0
        %3164 = vmatprep.subr.mxu0 0.0
        %3165 = vmatpush1.msra.mxu0 0.0
        %3166 = vmatprep.subr.mxu0 0.0
        %3167 = vmatpush1.msra.mxu0 0.0
        %3168 = vmatprep.subr.mxu0 0.0
        %3169 = vmatpush1.msra.mxu0 0.0
        %3170 = vmatprep.subr.mxu0 0.0
        %3171 = vmatpush1.msra.mxu0 0.0
        %3172 = vmatprep.subr.mxu0 0.0
        %3173 = vmatpush1.msra.mxu0 0.0
        %3174 = vmatprep.subr.mxu0 0.0
        %3175 = vmatpush1.msra.mxu0 0.0
        %3176 = vmatprep.subr.mxu0 0.0
        %3177 = vmatpush1.msra.mxu0 0.0
        %3178 = vmatprep.mubr.f32.mxu0 0.0
        %3179 = vmatmul.mubr.f32.gmra.mrb[0].mxu0 %v3109
        %v3180 = vpop.f32.mrb[0].mxu0
        %v3181 = vadd.f32 0.0, %v3180
        %v3182 = vpop.f32.mrb[0].mxu0
        %3183 = vmatprep.mubr.f32.mxu0 0.0
        %3184 = vmatmul.mubr.f32.gmra.mrb[0].mxu0 %v3112
        %v3185 = vpop.f32.mrb[0].mxu0
        %v3186 = vadd.f32 0.0, %v3185
        %v3187 = vpop.f32.mrb[0].mxu0
        %3188 = vdwg.mxu0
        %v3190 = vsel %vm931, %v3181, 0
        %v3193 = vsel %vm931, %v3186, 0
        %3195 = vmatprep.subr.mxu0 0.0
        %3196 = vmatpush1.msra.mxu0 %v2415
        %3197 = vmatprep.subr.mxu0 0.0
        %3198 = vmatpush1.msra.mxu0 0.0
        %3199 = vmatprep.subr.mxu0 0.0
        %3200 = vmatpush1.msra.mxu0 0.0
        %3201 = vmatprep.subr.mxu0 0.0
        %3202 = vmatpush1.msra.mxu0 0.0
        %3203 = vmatprep.subr.mxu0 0.0
        %3204 = vmatpush1.msra.mxu0 0.0
        %3205 = vmatprep.subr.mxu0 0.0
        %3206 = vmatpush1.msra.mxu0 0.0
        %3207 = vmatprep.subr.mxu0 0.0
        %3208 = vmatpush1.msra.mxu0 0.0
        %3209 = vmatprep.subr.mxu0 0.0
        %3210 = vmatpush1.msra.mxu0 0.0
        %3211 = vmatprep.subr.mxu0 0.0
        %3212 = vmatpush1.msra.mxu0 0.0
        %3213 = vmatprep.subr.mxu0 0.0
        %3214 = vmatpush1.msra.mxu0 0.0
        %3215 = vmatprep.subr.mxu0 0.0
        %3216 = vmatpush1.msra.mxu0 0.0
        %3217 = vmatprep.subr.mxu0 0.0
        %3218 = vmatpush1.msra.mxu0 0.0
        %3219 = vmatprep.subr.mxu0 0.0
        %3220 = vmatpush1.msra.mxu0 0.0
        %3221 = vmatprep.subr.mxu0 0.0
        %3222 = vmatpush1.msra.mxu0 0.0
        %3223 = vmatprep.subr.mxu0 0.0
        %3224 = vmatpush1.msra.mxu0 0.0
        %3225 = vmatprep.subr.mxu0 0.0
        %3226 = vmatpush1.msra.mxu0 0.0
        %3227 = vmatprep.subr.mxu0 0.0
        %3228 = vmatpush1.msra.mxu0 0.0
        %3229 = vmatprep.subr.mxu0 0.0
        %3230 = vmatpush1.msra.mxu0 0.0
        %3231 = vmatprep.subr.mxu0 0.0
        %3232 = vmatpush1.msra.mxu0 0.0
        %3233 = vmatprep.subr.mxu0 0.0
        %3234 = vmatpush1.msra.mxu0 0.0
        %3235 = vmatprep.subr.mxu0 0.0
        %3236 = vmatpush1.msra.mxu0 0.0
        %3237 = vmatprep.subr.mxu0 0.0
        %3238 = vmatpush1.msra.mxu0 0.0
        %3239 = vmatprep.subr.mxu0 0.0
        %3240 = vmatpush1.msra.mxu0 0.0
        %3241 = vmatprep.subr.mxu0 0.0
        %3242 = vmatpush1.msra.mxu0 0.0
        %3243 = vmatprep.subr.mxu0 0.0
        %3244 = vmatpush1.msra.mxu0 0.0
        %3245 = vmatprep.subr.mxu0 0.0
        %3246 = vmatpush1.msra.mxu0 0.0
        %3247 = vmatprep.subr.mxu0 0.0
        %3248 = vmatpush1.msra.mxu0 0.0
        %3249 = vmatprep.subr.mxu0 0.0
        %3250 = vmatpush1.msra.mxu0 0.0
        %3251 = vmatprep.subr.mxu0 0.0
        %3252 = vmatpush1.msra.mxu0 0.0
        %3253 = vmatprep.subr.mxu0 0.0
        %3254 = vmatpush1.msra.mxu0 0.0
        %3255 = vmatprep.subr.mxu0 0.0
        %3256 = vmatpush1.msra.mxu0 0.0
        %3257 = vmatprep.subr.mxu0 0.0
        %3258 = vmatpush1.msra.mxu0 0.0
        %3259 = vmatprep.mubr.f32.mxu0 0.0
        %3260 = vmatmul.mubr.f32.gmra.mrb[0].mxu0 %v3190
        %v3261 = vpop.f32.mrb[0].mxu0
        %v3262 = vadd.f32 0.0, %v3261
        %v3263 = vpop.f32.mrb[0].mxu0
        %3264 = vmatprep.mubr.f32.mxu0 0.0
        %3265 = vmatmul.mubr.f32.gmra.mrb[0].mxu0 %v3193
        %v3266 = vpop.f32.mrb[0].mxu0
        %v3267 = vadd.f32 0.0, %v3266
        %v3268 = vpop.f32.mrb[0].mxu0
        %3269 = vdwg.mxu0
        %v3270 = vadd.f32 %v2977, %v3262
        %v3271 = vadd.f32 %v2982, %v3267
        %3272 = vrot.lane.b32.xlu0 %v2405, 104
        %v3273 = vpop.permute.xlu0 %3272
        %3274 = vrot.lane.b32.xlu0 %v2410, 104
        %v3275 = vpop.permute.xlu0 %3274
        %3276 = vrot.lane.b32.xlu0 %v2405, 72
        %v3277 = vpop.permute.xlu0 %3276
        %3278 = vrot.lane.b32.xlu0 %v2410, 72
        %v3279 = vpop.permute.xlu0 %3278
        %v3280 = vsel %vm931, %v3273, 0
        %v3282 = vsel %vm931, %v3275, 0
        %v3284 = vsel %vm931, %v3277, 0
        %v3286 = vsel %vm931, %v3279, 0
        %3288 = vmatprep.subr.mxu0 0.0
        %3289 = vmatpush1.xpose.msra.mxu0 %v3284
        %3290 = vmatprep.subr.mxu0 0.0
        %3291 = vmatpush1.xpose.msra.mxu0 %v3286
        %3292 = vmatprep.subr.mxu0 0.0
        %3293 = vmatpush1.xpose.msra.mxu0 0.0
        %3294 = vmatprep.subr.mxu0 0.0
        %3295 = vmatpush1.xpose.msra.mxu0 0.0
        %3296 = vmatprep.subr.mxu0 0.0
        %3297 = vmatpush1.xpose.msra.mxu0 0.0
        %3298 = vmatprep.subr.mxu0 0.0
        %3299 = vmatpush1.xpose.msra.mxu0 0.0
        %3300 = vmatprep.subr.mxu0 0.0
        %3301 = vmatpush1.xpose.msra.mxu0 0.0
        %3302 = vmatprep.subr.mxu0 0.0
        %3303 = vmatpush1.xpose.msra.mxu0 0.0
        %3304 = vmatprep.subr.mxu0 0.0
        %3305 = vmatpush1.xpose.msra.mxu0 0.0
        %3306 = vmatprep.subr.mxu0 0.0
        %3307 = vmatpush1.xpose.msra.mxu0 0.0
        %3308 = vmatprep.subr.mxu0 0.0
        %3309 = vmatpush1.xpose.msra.mxu0 0.0
        %3310 = vmatprep.subr.mxu0 0.0
        %3311 = vmatpush1.xpose.msra.mxu0 0.0
        %3312 = vmatprep.subr.mxu0 0.0
        %3313 = vmatpush1.xpose.msra.mxu0 0.0
        %3314 = vmatprep.subr.mxu0 0.0
        %3315 = vmatpush1.xpose.msra.mxu0 0.0
        %3316 = vmatprep.subr.mxu0 0.0
        %3317 = vmatpush1.xpose.msra.mxu0 0.0
        %3318 = vmatprep.subr.mxu0 0.0
        %3319 = vmatpush1.xpose.msra.mxu0 0.0
        %3320 = vmatprep.subr.mxu0 0.0
        %3321 = vmatpush1.xpose.msra.mxu0 0.0
        %3322 = vmatprep.subr.mxu0 0.0
        %3323 = vmatpush1.xpose.msra.mxu0 0.0
        %3324 = vmatprep.subr.mxu0 0.0
        %3325 = vmatpush1.xpose.msra.mxu0 0.0
        %3326 = vmatprep.subr.mxu0 0.0
        %3327 = vmatpush1.xpose.msra.mxu0 0.0
        %3328 = vmatprep.subr.mxu0 0.0
        %3329 = vmatpush1.xpose.msra.mxu0 0.0
        %3330 = vmatprep.subr.mxu0 0.0
        %3331 = vmatpush1.xpose.msra.mxu0 0.0
        %3332 = vmatprep.subr.mxu0 0.0
        %3333 = vmatpush1.xpose.msra.mxu0 0.0
        %3334 = vmatprep.subr.mxu0 0.0
        %3335 = vmatpush1.xpose.msra.mxu0 0.0
        %3336 = vmatprep.subr.mxu0 0.0
        %3337 = vmatpush1.xpose.msra.mxu0 0.0
        %3338 = vmatprep.subr.mxu0 0.0
        %3339 = vmatpush1.xpose.msra.mxu0 0.0
        %3340 = vmatprep.subr.mxu0 0.0
        %3341 = vmatpush1.xpose.msra.mxu0 0.0
        %3342 = vmatprep.subr.mxu0 0.0
        %3343 = vmatpush1.xpose.msra.mxu0 0.0
        %3344 = vmatprep.subr.mxu0 0.0
        %3345 = vmatpush1.xpose.msra.mxu0 0.0
        %3346 = vmatprep.subr.mxu0 0.0
        %3347 = vmatpush1.xpose.msra.mxu0 0.0
        %3348 = vmatprep.subr.mxu0 0.0
        %3349 = vmatpush1.xpose.msra.mxu0 0.0
        %3350 = vmatprep.subr.mxu0 0.0
        %3351 = vmatpush1.xpose.msra.mxu0 0.0
        %3352 = vmatprep.mubr.f32.mxu0 0.0
        %3353 = vmatmul.mubr.f32.gmra.mrb[0].mxu0 %v3280
        %v3354 = vpop.f32.mrb[0].mxu0
        %v3355 = vadd.f32 0.0, %v3354
        %v3356 = vpop.f32.mrb[0].mxu0
        %3357 = vmatprep.mubr.f32.mxu0 0.0
        %3358 = vmatmul.mubr.f32.gmra.mrb[0].mxu0 %v3282
        %v3359 = vpop.f32.mrb[0].mxu0
        %v3360 = vadd.f32 0.0, %v3359
        %v3361 = vpop.f32.mrb[0].mxu0
        %3362 = vdwg.mxu0
        %v3363 = vmul.f32 %v3355, 0.35355338
        %v3364 = vmul.f32 %v3360, 0.35355338
        %v3365 = vadd.f32 %v3363, %v802
        %v3366 = vadd.f32 %v3364, %v803
        %v3367 = vsel %vm1019, %v3365, -inf
        %3368 = vmax.xlane.f32.xlu0 %v3367
        %v3369 = vpop.xlane.xlu0 %3368
        %v3370 = vsel %vm1019, %v3366, -inf
        %3371 = vmax.xlane.f32.xlu0 %v3370
        %v3372 = vpop.xlane.xlu0 %3371
        %v3373 = vsub.f32 %v3365, %v3369
        %v3374 = vsub.f32 %v3366, %v3372
        %v3375 = vmul.f32 %v3373, 1.442695
        %v3376 = vpow.pop %v3375
        %v3377 = vmul.f32 %v3374, 1.442695
        %v3378 = vpow.pop %v3377
        %v3379 = vsel %vm1019, %v3376, 0.0
        %3380 = vadd.xlane.f32.xlu0 %v3379
        %v3381 = vpop.xlane.xlu0 %3380
        %v3382 = vsel %vm1019, %v3378, 0.0
        %3383 = vadd.xlane.f32.xlu0 %v3382
        %v3384 = vpop.xlane.xlu0 %3383
        %v3385 = vrcp.pop %v3381
        %v3386 = vrcp.pop %v3384
        %v3387 = vmul.f32 %v3376, %v3385
        %v3388 = vmul.f32 %v3378, %v3386
        %3389 = vrot.lane.b32.xlu0 %v2405, 40
        %v3390 = vpop.permute.xlu0 %3389
        %3391 = vrot.lane.b32.xlu0 %v2410, 40
        %v3392 = vpop.permute.xlu0 %3391
        %v3396 = vsel %vm1019, %v3387, 0
        %v3399 = vsel %vm1019, %v3388, 0
        %3401 = vmatprep.subr.mxu0 0.0
        %3402 = vmatpush1.msra.mxu0 %v3390
        %3403 = vmatprep.subr.mxu0 0.0
        %3404 = vmatpush1.msra.mxu0 %v3392
        %3405 = vmatprep.subr.mxu0 0.0
        %3406 = vmatpush1.msra.mxu0 0.0
        %3407 = vmatprep.subr.mxu0 0.0
        %3408 = vmatpush1.msra.mxu0 0.0
        %3409 = vmatprep.subr.mxu0 0.0
        %3410 = vmatpush1.msra.mxu0 0.0
        %3411 = vmatprep.subr.mxu0 0.0
        %3412 = vmatpush1.msra.mxu0 0.0
        %3413 = vmatprep.subr.mxu0 0.0
        %3414 = vmatpush1.msra.mxu0 0.0
        %3415 = vmatprep.subr.mxu0 0.0
        %3416 = vmatpush1.msra.mxu0 0.0
        %3417 = vmatprep.subr.mxu0 0.0
        %3418 = vmatpush1.msra.mxu0 0.0
        %3419 = vmatprep.subr.mxu0 0.0
        %3420 = vmatpush1.msra.mxu0 0.0
        %3421 = vmatprep.subr.mxu0 0.0
        %3422 = vmatpush1.msra.mxu0 0.0
        %3423 = vmatprep.subr.mxu0 0.0
        %3424 = vmatpush1.msra.mxu0 0.0
        %3425 = vmatprep.subr.mxu0 0.0
        %3426 = vmatpush1.msra.mxu0 0.0
        %3427 = vmatprep.subr.mxu0 0.0
        %3428 = vmatpush1.msra.mxu0 0.0
        %3429 = vmatprep.subr.mxu0 0.0
        %3430 = vmatpush1.msra.mxu0 0.0
        %3431 = vmatprep.subr.mxu0 0.0
        %3432 = vmatpush1.msra.mxu0 0.0
        %3433 = vmatprep.subr.mxu0 0.0
        %3434 = vmatpush1.msra.mxu0 0.0
        %3435 = vmatprep.subr.mxu0 0.0
        %3436 = vmatpush1.msra.mxu0 0.0
        %3437 = vmatprep.subr.mxu0 0.0
        %3438 = vmatpush1.msra.mxu0 0.0
        %3439 = vmatprep.subr.mxu0 0.0
        %3440 = vmatpush1.msra.mxu0 0.0
        %3441 = vmatprep.subr.mxu0 0.0
        %3442 = vmatpush1.msra.mxu0 0.0
        %3443 = vmatprep.subr.mxu0 0.0
        %3444 = vmatpush1.msra.mxu0 0.0
        %3445 = vmatprep.subr.mxu0 0.0
        %3446 = vmatpush1.msra.mxu0 0.0
        %3447 = vmatprep.subr.mxu0 0.0
        %3448 = vmatpush1.msra.mxu0 0.0
        %3449 = vmatprep.subr.mxu0 0.0
        %3450 = vmatpush1.msra.mxu0 0.0
        %3451 = vmatprep.subr.mxu0 0.0
        %3452 = vmatpush1.msra.mxu0 0.0
        %3453 = vmatprep.subr.mxu0 0.0
        %3454 = vmatpush1.msra.mxu0 0.0
        %3455 = vmatprep.subr.mxu0 0.0
        %3456 = vmatpush1.msra.mxu0 0.0
        %3457 = vmatprep.subr.mxu0 0.0
        %3458 = vmatpush1.msra.mxu0 0.0
        %3459 = vmatprep.subr.mxu0 0.0
        %3460 = vmatpush1.msra.mxu0 0.0
        %3461 = vmatprep.subr.mxu0 0.0
        %3462 = vmatpush1.msra.mxu0 0.0
        %3463 = vmatprep.subr.mxu0 0.0
        %3464 = vmatpush1.msra.mxu0 0.0
        %3465 = vmatprep.mubr.f32.mxu0 0.0
        %3466 = vmatmul.mubr.f32.gmra.mrb[0].mxu0 %v3396
        %v3467 = vpop.f32.mrb[0].mxu0
        %v3468 = vadd.f32 0.0, %v3467
        %v3469 = vpop.f32.mrb[0].mxu0
        %3470 = vmatprep.mubr.f32.mxu0 0.0
        %3471 = vmatmul.mubr.f32.gmra.mrb[0].mxu0 %v3399
        %v3472 = vpop.f32.mrb[0].mxu0
        %v3473 = vadd.f32 0.0, %v3472
        %v3474 = vpop.f32.mrb[0].mxu0
        %3475 = vdwg.mxu0
        %v3477 = vsel %vm931, %v3468, 0
        %v3480 = vsel %vm931, %v3473, 0
        %3482 = vmatprep.subr.mxu0 0.0
        %3483 = vmatpush1.msra.mxu0 %v2416
        %3484 = vmatprep.subr.mxu0 0.0
        %3485 = vmatpush1.msra.mxu0 0.0
        %3486 = vmatprep.subr.mxu0 0.0
        %3487 = vmatpush1.msra.mxu0 0.0
        %3488 = vmatprep.subr.mxu0 0.0
        %3489 = vmatpush1.msra.mxu0 0.0
        %3490 = vmatprep.subr.mxu0 0.0
        %3491 = vmatpush1.msra.mxu0 0.0
        %3492 = vmatprep.subr.mxu0 0.0
        %3493 = vmatpush1.msra.mxu0 0.0
        %3494 = vmatprep.subr.mxu0 0.0
        %3495 = vmatpush1.msra.mxu0 0.0
        %3496 = vmatprep.subr.mxu0 0.0
        %3497 = vmatpush1.msra.mxu0 0.0
        %3498 = vmatprep.subr.mxu0 0.0
        %3499 = vmatpush1.msra.mxu0 0.0
        %3500 = vmatprep.subr.mxu0 0.0
        %3501 = vmatpush1.msra.mxu0 0.0
        %3502 = vmatprep.subr.mxu0 0.0
        %3503 = vmatpush1.msra.mxu0 0.0
        %3504 = vmatprep.subr.mxu0 0.0
        %3505 = vmatpush1.msra.mxu0 0.0
        %3506 = vmatprep.subr.mxu0 0.0
        %3507 = vmatpush1.msra.mxu0 0.0
        %3508 = vmatprep.subr.mxu0 0.0
        %3509 = vmatpush1.msra.mxu0 0.0
        %3510 = vmatprep.subr.mxu0 0.0
        %3511 = vmatpush1.msra.mxu0 0.0
        %3512 = vmatprep.subr.mxu0 0.0
        %3513 = vmatpush1.msra.mxu0 0.0
        %3514 = vmatprep.subr.mxu0 0.0
        %3515 = vmatpush1.msra.mxu0 0.0
        %3516 = vmatprep.subr.mxu0 0.0
        %3517 = vmatpush1.msra.mxu0 0.0
        %3518 = vmatprep.subr.mxu0 0.0
        %3519 = vmatpush1.msra.mxu0 0.0
        %3520 = vmatprep.subr.mxu0 0.0
        %3521 = vmatpush1.msra.mxu0 0.0
        %3522 = vmatprep.subr.mxu0 0.0
        %3523 = vmatpush1.msra.mxu0 0.0
        %3524 = vmatprep.subr.mxu0 0.0
        %3525 = vmatpush1.msra.mxu0 0.0
        %3526 = vmatprep.subr.mxu0 0.0
        %3527 = vmatpush1.msra.mxu0 0.0
        %3528 = vmatprep.subr.mxu0 0.0
        %3529 = vmatpush1.msra.mxu0 0.0
        %3530 = vmatprep.subr.mxu0 0.0
        %3531 = vmatpush1.msra.mxu0 0.0
        %3532 = vmatprep.subr.mxu0 0.0
        %3533 = vmatpush1.msra.mxu0 0.0
        %3534 = vmatprep.subr.mxu0 0.0
        %3535 = vmatpush1.msra.mxu0 0.0
        %3536 = vmatprep.subr.mxu0 0.0
        %3537 = vmatpush1.msra.mxu0 0.0
        %3538 = vmatprep.subr.mxu0 0.0
        %3539 = vmatpush1.msra.mxu0 0.0
        %3540 = vmatprep.subr.mxu0 0.0
        %3541 = vmatpush1.msra.mxu0 0.0
        %3542 = vmatprep.subr.mxu0 0.0
        %3543 = vmatpush1.msra.mxu0 0.0
        %3544 = vmatprep.subr.mxu0 0.0
        %3545 = vmatpush1.msra.mxu0 0.0
        %3546 = vmatprep.mubr.f32.mxu0 0.0
        %3547 = vmatmul.mubr.f32.gmra.mrb[0].mxu0 %v3477
        %v3548 = vpop.f32.mrb[0].mxu0
        %v3549 = vadd.f32 0.0, %v3548
        %v3550 = vpop.f32.mrb[0].mxu0
        %3551 = vmatprep.mubr.f32.mxu0 0.0
        %3552 = vmatmul.mubr.f32.gmra.mrb[0].mxu0 %v3480
        %v3553 = vpop.f32.mrb[0].mxu0
        %v3554 = vadd.f32 0.0, %v3553
        %v3555 = vpop.f32.mrb[0].mxu0
        %3556 = vdwg.mxu0
        %v3557 = vadd.f32 %v3270, %v3549
        %v3558 = vadd.f32 %v3271, %v3554
        %v3559 = vadd.f32 %v2294, %v3557
        %v3560 = vadd.f32 %v2295, %v3558
        %v3561 = vld [vmem:[%s5 + $0x26] ss:$0 sm:$0xff]
        %v3562 = vadd.f32 %v3559, %v3561
        %v3563 = vadd.f32 %v3560, %v3561
        %v3564 = vsel %vm475, %v3562, 0.0
        %3565 = vadd.xlane.f32.xlu0 %v3564
        %v3566 = vpop.xlane.xlu0 %3565
        %v3567 = vsel %vm475, %v3563, 0.0
        %3568 = vadd.xlane.f32.xlu0 %v3567
        %v3569 = vpop.xlane.xlu0 %3568
        %v3570 = vmul.f32 %v3566, %v482
        %v3571 = vmul.f32 %v3569, %v482
        %v3572 = vsub.f32 %v3562, %v3570
        %v3573 = vsub.f32 %v3563, %v3571
        %v3574 = vmul.f32 %v3572, %v3572
        %v3575 = vmul.f32 %v3573, %v3573
        %v3576 = vsel %vm475, %v3574, 0.0
        %3577 = vadd.xlane.f32.xlu0 %v3576
        %v3578 = vpop.xlane.xlu0 %3577
        %v3579 = vsel %vm475, %v3575, 0.0
        %3580 = vadd.xlane.f32.xlu0 %v3579
        %v3581 = vpop.xlane.xlu0 %3580
        %v3582 = vmul.f32 %v3578, %v482
        %v3583 = vmul.f32 %v3581, %v482
        %v3584 = vadd.f32 %v3582, 1e-05
        %v3585 = vadd.f32 %v3583, 1e-05
        %v3586 = vrsqrt.pop %v3584
        %v3587 = vrsqrt.pop %v3585
        %v3588 = vmul.f32 %v3572, %v3586
        %v3589 = vmul.f32 %v3573, %v3587
        %v3590 = vld [vmem:[%s5 + $0x27] ss:$0 sm:$0xff]
        %v3591 = vmul.f32 %v3588, %v3590
        %v3592 = vmul.f32 %v3589, %v3590
        %v3593 = vld [vmem:[%s5 + $0x30] ss:$0 sm:$0xff]
        %v3594 = vadd.f32 %v3591, %v3593
        %v3595 = vadd.f32 %v3592, %v3593
        %v3596 = vld [vmem:[%s6 + $0x1c8] sm:$0xff]
        %v3597 = vld [vmem:[%s6 + $0x1d0] sm:$0xff]
        %v3598 = vld [vmem:[%s6 + $0x1d8] sm:$0xff]
        %v3599 = vld [vmem:[%s6 + $0x1e0] sm:$0xff]
        %v3600 = vld [vmem:[%s5 + $0x31] ss:$0 sm:$0xff]
        %v3602 = vsel %vm475, %v3594, 0
        %v3605 = vsel %vm475, %v3595, 0
        %3607 = vmatprep.subr.mxu0 0.0
        %3608 = vmatpush1.msra.mxu0 %v3596
        %3609 = vmatprep.subr.mxu0 0.0
        %3610 = vmatpush1.msra.mxu0 %v3597
        %3611 = vmatprep.subr.mxu0 0.0
        %3612 = vmatpush1.msra.mxu0 %v3598
        %3613 = vmatprep.subr.mxu0 0.0
        %3614 = vmatpush1.msra.mxu0 %v3599
        %3615 = vmatprep.subr.mxu0 0.0
        %3616 = vmatpush1.msra.mxu0 0.0
        %3617 = vmatprep.subr.mxu0 0.0
        %3618 = vmatpush1.msra.mxu0 0.0
        %3619 = vmatprep.subr.mxu0 0.0
        %3620 = vmatpush1.msra.mxu0 0.0
        %3621 = vmatprep.subr.mxu0 0.0
        %3622 = vmatpush1.msra.mxu0 0.0
        %3623 = vmatprep.subr.mxu0 0.0
        %3624 = vmatpush1.msra.mxu0 0.0
        %3625 = vmatprep.subr.mxu0 0.0
        %3626 = vmatpush1.msra.mxu0 0.0
        %3627 = vmatprep.subr.mxu0 0.0
        %3628 = vmatpush1.msra.mxu0 0.0
        %3629 = vmatprep.subr.mxu0 0.0
        %3630 = vmatpush1.msra.mxu0 0.0
        %3631 = vmatprep.subr.mxu0 0.0
        %3632 = vmatpush1.msra.mxu0 0.0
        %3633 = vmatprep.subr.mxu0 0.0
        %3634 = vmatpush1.msra.mxu0 0.0
        %3635 = vmatprep.subr.mxu0 0.0
        %3636 = vmatpush1.msra.mxu0 0.0
        %3637 = vmatprep.subr.mxu0 0.0
        %3638 = vmatpush1.msra.mxu0 0.0
        %3639 = vmatprep.subr.mxu0 0.0
        %3640 = vmatpush1.msra.mxu0 0.0
        %3641 = vmatprep.subr.mxu0 0.0
        %3642 = vmatpush1.msra.mxu0 0.0
        %3643 = vmatprep.subr.mxu0 0.0
        %3644 = vmatpush1.msra.mxu0 0.0
        %3645 = vmatprep.subr.mxu0 0.0
        %3646 = vmatpush1.msra.mxu0 0.0
        %3647 = vmatprep.subr.mxu0 0.0
        %3648 = vmatpush1.msra.mxu0 0.0
        %3649 = vmatprep.subr.mxu0 0.0
        %3650 = vmatpush1.msra.mxu0 0.0
        %3651 = vmatprep.subr.mxu0 0.0
        %3652 = vmatpush1.msra.mxu0 0.0
        %3653 = vmatprep.subr.mxu0 0.0
        %3654 = vmatpush1.msra.mxu0 0.0
        %3655 = vmatprep.subr.mxu0 0.0
        %3656 = vmatpush1.msra.mxu0 0.0
        %3657 = vmatprep.subr.mxu0 0.0
        %3658 = vmatpush1.msra.mxu0 0.0
        %3659 = vmatprep.subr.mxu0 0.0
        %3660 = vmatpush1.msra.mxu0 0.0
        %3661 = vmatprep.subr.mxu0 0.0
        %3662 = vmatpush1.msra.mxu0 0.0
        %3663 = vmatprep.subr.mxu0 0.0
        %3664 = vmatpush1.msra.mxu0 0.0
        %3665 = vmatprep.subr.mxu0 0.0
        %3666 = vmatpush1.msra.mxu0 0.0
        %3667 = vmatprep.subr.mxu0 0.0
        %3668 = vmatpush1.msra.mxu0 0.0
        %3669 = vmatprep.subr.mxu0 0.0
        %3670 = vmatpush1.msra.mxu0 0.0
        %3671 = vmatprep.mubr.f32.mxu0 0.0
        %3672 = vmatmul.mubr.f32.gmra.mrb[0].mxu0 %v3602
        %v3673 = vpop.f32.mrb[0].mxu0
        %v3674 = vadd.f32 %v3600, %v3673
        %v3675 = vpop.f32.mrb[0].mxu0
        %3676 = vmatprep.mubr.f32.mxu0 0.0
        %3677 = vmatmul.mubr.f32.gmra.mrb[0].mxu0 %v3605
        %v3678 = vpop.f32.mrb[0].mxu0
        %v3679 = vadd.f32 %v3600, %v3678
        %v3680 = vpop.f32.mrb[0].mxu0
        %3681 = vdwg.mxu0
        %v3682 = vmul.f32 %v3674, 0.5
        %v3683 = vmul.f32 %v3679, 0.5
        %v3684 = vmul.f32 %v3674, 0.70710677
        %v3685 = vmul.f32 %v3679, 0.70710677
        %v3686 = verf.f32.pop %v3684
        %v3687 = verf.f32.pop %v3685
        %v3688 = vadd.f32 %v3686, 1.0
        %v3689 = vadd.f32 %v3687, 1.0
        %v3690 = vmul.f32 %v3682, %v3688
        %v3691 = vmul.f32 %v3683, %v3689
        %v3692 = vld [vmem:[%s6 + $0x1e8] sm:$0xff]
        %v3693 = vld [vmem:[%s6 + $0x1f0] sm:$0xff]
        %v3694 = vld [vmem:[%s6 + $0x1f8] sm:$0xff]
        %v3695 = vld [vmem:[%s6 + $0x200] sm:$0xff]
        %v3696 = vld [vmem:[%s6 + $0x208] sm:$0xff]
        %v3697 = vld [vmem:[%s6 + $0x210] sm:$0xff]
        %v3698 = vld [vmem:[%s6 + $0x218] sm:$0xff]
        %v3699 = vld [vmem:[%s6 + $0x220] sm:$0xff]
        %v3701 = vsel %vm298, %v3690, 0
        %v3704 = vsel %vm298, %v3691, 0
        %3706 = vmatprep.subr.mxu0 0.0
        %3707 = vmatpush1.msra.mxu0 %v3692
        %3708 = vmatprep.subr.mxu0 0.0
        %3709 = vmatpush1.msra.mxu0 %v3693
        %3710 = vmatprep.subr.mxu0 0.0
        %3711 = vmatpush1.msra.mxu0 %v3694
        %3712 = vmatprep.subr.mxu0 0.0
        %3713 = vmatpush1.msra.mxu0 %v3695
        %3714 = vmatprep.subr.mxu0 0.0
        %3715 = vmatpush1.msra.mxu0 %v3696
        %3716 = vmatprep.subr.mxu0 0.0
        %3717 = vmatpush1.msra.mxu0 %v3697
        %3718 = vmatprep.subr.mxu0 0.0
        %3719 = vmatpush1.msra.mxu0 %v3698
        %3720 = vmatprep.subr.mxu0 0.0
        %3721 = vmatpush1.msra.mxu0 %v3699
        %3722 = vmatprep.subr.mxu0 0.0
        %3723 = vmatpush1.msra.mxu0 0.0
        %3724 = vmatprep.subr.mxu0 0.0
        %3725 = vmatpush1.msra.mxu0 0.0
        %3726 = vmatprep.subr.mxu0 0.0
        %3727 = vmatpush1.msra.mxu0 0.0
        %3728 = vmatprep.subr.mxu0 0.0
        %3729 = vmatpush1.msra.mxu0 0.0
        %3730 = vmatprep.subr.mxu0 0.0
        %3731 = vmatpush1.msra.mxu0 0.0
        %3732 = vmatprep.subr.mxu0 0.0
        %3733 = vmatpush1.msra.mxu0 0.0
        %3734 = vmatprep.subr.mxu0 0.0
        %3735 = vmatpush1.msra.mxu0 0.0
        %3736 = vmatprep.subr.mxu0 0.0
        %3737 = vmatpush1.msra.mxu0 0.0
        %3738 = vmatprep.subr.mxu0 0.0
        %3739 = vmatpush1.msra.mxu0 0.0
        %3740 = vmatprep.subr.mxu0 0.0
        %3741 = vmatpush1.msra.mxu0 0.0
        %3742 = vmatprep.subr.mxu0 0.0
        %3743 = vmatpush1.msra.mxu0 0.0
        %3744 = vmatprep.subr.mxu0 0.0
        %3745 = vmatpush1.msra.mxu0 0.0
        %3746 = vmatprep.subr.mxu0 0.0
        %3747 = vmatpush1.msra.mxu0 0.0
        %3748 = vmatprep.subr.mxu0 0.0
        %3749 = vmatpush1.msra.mxu0 0.0
        %3750 = vmatprep.subr.mxu0 0.0
        %3751 = vmatpush1.msra.mxu0 0.0
        %3752 = vmatprep.subr.mxu0 0.0
        %3753 = vmatpush1.msra.mxu0 0.0
        %3754 = vmatprep.subr.mxu0 0.0
        %3755 = vmatpush1.msra.mxu0 0.0
        %3756 = vmatprep.subr.mxu0 0.0
        %3757 = vmatpush1.msra.mxu0 0.0
        %3758 = vmatprep.subr.mxu0 0.0
        %3759 = vmatpush1.msra.mxu0 0.0
        %3760 = vmatprep.subr.mxu0 0.0
        %3761 = vmatpush1.msra.mxu0 0.0
        %3762 = vmatprep.subr.mxu0 0.0
        %3763 = vmatpush1.msra.mxu0 0.0
        %3764 = vmatprep.subr.mxu0 0.0
        %3765 = vmatpush1.msra.mxu0 0.0
        %3766 = vmatprep.subr.mxu0 0.0
        %3767 = vmatpush1.msra.mxu0 0.0
        %3768 = vmatprep.subr.mxu0 0.0
        %3769 = vmatpush1.msra.mxu0 0.0
        %3770 = vmatprep.mubr.f32.mxu0 0.0
        %3771 = vmatmul.mubr.f32.gmra.mrb[0].mxu0 %v3701
        %v3772 = vpop.f32.mrb[0].mxu0
        %v3773 = vadd.f32 0.0, %v3772
        %v3774 = vpop.f32.mrb[0].mxu0
        %3775 = vmatprep.mubr.f32.mxu0 0.0
        %3776 = vmatmul.mubr.f32.gmra.mrb[0].mxu0 %v3704
        %v3777 = vpop.f32.mrb[0].mxu0
        %v3778 = vadd.f32 0.0, %v3777
        %v3779 = vpop.f32.mrb[0].mxu0
        %3780 = vdwg.mxu0
        %v3781 = vadd.f32 %v3562, %v3773
        %v3782 = vadd.f32 %v3563, %v3778
        %v3783 = vld [vmem:[%s5 + $0x32] ss:$0 sm:$0xff]
        %v3784 = vadd.f32 %v3781, %v3783
        %v3785 = vadd.f32 %v3782, %v3783
        %v3786 = vsel %vm475, %v3784, 0.0
        %3787 = vadd.xlane.f32.xlu0 %v3786
        %v3788 = vpop.xlane.xlu0 %3787
        %v3789 = vsel %vm475, %v3785, 0.0
        %3790 = vadd.xlane.f32.xlu0 %v3789
        %v3791 = vpop.xlane.xlu0 %3790
        %v3792 = vmul.f32 %v3788, %v482
        %v3793 = vmul.f32 %v3791, %v482
        %v3794 = vsub.f32 %v3784, %v3792
        %v3795 = vsub.f32 %v3785, %v3793
        %v3796 = vmul.f32 %v3794, %v3794
        %v3797 = vmul.f32 %v3795, %v3795
        %v3798 = vsel %vm475, %v3796, 0.0
        %3799 = vadd.xlane.f32.xlu0 %v3798
        %v3800 = vpop.xlane.xlu0 %3799
        %v3801 = vsel %vm475, %v3797, 0.0
        %3802 = vadd.xlane.f32.xlu0 %v3801
        %v3803 = vpop.xlane.xlu0 %3802
        %v3804 = vmul.f32 %v3800, %v482
        %v3805 = vmul.f32 %v3803, %v482
        %v3806 = vadd.f32 %v3804, 1e-05
        %v3807 = vadd.f32 %v3805, 1e-05
        %v3808 = vrsqrt.pop %v3806
        %v3809 = vrsqrt.pop %v3807
        %v3810 = vmul.f32 %v3794, %v3808
        %v3811 = vmul.f32 %v3795, %v3809
        %v3812 = vld [vmem:[%s5 + $0x13] ss:$0 sm:$0xff]
        %v3813 = vmul.f32 %v3810, %v3812
        %v3814 = vmul.f32 %v3811, %v3812
        %v3815 = vld [vmem:[%s5 + $0x14] ss:$0 sm:$0xff]
        %v3816 = vadd.f32 %v3813, %v3815
        %v3817 = vadd.f32 %v3814, %v3815
        %3818 = vst.msk [vmem:[%s284] sm:$0xff] %vm475, %v3816
        %3819 = vst.msk [vmem:[%s284 + $0x8] sm:$0xff] %vm475, %v3817
        %s3820 = sand.u32 %s186, 1
        %s3821 = scalar_lea.sflag [#allocation3], %s3820
        %s3822 = sand.u32 %s186, 1
        %s3823 = smul.addr %s3822, 16
        %s3824 = scalar_lea.vmem [#allocation2], %s3823
        // Predicated region
        $region49: #{vit_forward.1} parent=47 // pred_check
          %p3825 = pneg %p196
        $region50: #{vit_forward.1} parent=47 // pred_check_branch
          %3827 = sbr.rel (%p3825) target = $region52
        $region51: #{vit_forward.1} parent=47 // pred_region
          %s3829 = ssub.s32 256, 256
          %3830 = vsyncadd %s3821, %s3829
          %s3831 = smul.addr %s21, 2
          %s3832 = smul.addr %s3831, 128
          %s3833 = scalar_lea.hbm %s7, %s3832
          %s3834 = sshll.u32 %s3824, 4
          %s3835 = int_to_ptr.vmem [resolvable:$true] %s3834
          %3840 = dma.vmem_to_hbm [thread:$0]  %s3835, 256, %s3833, %s3821, 128, 128, 8
        $region52: #{vit_forward.1} parent=47 // pred_fallthru
          _
      $region48: #{vit_forward.1} parent=5 // pred_fallthru
        _
      %p3841 = scmp.le.s32.totalorder 2, %s16
      // Predicated region
      $region53: #{vit_forward.1} parent=5 // pred_check
        %p3842 = pneg %p3841
      $region54: #{vit_forward.1} parent=5 // pred_check_branch
        %3844 = sbr.rel (%p3842) target = $region56
      $region55: #{vit_forward.1} parent=5 // pred_region
        %s3845 = ssub.s32 %s16, 2
        // Predicated region
        $region57: #{vit_forward.1} parent=55 // pred_check
          %p3846 = pneg %p202
        $region58: #{vit_forward.1} parent=55 // pred_check_branch
          %3848 = sbr.rel (%p3846) target = $region60
        $region59: #{vit_forward.1} parent=55 // pred_region
          %s3849 = sand.u32 %s187, 1
          %s3850 = scalar_lea.sflag [#allocation3], %s3849
          %s3851 = sand.u32 %s187, 1
          %s3852 = smul.addr %s3851, 16
          %s3853 = scalar_lea.vmem [#allocation2], %s3852
          %3854 = dma.done %s3850, 256
        $region60: #{vit_forward.1} parent=55 // pred_fallthru
          _
      $region56: #{vit_forward.1} parent=5 // pred_fallthru
        _
    $region6: #{vit_forward.1} parent=1 // loop_footer
      %s20 = sadd.s32 1, %s16
    $region7: #{vit_forward.1} parent=1 // loop_footer_branch
      %15 = sbr.rel target = $region3
    $region8: #{vit_forward.1} parent=1 // loop_exit
      _
    %3855 = vsyncpa [#allocation3], 1
    %s3856 = scalar_lea.sflag [#allocation3], 1
    %3857 = vsyncpa %s3856, 1

</llo_original>
